<compile_context>
chip_gen: v7x
topology: tpu7x:2x2x1
jax: 0.10.0
libtpu: 0.0.40
codegen_flags: <defaults>
</compile_context>

<pallas_src>
import functools
import math

import jax
import jax.numpy as jnp
from jax.experimental import pallas as pl
from jax.experimental.pallas import tpu as pltpu


def _round_up(x, m):
    return ((x + m - 1) // m) * m


# ----------------------------------------------------------------------------
# Kernel: fused 3-layer MLP (matmul + bias + relu, three times).
# One grid step processes a (TM, d_in) slab of rows, internally split into
# `nc` row chunks of `chunk` rows; the three weight matrices / biases are
# whole-array resident blocks (constant index_map).
# ----------------------------------------------------------------------------
def _fc_mlp_kernel(x_ref, w1_ref, b1_ref, w2_ref, b2_ref, w3_ref, b3_ref,
                   o_ref, *, nc, chunk):
    # Hoist resident operands out of the chunk loop.
    w1 = w1_ref[...]
    w2 = w2_ref[...]
    w3 = w3_ref[...]
    b1 = b1_ref[...]
    b2 = b2_ref[...]
    b3 = b3_ref[...]

    # Static unrolled loop over row chunks: the bias/ReLU/cast epilogue of
    # chunk c can overlap the MXU work of chunk c+1.
    for c in range(nc):
        rows = pl.ds(c * chunk, chunk)
        x = x_ref[rows, :]                                         # bf16
        h = jnp.dot(x, w1, preferred_element_type=jnp.float32) + b1
        h = jnp.maximum(h, 0.0).astype(jnp.bfloat16)
        h = jnp.dot(h, w2, preferred_element_type=jnp.float32) + b2
        h = jnp.maximum(h, 0.0).astype(jnp.bfloat16)
        h = jnp.dot(h, w3, preferred_element_type=jnp.float32) + b3
        o_ref[rows, :] = jnp.maximum(h, 0.0).astype(o_ref.dtype)


def _pick_tile(batch, tm_max):
    """Pick (tm, nc): row-tile size and in-kernel chunk count.

    Invariants: tm <= batch (no block dim exceeds the array), tm % 16 == 0
    for batch > 16 (bf16 sublane packing), and for batch > 16 the grid has
    >= 2 steps so v7x's two TensorCores both get work.
    """
    if batch <= 16:
        return batch, 1                     # single exact block
    if batch <= 64:
        return 16, 1                        # >= 2 small tiles
    tm = min(tm_max, _round_up((batch + 1) // 2, 16))
    for m in (512, 256, 128):               # snap large tiles to MXU-friendly sizes
        if tm >= m:
            tm = (tm // m) * m
            break
    if tm >= 512:
        nc = 4
    elif tm >= 128:
        nc = 2
    else:
        nc = 1
    return tm, nc


def observe_embedding_fc_forward(x, params, *, tm_max=512, out_dtype=jnp.float32):
    """x: any shape with leading batch dims; flattened to (-1, input_dim).

    tm_max: 512 keeps headroom under v7x's 64 MiB VMEM; 1024 is fine on
    v5e/v6e (128 MiB) for multi-thousand-row batches.
    """
    w1, b1, w2, b2, w3, b3 = params
    d_in = w1.shape[0]
    d_out = w3.shape[1]

    # Stream activations in bf16 (halves x-tile DMA bytes; MXU-native operand).
    x2d = x.reshape(-1, d_in)
    if x2d.dtype != jnp.bfloat16:
        x2d = x2d.astype(jnp.bfloat16)
    batch = x2d.shape[0]

    w1 = w1.astype(jnp.bfloat16)
    w2 = w2.astype(jnp.bfloat16)
    w3 = w3.astype(jnp.bfloat16)
    b1 = b1.astype(jnp.float32).reshape(1, d_in)
    b2 = b2.astype(jnp.float32).reshape(1, d_out)
    b3 = b3.astype(jnp.float32).reshape(1, d_out)

    tm, nc = _pick_tile(batch, tm_max)
    chunk = tm // nc
    grid = (pl.cdiv(batch, tm),)            # partial trailing block masked by Pallas

    # VMEM budget (bytes). Default BlockSpec pipelining double-buffers every
    # operand, including the constant-index weights, so count them twice.
    bpe_out = jnp.dtype(out_dtype).itemsize
    weight_bytes = 2 * (d_in * d_in + d_in * d_out + d_out * d_out)      # bf16
    bias_bytes = 4 * (d_in + 2 * d_out)
    resident = 2 * (weight_bytes + bias_bytes)
    tile_io = 2 * (2 * tm * d_in + bpe_out * tm * d_out)                 # x/out dbl-buf
    interm = (4 + 2) * chunk * (d_in + 2 * d_out)                        # f32 + bf16 temps
    vmem_need = resident + tile_io + interm
    vmem_limit = int(min(max(vmem_need + vmem_need // 2, 32 << 20), 64 << 20))

    flops = 2 * batch * (d_in * d_in + d_in * d_out + d_out * d_out)
    bytes_accessed = (2 * batch * d_in + weight_bytes + bias_bytes
                      + bpe_out * batch * d_out)

    x_spec = pl.BlockSpec((tm, d_in), lambda i: (i, 0))
    out_spec = pl.BlockSpec((tm, d_out), lambda i: (i, 0))
    # Resident (non-streaming) operands: constant index_map.
    w1_spec = pl.BlockSpec((d_in, d_in), lambda i: (0, 0))
    b1_spec = pl.BlockSpec((1, d_in), lambda i: (0, 0))
    w2_spec = pl.BlockSpec((d_in, d_out), lambda i: (0, 0))
    b2_spec = pl.BlockSpec((1, d_out), lambda i: (0, 0))
    w3_spec = pl.BlockSpec((d_out, d_out), lambda i: (0, 0))
    b3_spec = pl.BlockSpec((1, d_out), lambda i: (0, 0))

    kernel = functools.partial(_fc_mlp_kernel, nc=nc, chunk=chunk)

    return pl.pallas_call(
        kernel,
        out_shape=jax.ShapeDtypeStruct((batch, d_out), out_dtype),
        grid_spec=pltpu.PrefetchScalarGridSpec(
            num_scalar_prefetch=0,
            grid=grid,
            in_specs=[x_spec, w1_spec, b1_spec, w2_spec, b2_spec, w3_spec, b3_spec],
            out_specs=out_spec,
        ),
        compiler_params=pltpu.CompilerParams(
            dimension_semantics=("parallel",),
            vmem_limit_bytes=vmem_limit,
        ),
        cost_estimate=pl.CostEstimate(
            flops=flops, bytes_accessed=bytes_accessed, transcendentals=0),
    )(x2d, w1, b1, w2, b2, w3, b3)


# ----------------------------------------------------------------------------
# Deterministic parameter init, mirroring the PyTorch module's __init__:
#   - weights: xavier_uniform with gain = calculate_gain('relu') = sqrt(2)
#   - biases : nn.Linear default, uniform(-1/sqrt(fan_in), 1/sqrt(fan_in))
# Weights are stored transposed (in_dim, out_dim) and cast to bf16 for the
# MXU; biases stay f32.
# ----------------------------------------------------------------------------
def _xavier_uniform_t(key, fan_in, fan_out, gain):
    bound = gain * math.sqrt(6.0 / (fan_in + fan_out))
    # PyTorch weight is (out, in); sample and return its transpose (in, out).
    w = jax.random.uniform(key, (fan_out, fan_in), jnp.float32, -bound, bound)
    return w.T.astype(jnp.bfloat16)


def _linear_bias(key, fan_in, fan_out):
    bound = 1.0 / math.sqrt(fan_in)
    return jax.random.uniform(key, (1, fan_out), jnp.float32, -bound, bound)


def init_observe_embedding_fc(key, input_dim, output_dim):
    gain = math.sqrt(2.0)  # nn.init.calculate_gain('relu')
    k = jax.random.split(key, 6)
    w1 = _xavier_uniform_t(k[0], input_dim, input_dim, gain)
    b1 = _linear_bias(k[1], input_dim, input_dim)
    w2 = _xavier_uniform_t(k[2], input_dim, output_dim, gain)
    b2 = _linear_bias(k[3], input_dim, output_dim)
    w3 = _xavier_uniform_t(k[4], output_dim, output_dim, gain)
    b3 = _linear_bias(k[5], output_dim, output_dim)
    return (w1, b1, w2, b2, w3, b3)


if __name__ == "__main__":
    key = jax.random.PRNGKey(0)
    kx, kp, kx2 = jax.random.split(key, 3)

    # Example observation: NCHW [2, 4, 16, 16] -> input_dim = 4*16*16 = 1024
    B, C, H, W = 2, 4, 16, 16
    input_dim = C * H * W
    output_dim = 128

    x = jax.random.normal(kx, (B, C, H, W), jnp.float32)
    params = init_observe_embedding_fc(kp, input_dim, output_dim)

    # Reference: same math in plain JAX with the same bf16-operand / f32-acc
    # mixed precision the kernel uses.
    def ref_forward(xs):
        w1, b1, w2, b2, w3, b3 = params
        h = xs.reshape(-1, input_dim).astype(jnp.bfloat16)
        h = jnp.maximum(jnp.dot(h, w1, preferred_element_type=jnp.float32) + b1, 0.0)
        h = jnp.maximum(jnp.dot(h.astype(jnp.bfloat16), w2,
                                preferred_element_type=jnp.float32) + b2, 0.0)
        h = jnp.maximum(jnp.dot(h.astype(jnp.bfloat16), w3,
                                preferred_element_type=jnp.float32) + b3, 0.0)
        return h

    # Small batch: single exact block.
    out = jax.block_until_ready(observe_embedding_fc_forward(x, params))
    ref = ref_forward(x)
    assert out.shape == (B, output_dim)
    assert jnp.allclose(out, ref, atol=2e-2, rtol=2e-2)

    # Larger, non-tile-multiple batch: multi-step grid, in-kernel chunking,
    # and a partial trailing block (no wrapper-side padding).
    x_big = jax.random.normal(kx2, (600, input_dim), jnp.float32)
    out_big = jax.block_until_ready(observe_embedding_fc_forward(x_big, params))
    ref_big = ref_forward(x_big)
    assert out_big.shape == (600, output_dim)
    assert jnp.allclose(out_big, ref_big, atol=2e-2, rtol=2e-2)

    print("KERNEL_OK")
</pallas_src>

<mosaic_0001>
module attributes {stable_mosaic.version = 11 : i64} {
  func.func @_fc_mlp_kernel(%arg0: i32, %arg1: memref<2x1024xbf16, #tpu.memory_space<vmem>>, %arg2: memref<1024x1024xbf16, #tpu.memory_space<vmem>>, %arg3: memref<1x1024xf32, #tpu.memory_space<vmem>>, %arg4: memref<1024x128xbf16, #tpu.memory_space<vmem>>, %arg5: memref<1x128xf32, #tpu.memory_space<vmem>>, %arg6: memref<128x128xbf16, #tpu.memory_space<vmem>>, %arg7: memref<1x128xf32, #tpu.memory_space<vmem>>, %arg8: memref<2x128xf32, #tpu.memory_space<vmem>>) attributes {dimension_semantics = [#tpu.dimension_semantics<parallel>], iteration_bounds = array<i64: 1>, scalar_prefetch = 0 : i64, scratch_operands = 0 : i64, tpu.core_type = #tpu.core_type<tc>, window_params = [{transform_indices = @transform_0, window_bounds = array<i64: 2, 1024>}, {pipeline_mode = #tpu.pipeline_mode<synchronous>, transform_indices = @transform_1, window_bounds = array<i64: 1024, 1024>}, {pipeline_mode = #tpu.pipeline_mode<synchronous>, transform_indices = @transform_2, window_bounds = array<i64: 1, 1024>}, {pipeline_mode = #tpu.pipeline_mode<synchronous>, transform_indices = @transform_3, window_bounds = array<i64: 1024, 128>}, {pipeline_mode = #tpu.pipeline_mode<synchronous>, transform_indices = @transform_4, window_bounds = array<i64: 1, 128>}, {pipeline_mode = #tpu.pipeline_mode<synchronous>, transform_indices = @transform_5, window_bounds = array<i64: 128, 128>}, {pipeline_mode = #tpu.pipeline_mode<synchronous>, transform_indices = @transform_6, window_bounds = array<i64: 1, 128>}, {transform_indices = @transform_7, window_bounds = array<i64: 2, 128>}]} {
    %c0 = arith.constant 0 : index
    %c0_0 = arith.constant 0 : index
    %0 = vector.load %arg2[%c0, %c0_0] : memref<1024x1024xbf16, #tpu.memory_space<vmem>>, vector<1024x1024xbf16>
    %c0_1 = arith.constant 0 : index
    %c0_2 = arith.constant 0 : index
    %1 = vector.load %arg4[%c0_1, %c0_2] : memref<1024x128xbf16, #tpu.memory_space<vmem>>, vector<1024x128xbf16>
    %c0_3 = arith.constant 0 : index
    %c0_4 = arith.constant 0 : index
    %2 = vector.load %arg6[%c0_3, %c0_4] : memref<128x128xbf16, #tpu.memory_space<vmem>>, vector<128x128xbf16>
    %c0_5 = arith.constant 0 : index
    %c0_6 = arith.constant 0 : index
    %3 = vector.load %arg3[%c0_5, %c0_6] : memref<1x1024xf32, #tpu.memory_space<vmem>>, vector<1x1024xf32>
    %c0_7 = arith.constant 0 : index
    %c0_8 = arith.constant 0 : index
    %4 = vector.load %arg5[%c0_7, %c0_8] : memref<1x128xf32, #tpu.memory_space<vmem>>, vector<1x128xf32>
    %c0_9 = arith.constant 0 : index
    %c0_10 = arith.constant 0 : index
    %5 = vector.load %arg7[%c0_9, %c0_10] : memref<1x128xf32, #tpu.memory_space<vmem>>, vector<1x128xf32>
    %c0_11 = arith.constant 0 : index
    %c0_12 = arith.constant 0 : index
    %6 = vector.load %arg1[%c0_11, %c0_12] : memref<2x1024xbf16, #tpu.memory_space<vmem>>, vector<2x1024xbf16>
    %cst = arith.constant dense<0.000000e+00> : vector<2x1024xf32>
    %7 = tpu.matmul %6, %0, %cst {dimension_numbers = #tpu.dot_dimension_numbers<[1], [0], [0], [1], [0, 0, 1, 1], [], []>} : vector<2x1024xbf16>, vector<1024x1024xbf16>, vector<2x1024xf32> -> vector<2x1024xf32>
    %8 = vector.broadcast %3 : vector<1x1024xf32> to vector<2x1024xf32>
    %9 = arith.addf %7, %8 : vector<2x1024xf32>
    %cst_13 = arith.constant 0.000000e+00 : f32
    %10 = vector.broadcast %cst_13 : f32 to vector<2x1024xf32>
    %11 = arith.maximumf %9, %10 : vector<2x1024xf32>
    %12 = arith.truncf %11 : vector<2x1024xf32> to vector<2x1024xbf16>
    %cst_14 = arith.constant dense<0.000000e+00> : vector<2x128xf32>
    %13 = tpu.matmul %12, %1, %cst_14 {dimension_numbers = #tpu.dot_dimension_numbers<[1], [0], [0], [1], [0, 0, 1, 1], [], []>} : vector<2x1024xbf16>, vector<1024x128xbf16>, vector<2x128xf32> -> vector<2x128xf32>
    %14 = vector.broadcast %4 : vector<1x128xf32> to vector<2x128xf32>
    %15 = arith.addf %13, %14 : vector<2x128xf32>
    %cst_15 = arith.constant 0.000000e+00 : f32
    %16 = vector.broadcast %cst_15 : f32 to vector<2x128xf32>
    %17 = arith.maximumf %15, %16 : vector<2x128xf32>
    %18 = arith.truncf %17 : vector<2x128xf32> to vector<2x128xbf16>
    %cst_16 = arith.constant dense<0.000000e+00> : vector<2x128xf32>
    %19 = tpu.matmul %18, %2, %cst_16 {dimension_numbers = #tpu.dot_dimension_numbers<[1], [0], [0], [1], [0, 0, 1, 1], [], []>} : vector<2x128xbf16>, vector<128x128xbf16>, vector<2x128xf32> -> vector<2x128xf32>
    %20 = vector.broadcast %5 : vector<1x128xf32> to vector<2x128xf32>
    %21 = arith.addf %19, %20 : vector<2x128xf32>
    %cst_17 = arith.constant 0.000000e+00 : f32
    %22 = vector.broadcast %cst_17 : f32 to vector<2x128xf32>
    %23 = arith.maximumf %21, %22 : vector<2x128xf32>
    %c0_18 = arith.constant 0 : index
    %c0_19 = arith.constant 0 : index
    %24 = vector.load %arg8[%c0_18, %c0_19] : memref<2x128xf32, #tpu.memory_space<vmem>>, vector<2x128xf32>
    tpu.vector_store %arg8[%c0_18, %c0_19], %23 {strides = array<i32>} : memref<2x128xf32, #tpu.memory_space<vmem>>, vector<2x128xf32>,
    return
  }
  func.func @transform_0(%arg0: i32) -> (i32, i32) {
    %c0_i32 = arith.constant 0 : i32
    %c0_i32_0 = arith.constant 0 : i32
    return %arg0, %c0_i32 : i32, i32
  }
  func.func @transform_1(%arg0: i32) -> (i32, i32) {
    %c0_i32 = arith.constant 0 : i32
    %c0_i32_0 = arith.constant 0 : i32
    %c0_i32_1 = arith.constant 0 : i32
    return %c0_i32, %c0_i32_0 : i32, i32
  }
  func.func @transform_2(%arg0: i32) -> (i32, i32) {
    %c0_i32 = arith.constant 0 : i32
    %c0_i32_0 = arith.constant 0 : i32
    %c0_i32_1 = arith.constant 0 : i32
    return %c0_i32, %c0_i32_0 : i32, i32
  }
  func.func @transform_3(%arg0: i32) -> (i32, i32) {
    %c0_i32 = arith.constant 0 : i32
    %c0_i32_0 = arith.constant 0 : i32
    %c0_i32_1 = arith.constant 0 : i32
    return %c0_i32, %c0_i32_0 : i32, i32
  }
  func.func @transform_4(%arg0: i32) -> (i32, i32) {
    %c0_i32 = arith.constant 0 : i32
    %c0_i32_0 = arith.constant 0 : i32
    %c0_i32_1 = arith.constant 0 : i32
    return %c0_i32, %c0_i32_0 : i32, i32
  }
  func.func @transform_5(%arg0: i32) -> (i32, i32) {
    %c0_i32 = arith.constant 0 : i32
    %c0_i32_0 = arith.constant 0 : i32
    %c0_i32_1 = arith.constant 0 : i32
    return %c0_i32, %c0_i32_0 : i32, i32
  }
  func.func @transform_6(%arg0: i32) -> (i32, i32) {
    %c0_i32 = arith.constant 0 : i32
    %c0_i32_0 = arith.constant 0 : i32
    %c0_i32_1 = arith.constant 0 : i32
    return %c0_i32, %c0_i32_0 : i32, i32
  }
  func.func @transform_7(%arg0: i32) -> (i32, i32) {
    %c0_i32 = arith.constant 0 : i32
    %c0_i32_0 = arith.constant 0 : i32
    return %arg0, %c0_i32 : i32, i32
  }
}

</mosaic_0001>

<llo_original>
// kernel: tpu_custom_call.1
$region0: #{tpu_custom_call.1}
  #allocation0 [shape = 'u32[]', space=smem, size = 0x4, offset = 0x4, fixed_abs, tag = 'smem constant byte address 0x4 - core index']
  #allocation1 [shape = 'u32[144,128]{1,0:T(1,128)}', space=vmem, size = 0x12000, scoped, tag = 'internal scratch']
  %s0 = inlined_call_operand.hbm [shape: bf16[2,1024], index: 0, kind: input, shape index: {}]
  %s1 = inlined_call_operand.hbm [shape: bf16[1024,1024], index: 1, kind: input, shape index: {}]
  %s2 = inlined_call_operand.hbm [shape: f32[1,1024], index: 2, kind: input, shape index: {}]
  %s3 = inlined_call_operand.hbm [shape: bf16[1024,128], index: 3, kind: input, shape index: {}]
  %s4 = inlined_call_operand.hbm [shape: f32[1,128], index: 4, kind: input, shape index: {}]
  %s5 = inlined_call_operand.hbm [shape: bf16[128,128], index: 5, kind: input, shape index: {}]
  %s6 = inlined_call_operand.hbm [shape: f32[1,128], index: 6, kind: input, shape index: {}]
  %s7 = inlined_call_operand.hbm [shape: f32[2,128], index: 7, kind: output, shape index: {}]
  %s8 = sld [smem:[#allocation0]]
  $region66: #{tpu_custom_call.1} parent=0
    _
  %s10 = ssub.s32 1, %s8
  %s11 = scalar_select 0, %s10, %s8
  $region1: #{tpu_custom_call.1} parent=0
    #allocation2 [shape = 'u8[4096]{0}', space=vmem, size = 0x1000, scoped, tag = 'input window, operand 0, single buffered']
    #allocation3 [shape = 's32[1]{0}', space=sflag, size = 0x4, scoped, tag = 'scoped memory for tpu_custom_call.1']
    #allocation4 [shape = 's32[1]{0}', space=sflag, size = 0x4, scoped, tag = 'scoped memory for tpu_custom_call.1']
    #allocation5 [shape = 'u8[2097152]{0}', space=vmem, size = 0x200000, scoped, tag = 'input window, operand 1, single buffered']
    #allocation6 [shape = 's32[1]{0}', space=sflag, size = 0x4, scoped, tag = 'scoped memory for tpu_custom_call.1']
    #allocation7 [shape = 'u8[4096]{0}', space=vmem, size = 0x1000, scoped, tag = 'input window, operand 2, single buffered']
    #allocation8 [shape = 'u8[262144]{0}', space=vmem, size = 0x40000, scoped, tag = 'input window, operand 3, single buffered']
    #allocation9 [shape = 's32[1]{0}', space=sflag, size = 0x4, scoped, tag = 'scoped memory for tpu_custom_call.1']
    #allocation10 [shape = 'u8[512]{0}', space=vmem, size = 0x400, scoped, tag = 'input window, operand 4, single buffered']
    #allocation11 [shape = 'u8[32768]{0}', space=vmem, size = 0x8000, scoped, tag = 'input window, operand 5, single buffered']
    #allocation12 [shape = 's32[1]{0}', space=sflag, size = 0x4, scoped, tag = 'scoped memory for tpu_custom_call.1']
    #allocation13 [shape = 'u8[512]{0}', space=vmem, size = 0x400, scoped, tag = 'input window, operand 6, single buffered']
    #allocation14 [shape = 'u8[1024]{0}', space=vmem, size = 0x400, scoped, tag = 'output window, operand 0, single buffered']
    %12 = vsyncpa [#allocation3], 0
    %13 = vsyncpa [#allocation6], 0
    %14 = vsyncpa [#allocation9], 0
    %15 = vsyncpa [#allocation12], 0
    %16 = vsyncpa [#allocation4], 0
    // Predicated region
    $region2: #{tpu_custom_call.1} parent=1 // pred_check
      _
    $region3: #{tpu_custom_call.1} parent=1 // pred_check_branch
      %18 = sbr.rel (0) target = $region5
    $region4: #{tpu_custom_call.1} parent=1 // pred_region
      %s20 = ssub.s32 128, 128
      %21 = vsyncadd [#allocation3], %s20
      %s23 = sshll.u32 [#allocation2], 4
      %s24 = int_to_ptr.vmem [resolvable:$true] %s23
      %26 = dma.hbm_to_vmem [thread:$0]  %s0, 128, %s24, [#allocation3]
    $region5: #{tpu_custom_call.1} parent=1 // pred_fallthru
      _
    // Predicated region
    $region6: #{tpu_custom_call.1} parent=1 // pred_check
      _
    $region7: #{tpu_custom_call.1} parent=1 // pred_check_branch
      %28 = sbr.rel (0) target = $region9
    $region8: #{tpu_custom_call.1} parent=1 // pred_region
      %s30 = ssub.s32 65536, 65536
      %31 = vsyncadd [#allocation6], %s30
      %s32 = sshll.u32 [#allocation5], 4
      %s33 = int_to_ptr.vmem [resolvable:$true] %s32
      %38 = dma.hbm_to_vmem [thread:$0]  %s1, 65536, %s33, [#allocation6], 512, 512, 32
    $region9: #{tpu_custom_call.1} parent=1 // pred_fallthru
      _
    // Predicated region
    $region10: #{tpu_custom_call.1} parent=1 // pred_check
      _
    $region11: #{tpu_custom_call.1} parent=1 // pred_check_branch
      %40 = sbr.rel (0) target = $region13
    $region12: #{tpu_custom_call.1} parent=1 // pred_region
      %s42 = ssub.s32 128, 128
      %43 = vsyncadd [#allocation6], %s42
      %s45 = sshll.u32 [#allocation7], 4
      %s46 = int_to_ptr.vmem [resolvable:$true] %s45
      %48 = dma.hbm_to_vmem [thread:$0]  %s2, 128, %s46, [#allocation6]
    $region13: #{tpu_custom_call.1} parent=1 // pred_fallthru
      _
    // Predicated region
    $region14: #{tpu_custom_call.1} parent=1 // pred_check
      _
    $region15: #{tpu_custom_call.1} parent=1 // pred_check_branch
      %50 = sbr.rel (0) target = $region17
    $region16: #{tpu_custom_call.1} parent=1 // pred_region
      %s52 = ssub.s32 8192, 8192
      %53 = vsyncadd [#allocation9], %s52
      %s54 = sshll.u32 [#allocation8], 4
      %s55 = int_to_ptr.vmem [resolvable:$true] %s54
      %60 = dma.hbm_to_vmem [thread:$0]  %s3, 8192, %s55, [#allocation9], 64, 64, 4
    $region17: #{tpu_custom_call.1} parent=1 // pred_fallthru
      _
    // Predicated region
    $region18: #{tpu_custom_call.1} parent=1 // pred_check
      _
    $region19: #{tpu_custom_call.1} parent=1 // pred_check_branch
      %62 = sbr.rel (0) target = $region21
    $region20: #{tpu_custom_call.1} parent=1 // pred_region
      %s64 = ssub.s32 16, 16
      %65 = vsyncadd [#allocation9], %s64
      %s67 = sshll.u32 [#allocation10], 4
      %s68 = int_to_ptr.vmem [resolvable:$true] %s67
      %70 = dma.hbm_to_vmem [thread:$0]  %s4, 16, %s68, [#allocation9]
    $region21: #{tpu_custom_call.1} parent=1 // pred_fallthru
      _
    // Predicated region
    $region22: #{tpu_custom_call.1} parent=1 // pred_check
      _
    $region23: #{tpu_custom_call.1} parent=1 // pred_check_branch
      %72 = sbr.rel (0) target = $region25
    $region24: #{tpu_custom_call.1} parent=1 // pred_region
      %s74 = ssub.s32 1024, 1024
      %75 = vsyncadd [#allocation12], %s74
      %s76 = sshll.u32 [#allocation11], 4
      %s77 = int_to_ptr.vmem [resolvable:$true] %s76
      %82 = dma.hbm_to_vmem [thread:$0]  %s5, 1024, %s77, [#allocation12], 64, 64, 4
    $region25: #{tpu_custom_call.1} parent=1 // pred_fallthru
      _
    // Predicated region
    $region26: #{tpu_custom_call.1} parent=1 // pred_check
      _
    $region27: #{tpu_custom_call.1} parent=1 // pred_check_branch
      %84 = sbr.rel (0) target = $region29
    $region28: #{tpu_custom_call.1} parent=1 // pred_region
      %s86 = ssub.s32 16, 16
      %87 = vsyncadd [#allocation12], %s86
      %s89 = sshll.u32 [#allocation13], 4
      %s90 = int_to_ptr.vmem [resolvable:$true] %s89
      %92 = dma.hbm_to_vmem [thread:$0]  %s6, 16, %s90, [#allocation12]
    $region29: #{tpu_custom_call.1} parent=1 // pred_fallthru
      _
    // Predicated region
    $region30: #{tpu_custom_call.1} parent=1 // pred_check
      _
    $region31: #{tpu_custom_call.1} parent=1 // pred_check_branch
      %94 = sbr.rel (0) target = $region33
    $region32: #{tpu_custom_call.1} parent=1 // pred_region
      %95 = dma.done [#allocation3], 128
    $region33: #{tpu_custom_call.1} parent=1 // pred_fallthru
      _
    // Predicated region
    $region34: #{tpu_custom_call.1} parent=1 // pred_check
      _
    $region35: #{tpu_custom_call.1} parent=1 // pred_check_branch
      %97 = sbr.rel (0) target = $region37
    $region36: #{tpu_custom_call.1} parent=1 // pred_region
      %98 = dma.done [#allocation6], 65536
    $region37: #{tpu_custom_call.1} parent=1 // pred_fallthru
      _
    // Predicated region
    $region38: #{tpu_custom_call.1} parent=1 // pred_check
      _
    $region39: #{tpu_custom_call.1} parent=1 // pred_check_branch
      %100 = sbr.rel (0) target = $region41
    $region40: #{tpu_custom_call.1} parent=1 // pred_region
      %101 = dma.done [#allocation6], 128
    $region41: #{tpu_custom_call.1} parent=1 // pred_fallthru
      _
    // Predicated region
    $region42: #{tpu_custom_call.1} parent=1 // pred_check
      _
    $region43: #{tpu_custom_call.1} parent=1 // pred_check_branch
      %103 = sbr.rel (0) target = $region45
    $region44: #{tpu_custom_call.1} parent=1 // pred_region
      %104 = dma.done [#allocation9], 8192
    $region45: #{tpu_custom_call.1} parent=1 // pred_fallthru
      _
    // Predicated region
    $region46: #{tpu_custom_call.1} parent=1 // pred_check
      _
    $region47: #{tpu_custom_call.1} parent=1 // pred_check_branch
      %106 = sbr.rel (0) target = $region49
    $region48: #{tpu_custom_call.1} parent=1 // pred_region
      %107 = dma.done [#allocation9], 16
    $region49: #{tpu_custom_call.1} parent=1 // pred_fallthru
      _
    // Predicated region
    $region50: #{tpu_custom_call.1} parent=1 // pred_check
      _
    $region51: #{tpu_custom_call.1} parent=1 // pred_check_branch
      %109 = sbr.rel (0) target = $region53
    $region52: #{tpu_custom_call.1} parent=1 // pred_region
      %110 = dma.done [#allocation12], 1024
    $region53: #{tpu_custom_call.1} parent=1 // pred_fallthru
      _
    // Predicated region
    $region54: #{tpu_custom_call.1} parent=1 // pred_check
      _
    $region55: #{tpu_custom_call.1} parent=1 // pred_check_branch
      %112 = sbr.rel (0) target = $region57
    $region56: #{tpu_custom_call.1} parent=1 // pred_region
      %113 = dma.done [#allocation12], 16
    $region57: #{tpu_custom_call.1} parent=1 // pred_fallthru
      _
    %v115 = vld [vmem:[#allocation5] sm:$0xff]
    %v116 = vld [vmem:[#allocation5 + $0x8] sm:$0xff]
    %v117 = vld [vmem:[#allocation5 + $0x10] sm:$0xff]
    %v118 = vld [vmem:[#allocation5 + $0x18] sm:$0xff]
    %v119 = vld [vmem:[#allocation5 + $0x20] sm:$0xff]
    %v120 = vld [vmem:[#allocation5 + $0x28] sm:$0xff]
    %v121 = vld [vmem:[#allocation5 + $0x30] sm:$0xff]
    %v122 = vld [vmem:[#allocation5 + $0x38] sm:$0xff]
    %v123 = vld [vmem:[#allocation5 + $0x40] sm:$0xff]
    %v124 = vld [vmem:[#allocation5 + $0x48] sm:$0xff]
    %v125 = vld [vmem:[#allocation5 + $0x50] sm:$0xff]
    %v126 = vld [vmem:[#allocation5 + $0x58] sm:$0xff]
    %v127 = vld [vmem:[#allocation5 + $0x60] sm:$0xff]
    %v128 = vld [vmem:[#allocation5 + $0x68] sm:$0xff]
    %v129 = vld [vmem:[#allocation5 + $0x70] sm:$0xff]
    %v130 = vld [vmem:[#allocation5 + $0x78] sm:$0xff]
    %v131 = vld [vmem:[#allocation5 + $0x80] sm:$0xff]
    %v132 = vld [vmem:[#allocation5 + $0x88] sm:$0xff]
    %v133 = vld [vmem:[#allocation5 + $0x90] sm:$0xff]
    %v134 = vld [vmem:[#allocation5 + $0x98] sm:$0xff]
    %v135 = vld [vmem:[#allocation5 + $0xa0] sm:$0xff]
    %v136 = vld [vmem:[#allocation5 + $0xa8] sm:$0xff]
    %v137 = vld [vmem:[#allocation5 + $0xb0] sm:$0xff]
    %v138 = vld [vmem:[#allocation5 + $0xb8] sm:$0xff]
    %v139 = vld [vmem:[#allocation5 + $0xc0] sm:$0xff]
    %v140 = vld [vmem:[#allocation5 + $0xc8] sm:$0xff]
    %v141 = vld [vmem:[#allocation5 + $0xd0] sm:$0xff]
    %v142 = vld [vmem:[#allocation5 + $0xd8] sm:$0xff]
    %v143 = vld [vmem:[#allocation5 + $0xe0] sm:$0xff]
    %v144 = vld [vmem:[#allocation5 + $0xe8] sm:$0xff]
    %v145 = vld [vmem:[#allocation5 + $0xf0] sm:$0xff]
    %v146 = vld [vmem:[#allocation5 + $0xf8] sm:$0xff]
    %v147 = vld [vmem:[#allocation5 + $0x100] sm:$0xff]
    %v148 = vld [vmem:[#allocation5 + $0x108] sm:$0xff]
    %v149 = vld [vmem:[#allocation5 + $0x110] sm:$0xff]
    %v150 = vld [vmem:[#allocation5 + $0x118] sm:$0xff]
    %v151 = vld [vmem:[#allocation5 + $0x120] sm:$0xff]
    %v152 = vld [vmem:[#allocation5 + $0x128] sm:$0xff]
    %v153 = vld [vmem:[#allocation5 + $0x130] sm:$0xff]
    %v154 = vld [vmem:[#allocation5 + $0x138] sm:$0xff]
    %v155 = vld [vmem:[#allocation5 + $0x140] sm:$0xff]
    %v156 = vld [vmem:[#allocation5 + $0x148] sm:$0xff]
    %v157 = vld [vmem:[#allocation5 + $0x150] sm:$0xff]
    %v158 = vld [vmem:[#allocation5 + $0x158] sm:$0xff]
    %v159 = vld [vmem:[#allocation5 + $0x160] sm:$0xff]
    %v160 = vld [vmem:[#allocation5 + $0x168] sm:$0xff]
    %v161 = vld [vmem:[#allocation5 + $0x170] sm:$0xff]
    %v162 = vld [vmem:[#allocation5 + $0x178] sm:$0xff]
    %v163 = vld [vmem:[#allocation5 + $0x180] sm:$0xff]
    %v164 = vld [vmem:[#allocation5 + $0x188] sm:$0xff]
    %v165 = vld [vmem:[#allocation5 + $0x190] sm:$0xff]
    %v166 = vld [vmem:[#allocation5 + $0x198] sm:$0xff]
    %v167 = vld [vmem:[#allocation5 + $0x1a0] sm:$0xff]
    %v168 = vld [vmem:[#allocation5 + $0x1a8] sm:$0xff]
    %v169 = vld [vmem:[#allocation5 + $0x1b0] sm:$0xff]
    %v170 = vld [vmem:[#allocation5 + $0x1b8] sm:$0xff]
    %v171 = vld [vmem:[#allocation5 + $0x1c0] sm:$0xff]
    %v172 = vld [vmem:[#allocation5 + $0x1c8] sm:$0xff]
    %v173 = vld [vmem:[#allocation5 + $0x1d0] sm:$0xff]
    %v174 = vld [vmem:[#allocation5 + $0x1d8] sm:$0xff]
    %v175 = vld [vmem:[#allocation5 + $0x1e0] sm:$0xff]
    %v176 = vld [vmem:[#allocation5 + $0x1e8] sm:$0xff]
    %v177 = vld [vmem:[#allocation5 + $0x1f0] sm:$0xff]
    %v178 = vld [vmem:[#allocation5 + $0x1f8] sm:$0xff]
    %v179 = vld [vmem:[#allocation5 + $0x200] sm:$0xff]
    %v180 = vld [vmem:[#allocation5 + $0x208] sm:$0xff]
    %v181 = vld [vmem:[#allocation5 + $0x210] sm:$0xff]
    %v182 = vld [vmem:[#allocation5 + $0x218] sm:$0xff]
    %v183 = vld [vmem:[#allocation5 + $0x220] sm:$0xff]
    %v184 = vld [vmem:[#allocation5 + $0x228] sm:$0xff]
    %v185 = vld [vmem:[#allocation5 + $0x230] sm:$0xff]
    %v186 = vld [vmem:[#allocation5 + $0x238] sm:$0xff]
    %v187 = vld [vmem:[#allocation5 + $0x240] sm:$0xff]
    %v188 = vld [vmem:[#allocation5 + $0x248] sm:$0xff]
    %v189 = vld [vmem:[#allocation5 + $0x250] sm:$0xff]
    %v190 = vld [vmem:[#allocation5 + $0x258] sm:$0xff]
    %v191 = vld [vmem:[#allocation5 + $0x260] sm:$0xff]
    %v192 = vld [vmem:[#allocation5 + $0x268] sm:$0xff]
    %v193 = vld [vmem:[#allocation5 + $0x270] sm:$0xff]
    %v194 = vld [vmem:[#allocation5 + $0x278] sm:$0xff]
    %v195 = vld [vmem:[#allocation5 + $0x280] sm:$0xff]
    %v196 = vld [vmem:[#allocation5 + $0x288] sm:$0xff]
    %v197 = vld [vmem:[#allocation5 + $0x290] sm:$0xff]
    %v198 = vld [vmem:[#allocation5 + $0x298] sm:$0xff]
    %v199 = vld [vmem:[#allocation5 + $0x2a0] sm:$0xff]
    %v200 = vld [vmem:[#allocation5 + $0x2a8] sm:$0xff]
    %v201 = vld [vmem:[#allocation5 + $0x2b0] sm:$0xff]
    %v202 = vld [vmem:[#allocation5 + $0x2b8] sm:$0xff]
    %v203 = vld [vmem:[#allocation5 + $0x2c0] sm:$0xff]
    %v204 = vld [vmem:[#allocation5 + $0x2c8] sm:$0xff]
    %v205 = vld [vmem:[#allocation5 + $0x2d0] sm:$0xff]
    %v206 = vld [vmem:[#allocation5 + $0x2d8] sm:$0xff]
    %v207 = vld [vmem:[#allocation5 + $0x2e0] sm:$0xff]
    %v208 = vld [vmem:[#allocation5 + $0x2e8] sm:$0xff]
    %v209 = vld [vmem:[#allocation5 + $0x2f0] sm:$0xff]
    %v210 = vld [vmem:[#allocation5 + $0x2f8] sm:$0xff]
    %v211 = vld [vmem:[#allocation5 + $0x300] sm:$0xff]
    %v212 = vld [vmem:[#allocation5 + $0x308] sm:$0xff]
    %v213 = vld [vmem:[#allocation5 + $0x310] sm:$0xff]
    %v214 = vld [vmem:[#allocation5 + $0x318] sm:$0xff]
    %v215 = vld [vmem:[#allocation5 + $0x320] sm:$0xff]
    %v216 = vld [vmem:[#allocation5 + $0x328] sm:$0xff]
    %v217 = vld [vmem:[#allocation5 + $0x330] sm:$0xff]
    %v218 = vld [vmem:[#allocation5 + $0x338] sm:$0xff]
    %v219 = vld [vmem:[#allocation5 + $0x340] sm:$0xff]
    %v220 = vld [vmem:[#allocation5 + $0x348] sm:$0xff]
    %v221 = vld [vmem:[#allocation5 + $0x350] sm:$0xff]
    %v222 = vld [vmem:[#allocation5 + $0x358] sm:$0xff]
    %v223 = vld [vmem:[#allocation5 + $0x360] sm:$0xff]
    %v224 = vld [vmem:[#allocation5 + $0x368] sm:$0xff]
    %v225 = vld [vmem:[#allocation5 + $0x370] sm:$0xff]
    %v226 = vld [vmem:[#allocation5 + $0x378] sm:$0xff]
    %v227 = vld [vmem:[#allocation5 + $0x380] sm:$0xff]
    %v228 = vld [vmem:[#allocation5 + $0x388] sm:$0xff]
    %v229 = vld [vmem:[#allocation5 + $0x390] sm:$0xff]
    %v230 = vld [vmem:[#allocation5 + $0x398] sm:$0xff]
    %v231 = vld [vmem:[#allocation5 + $0x3a0] sm:$0xff]
    %v232 = vld [vmem:[#allocation5 + $0x3a8] sm:$0xff]
    %v233 = vld [vmem:[#allocation5 + $0x3b0] sm:$0xff]
    %v234 = vld [vmem:[#allocation5 + $0x3b8] sm:$0xff]
    %v235 = vld [vmem:[#allocation5 + $0x3c0] sm:$0xff]
    %v236 = vld [vmem:[#allocation5 + $0x3c8] sm:$0xff]
    %v237 = vld [vmem:[#allocation5 + $0x3d0] sm:$0xff]
    %v238 = vld [vmem:[#allocation5 + $0x3d8] sm:$0xff]
    %v239 = vld [vmem:[#allocation5 + $0x3e0] sm:$0xff]
    %v240 = vld [vmem:[#allocation5 + $0x3e8] sm:$0xff]
    %v241 = vld [vmem:[#allocation5 + $0x3f0] sm:$0xff]
    %v242 = vld [vmem:[#allocation5 + $0x3f8] sm:$0xff]
    %v243 = vld [vmem:[#allocation5 + $0x400] sm:$0xff]
    %v244 = vld [vmem:[#allocation5 + $0x408] sm:$0xff]
    %v245 = vld [vmem:[#allocation5 + $0x410] sm:$0xff]
    %v246 = vld [vmem:[#allocation5 + $0x418] sm:$0xff]
    %v247 = vld [vmem:[#allocation5 + $0x420] sm:$0xff]
    %v248 = vld [vmem:[#allocation5 + $0x428] sm:$0xff]
    %v249 = vld [vmem:[#allocation5 + $0x430] sm:$0xff]
    %v250 = vld [vmem:[#allocation5 + $0x438] sm:$0xff]
    %v251 = vld [vmem:[#allocation5 + $0x440] sm:$0xff]
    %v252 = vld [vmem:[#allocation5 + $0x448] sm:$0xff]
    %v253 = vld [vmem:[#allocation5 + $0x450] sm:$0xff]
    %v254 = vld [vmem:[#allocation5 + $0x458] sm:$0xff]
    %v255 = vld [vmem:[#allocation5 + $0x460] sm:$0xff]
    %v256 = vld [vmem:[#allocation5 + $0x468] sm:$0xff]
    %v257 = vld [vmem:[#allocation5 + $0x470] sm:$0xff]
    %v258 = vld [vmem:[#allocation5 + $0x478] sm:$0xff]
    %v259 = vld [vmem:[#allocation5 + $0x480] sm:$0xff]
    %v260 = vld [vmem:[#allocation5 + $0x488] sm:$0xff]
    %v261 = vld [vmem:[#allocation5 + $0x490] sm:$0xff]
    %v262 = vld [vmem:[#allocation5 + $0x498] sm:$0xff]
    %v263 = vld [vmem:[#allocation5 + $0x4a0] sm:$0xff]
    %v264 = vld [vmem:[#allocation5 + $0x4a8] sm:$0xff]
    %v265 = vld [vmem:[#allocation5 + $0x4b0] sm:$0xff]
    %v266 = vld [vmem:[#allocation5 + $0x4b8] sm:$0xff]
    %v267 = vld [vmem:[#allocation5 + $0x4c0] sm:$0xff]
    %v268 = vld [vmem:[#allocation5 + $0x4c8] sm:$0xff]
    %v269 = vld [vmem:[#allocation5 + $0x4d0] sm:$0xff]
    %v270 = vld [vmem:[#allocation5 + $0x4d8] sm:$0xff]
    %v271 = vld [vmem:[#allocation5 + $0x4e0] sm:$0xff]
    %v272 = vld [vmem:[#allocation5 + $0x4e8] sm:$0xff]
    %v273 = vld [vmem:[#allocation5 + $0x4f0] sm:$0xff]
    %v274 = vld [vmem:[#allocation5 + $0x4f8] sm:$0xff]
    %v275 = vld [vmem:[#allocation5 + $0x500] sm:$0xff]
    %v276 = vld [vmem:[#allocation5 + $0x508] sm:$0xff]
    %v277 = vld [vmem:[#allocation5 + $0x510] sm:$0xff]
    %v278 = vld [vmem:[#allocation5 + $0x518] sm:$0xff]
    %v279 = vld [vmem:[#allocation5 + $0x520] sm:$0xff]
    %v280 = vld [vmem:[#allocation5 + $0x528] sm:$0xff]
    %v281 = vld [vmem:[#allocation5 + $0x530] sm:$0xff]
    %v282 = vld [vmem:[#allocation5 + $0x538] sm:$0xff]
    %v283 = vld [vmem:[#allocation5 + $0x540] sm:$0xff]
    %v284 = vld [vmem:[#allocation5 + $0x548] sm:$0xff]
    %v285 = vld [vmem:[#allocation5 + $0x550] sm:$0xff]
    %v286 = vld [vmem:[#allocation5 + $0x558] sm:$0xff]
    %v287 = vld [vmem:[#allocation5 + $0x560] sm:$0xff]
    %v288 = vld [vmem:[#allocation5 + $0x568] sm:$0xff]
    %v289 = vld [vmem:[#allocation5 + $0x570] sm:$0xff]
    %v290 = vld [vmem:[#allocation5 + $0x578] sm:$0xff]
    %v291 = vld [vmem:[#allocation5 + $0x580] sm:$0xff]
    %v292 = vld [vmem:[#allocation5 + $0x588] sm:$0xff]
    %v293 = vld [vmem:[#allocation5 + $0x590] sm:$0xff]
    %v294 = vld [vmem:[#allocation5 + $0x598] sm:$0xff]
    %v295 = vld [vmem:[#allocation5 + $0x5a0] sm:$0xff]
    %v296 = vld [vmem:[#allocation5 + $0x5a8] sm:$0xff]
    %v297 = vld [vmem:[#allocation5 + $0x5b0] sm:$0xff]
    %v298 = vld [vmem:[#allocation5 + $0x5b8] sm:$0xff]
    %v299 = vld [vmem:[#allocation5 + $0x5c0] sm:$0xff]
    %v300 = vld [vmem:[#allocation5 + $0x5c8] sm:$0xff]
    %v301 = vld [vmem:[#allocation5 + $0x5d0] sm:$0xff]
    %v302 = vld [vmem:[#allocation5 + $0x5d8] sm:$0xff]
    %v303 = vld [vmem:[#allocation5 + $0x5e0] sm:$0xff]
    %v304 = vld [vmem:[#allocation5 + $0x5e8] sm:$0xff]
    %v305 = vld [vmem:[#allocation5 + $0x5f0] sm:$0xff]
    %v306 = vld [vmem:[#allocation5 + $0x5f8] sm:$0xff]
    %v307 = vld [vmem:[#allocation5 + $0x600] sm:$0xff]
    %v308 = vld [vmem:[#allocation5 + $0x608] sm:$0xff]
    %v309 = vld [vmem:[#allocation5 + $0x610] sm:$0xff]
    %v310 = vld [vmem:[#allocation5 + $0x618] sm:$0xff]
    %v311 = vld [vmem:[#allocation5 + $0x620] sm:$0xff]
    %v312 = vld [vmem:[#allocation5 + $0x628] sm:$0xff]
    %v313 = vld [vmem:[#allocation5 + $0x630] sm:$0xff]
    %v314 = vld [vmem:[#allocation5 + $0x638] sm:$0xff]
    %v315 = vld [vmem:[#allocation5 + $0x640] sm:$0xff]
    %v316 = vld [vmem:[#allocation5 + $0x648] sm:$0xff]
    %v317 = vld [vmem:[#allocation5 + $0x650] sm:$0xff]
    %v318 = vld [vmem:[#allocation5 + $0x658] sm:$0xff]
    %v319 = vld [vmem:[#allocation5 + $0x660] sm:$0xff]
    %v320 = vld [vmem:[#allocation5 + $0x668] sm:$0xff]
    %v321 = vld [vmem:[#allocation5 + $0x670] sm:$0xff]
    %v322 = vld [vmem:[#allocation5 + $0x678] sm:$0xff]
    %v323 = vld [vmem:[#allocation5 + $0x680] sm:$0xff]
    %v324 = vld [vmem:[#allocation5 + $0x688] sm:$0xff]
    %v325 = vld [vmem:[#allocation5 + $0x690] sm:$0xff]
    %v326 = vld [vmem:[#allocation5 + $0x698] sm:$0xff]
    %v327 = vld [vmem:[#allocation5 + $0x6a0] sm:$0xff]
    %v328 = vld [vmem:[#allocation5 + $0x6a8] sm:$0xff]
    %v329 = vld [vmem:[#allocation5 + $0x6b0] sm:$0xff]
    %v330 = vld [vmem:[#allocation5 + $0x6b8] sm:$0xff]
    %v331 = vld [vmem:[#allocation5 + $0x6c0] sm:$0xff]
    %v332 = vld [vmem:[#allocation5 + $0x6c8] sm:$0xff]
    %v333 = vld [vmem:[#allocation5 + $0x6d0] sm:$0xff]
    %v334 = vld [vmem:[#allocation5 + $0x6d8] sm:$0xff]
    %v335 = vld [vmem:[#allocation5 + $0x6e0] sm:$0xff]
    %v336 = vld [vmem:[#allocation5 + $0x6e8] sm:$0xff]
    %v337 = vld [vmem:[#allocation5 + $0x6f0] sm:$0xff]
    %v338 = vld [vmem:[#allocation5 + $0x6f8] sm:$0xff]
    %v339 = vld [vmem:[#allocation5 + $0x700] sm:$0xff]
    %v340 = vld [vmem:[#allocation5 + $0x708] sm:$0xff]
    %v341 = vld [vmem:[#allocation5 + $0x710] sm:$0xff]
    %v342 = vld [vmem:[#allocation5 + $0x718] sm:$0xff]
    %v343 = vld [vmem:[#allocation5 + $0x720] sm:$0xff]
    %v344 = vld [vmem:[#allocation5 + $0x728] sm:$0xff]
    %v345 = vld [vmem:[#allocation5 + $0x730] sm:$0xff]
    %v346 = vld [vmem:[#allocation5 + $0x738] sm:$0xff]
    %v347 = vld [vmem:[#allocation5 + $0x740] sm:$0xff]
    %v348 = vld [vmem:[#allocation5 + $0x748] sm:$0xff]
    %v349 = vld [vmem:[#allocation5 + $0x750] sm:$0xff]
    %v350 = vld [vmem:[#allocation5 + $0x758] sm:$0xff]
    %v351 = vld [vmem:[#allocation5 + $0x760] sm:$0xff]
    %v352 = vld [vmem:[#allocation5 + $0x768] sm:$0xff]
    %v353 = vld [vmem:[#allocation5 + $0x770] sm:$0xff]
    %v354 = vld [vmem:[#allocation5 + $0x778] sm:$0xff]
    %v355 = vld [vmem:[#allocation5 + $0x780] sm:$0xff]
    %v356 = vld [vmem:[#allocation5 + $0x788] sm:$0xff]
    %v357 = vld [vmem:[#allocation5 + $0x790] sm:$0xff]
    %v358 = vld [vmem:[#allocation5 + $0x798] sm:$0xff]
    %v359 = vld [vmem:[#allocation5 + $0x7a0] sm:$0xff]
    %v360 = vld [vmem:[#allocation5 + $0x7a8] sm:$0xff]
    %v361 = vld [vmem:[#allocation5 + $0x7b0] sm:$0xff]
    %v362 = vld [vmem:[#allocation5 + $0x7b8] sm:$0xff]
    %v363 = vld [vmem:[#allocation5 + $0x7c0] sm:$0xff]
    %v364 = vld [vmem:[#allocation5 + $0x7c8] sm:$0xff]
    %v365 = vld [vmem:[#allocation5 + $0x7d0] sm:$0xff]
    %v366 = vld [vmem:[#allocation5 + $0x7d8] sm:$0xff]
    %v367 = vld [vmem:[#allocation5 + $0x7e0] sm:$0xff]
    %v368 = vld [vmem:[#allocation5 + $0x7e8] sm:$0xff]
    %v369 = vld [vmem:[#allocation5 + $0x7f0] sm:$0xff]
    %v370 = vld [vmem:[#allocation5 + $0x7f8] sm:$0xff]
    %v371 = vld [vmem:[#allocation5 + $0x800] sm:$0xff]
    %v372 = vld [vmem:[#allocation5 + $0x808] sm:$0xff]
    %v373 = vld [vmem:[#allocation5 + $0x810] sm:$0xff]
    %v374 = vld [vmem:[#allocation5 + $0x818] sm:$0xff]
    %v375 = vld [vmem:[#allocation5 + $0x820] sm:$0xff]
    %v376 = vld [vmem:[#allocation5 + $0x828] sm:$0xff]
    %v377 = vld [vmem:[#allocation5 + $0x830] sm:$0xff]
    %v378 = vld [vmem:[#allocation5 + $0x838] sm:$0xff]
    %v379 = vld [vmem:[#allocation5 + $0x840] sm:$0xff]
    %v380 = vld [vmem:[#allocation5 + $0x848] sm:$0xff]
    %v381 = vld [vmem:[#allocation5 + $0x850] sm:$0xff]
    %v382 = vld [vmem:[#allocation5 + $0x858] sm:$0xff]
    %v383 = vld [vmem:[#allocation5 + $0x860] sm:$0xff]
    %v384 = vld [vmem:[#allocation5 + $0x868] sm:$0xff]
    %v385 = vld [vmem:[#allocation5 + $0x870] sm:$0xff]
    %v386 = vld [vmem:[#allocation5 + $0x878] sm:$0xff]
    %v387 = vld [vmem:[#allocation5 + $0x880] sm:$0xff]
    %v388 = vld [vmem:[#allocation5 + $0x888] sm:$0xff]
    %v389 = vld [vmem:[#allocation5 + $0x890] sm:$0xff]
    %v390 = vld [vmem:[#allocation5 + $0x898] sm:$0xff]
    %v391 = vld [vmem:[#allocation5 + $0x8a0] sm:$0xff]
    %v392 = vld [vmem:[#allocation5 + $0x8a8] sm:$0xff]
    %v393 = vld [vmem:[#allocation5 + $0x8b0] sm:$0xff]
    %v394 = vld [vmem:[#allocation5 + $0x8b8] sm:$0xff]
    %v395 = vld [vmem:[#allocation5 + $0x8c0] sm:$0xff]
    %v396 = vld [vmem:[#allocation5 + $0x8c8] sm:$0xff]
    %v397 = vld [vmem:[#allocation5 + $0x8d0] sm:$0xff]
    %v398 = vld [vmem:[#allocation5 + $0x8d8] sm:$0xff]
    %v399 = vld [vmem:[#allocation5 + $0x8e0] sm:$0xff]
    %v400 = vld [vmem:[#allocation5 + $0x8e8] sm:$0xff]
    %v401 = vld [vmem:[#allocation5 + $0x8f0] sm:$0xff]
    %v402 = vld [vmem:[#allocation5 + $0x8f8] sm:$0xff]
    %v403 = vld [vmem:[#allocation5 + $0x900] sm:$0xff]
    %v404 = vld [vmem:[#allocation5 + $0x908] sm:$0xff]
    %v405 = vld [vmem:[#allocation5 + $0x910] sm:$0xff]
    %v406 = vld [vmem:[#allocation5 + $0x918] sm:$0xff]
    %v407 = vld [vmem:[#allocation5 + $0x920] sm:$0xff]
    %v408 = vld [vmem:[#allocation5 + $0x928] sm:$0xff]
    %v409 = vld [vmem:[#allocation5 + $0x930] sm:$0xff]
    %v410 = vld [vmem:[#allocation5 + $0x938] sm:$0xff]
    %v411 = vld [vmem:[#allocation5 + $0x940] sm:$0xff]
    %v412 = vld [vmem:[#allocation5 + $0x948] sm:$0xff]
    %v413 = vld [vmem:[#allocation5 + $0x950] sm:$0xff]
    %v414 = vld [vmem:[#allocation5 + $0x958] sm:$0xff]
    %v415 = vld [vmem:[#allocation5 + $0x960] sm:$0xff]
    %v416 = vld [vmem:[#allocation5 + $0x968] sm:$0xff]
    %v417 = vld [vmem:[#allocation5 + $0x970] sm:$0xff]
    %v418 = vld [vmem:[#allocation5 + $0x978] sm:$0xff]
    %v419 = vld [vmem:[#allocation5 + $0x980] sm:$0xff]
    %v420 = vld [vmem:[#allocation5 + $0x988] sm:$0xff]
    %v421 = vld [vmem:[#allocation5 + $0x990] sm:$0xff]
    %v422 = vld [vmem:[#allocation5 + $0x998] sm:$0xff]
    %v423 = vld [vmem:[#allocation5 + $0x9a0] sm:$0xff]
    %v424 = vld [vmem:[#allocation5 + $0x9a8] sm:$0xff]
    %v425 = vld [vmem:[#allocation5 + $0x9b0] sm:$0xff]
    %v426 = vld [vmem:[#allocation5 + $0x9b8] sm:$0xff]
    %v427 = vld [vmem:[#allocation5 + $0x9c0] sm:$0xff]
    %v428 = vld [vmem:[#allocation5 + $0x9c8] sm:$0xff]
    %v429 = vld [vmem:[#allocation5 + $0x9d0] sm:$0xff]
    %v430 = vld [vmem:[#allocation5 + $0x9d8] sm:$0xff]
    %v431 = vld [vmem:[#allocation5 + $0x9e0] sm:$0xff]
    %v432 = vld [vmem:[#allocation5 + $0x9e8] sm:$0xff]
    %v433 = vld [vmem:[#allocation5 + $0x9f0] sm:$0xff]
    %v434 = vld [vmem:[#allocation5 + $0x9f8] sm:$0xff]
    %v435 = vld [vmem:[#allocation5 + $0xa00] sm:$0xff]
    %v436 = vld [vmem:[#allocation5 + $0xa08] sm:$0xff]
    %v437 = vld [vmem:[#allocation5 + $0xa10] sm:$0xff]
    %v438 = vld [vmem:[#allocation5 + $0xa18] sm:$0xff]
    %v439 = vld [vmem:[#allocation5 + $0xa20] sm:$0xff]
    %v440 = vld [vmem:[#allocation5 + $0xa28] sm:$0xff]
    %v441 = vld [vmem:[#allocation5 + $0xa30] sm:$0xff]
    %v442 = vld [vmem:[#allocation5 + $0xa38] sm:$0xff]
    %v443 = vld [vmem:[#allocation5 + $0xa40] sm:$0xff]
    %v444 = vld [vmem:[#allocation5 + $0xa48] sm:$0xff]
    %v445 = vld [vmem:[#allocation5 + $0xa50] sm:$0xff]
    %v446 = vld [vmem:[#allocation5 + $0xa58] sm:$0xff]
    %v447 = vld [vmem:[#allocation5 + $0xa60] sm:$0xff]
    %v448 = vld [vmem:[#allocation5 + $0xa68] sm:$0xff]
    %v449 = vld [vmem:[#allocation5 + $0xa70] sm:$0xff]
    %v450 = vld [vmem:[#allocation5 + $0xa78] sm:$0xff]
    %v451 = vld [vmem:[#allocation5 + $0xa80] sm:$0xff]
    %v452 = vld [vmem:[#allocation5 + $0xa88] sm:$0xff]
    %v453 = vld [vmem:[#allocation5 + $0xa90] sm:$0xff]
    %v454 = vld [vmem:[#allocation5 + $0xa98] sm:$0xff]
    %v455 = vld [vmem:[#allocation5 + $0xaa0] sm:$0xff]
    %v456 = vld [vmem:[#allocation5 + $0xaa8] sm:$0xff]
    %v457 = vld [vmem:[#allocation5 + $0xab0] sm:$0xff]
    %v458 = vld [vmem:[#allocation5 + $0xab8] sm:$0xff]
    %v459 = vld [vmem:[#allocation5 + $0xac0] sm:$0xff]
    %v460 = vld [vmem:[#allocation5 + $0xac8] sm:$0xff]
    %v461 = vld [vmem:[#allocation5 + $0xad0] sm:$0xff]
    %v462 = vld [vmem:[#allocation5 + $0xad8] sm:$0xff]
    %v463 = vld [vmem:[#allocation5 + $0xae0] sm:$0xff]
    %v464 = vld [vmem:[#allocation5 + $0xae8] sm:$0xff]
    %v465 = vld [vmem:[#allocation5 + $0xaf0] sm:$0xff]
    %v466 = vld [vmem:[#allocation5 + $0xaf8] sm:$0xff]
    %v467 = vld [vmem:[#allocation5 + $0xb00] sm:$0xff]
    %v468 = vld [vmem:[#allocation5 + $0xb08] sm:$0xff]
    %v469 = vld [vmem:[#allocation5 + $0xb10] sm:$0xff]
    %v470 = vld [vmem:[#allocation5 + $0xb18] sm:$0xff]
    %v471 = vld [vmem:[#allocation5 + $0xb20] sm:$0xff]
    %v472 = vld [vmem:[#allocation5 + $0xb28] sm:$0xff]
    %v473 = vld [vmem:[#allocation5 + $0xb30] sm:$0xff]
    %v474 = vld [vmem:[#allocation5 + $0xb38] sm:$0xff]
    %v475 = vld [vmem:[#allocation5 + $0xb40] sm:$0xff]
    %v476 = vld [vmem:[#allocation5 + $0xb48] sm:$0xff]
    %v477 = vld [vmem:[#allocation5 + $0xb50] sm:$0xff]
    %v478 = vld [vmem:[#allocation5 + $0xb58] sm:$0xff]
    %v479 = vld [vmem:[#allocation5 + $0xb60] sm:$0xff]
    %v480 = vld [vmem:[#allocation5 + $0xb68] sm:$0xff]
    %v481 = vld [vmem:[#allocation5 + $0xb70] sm:$0xff]
    %v482 = vld [vmem:[#allocation5 + $0xb78] sm:$0xff]
    %v483 = vld [vmem:[#allocation5 + $0xb80] sm:$0xff]
    %v484 = vld [vmem:[#allocation5 + $0xb88] sm:$0xff]
    %v485 = vld [vmem:[#allocation5 + $0xb90] sm:$0xff]
    %v486 = vld [vmem:[#allocation5 + $0xb98] sm:$0xff]
    %v487 = vld [vmem:[#allocation5 + $0xba0] sm:$0xff]
    %v488 = vld [vmem:[#allocation5 + $0xba8] sm:$0xff]
    %v489 = vld [vmem:[#allocation5 + $0xbb0] sm:$0xff]
    %v490 = vld [vmem:[#allocation5 + $0xbb8] sm:$0xff]
    %v491 = vld [vmem:[#allocation5 + $0xbc0] sm:$0xff]
    %v492 = vld [vmem:[#allocation5 + $0xbc8] sm:$0xff]
    %v493 = vld [vmem:[#allocation5 + $0xbd0] sm:$0xff]
    %v494 = vld [vmem:[#allocation5 + $0xbd8] sm:$0xff]
    %v495 = vld [vmem:[#allocation5 + $0xbe0] sm:$0xff]
    %v496 = vld [vmem:[#allocation5 + $0xbe8] sm:$0xff]
    %v497 = vld [vmem:[#allocation5 + $0xbf0] sm:$0xff]
    %v498 = vld [vmem:[#allocation5 + $0xbf8] sm:$0xff]
    %v499 = vld [vmem:[#allocation5 + $0xc00] sm:$0xff]
    %v500 = vld [vmem:[#allocation5 + $0xc08] sm:$0xff]
    %v501 = vld [vmem:[#allocation5 + $0xc10] sm:$0xff]
    %v502 = vld [vmem:[#allocation5 + $0xc18] sm:$0xff]
    %v503 = vld [vmem:[#allocation5 + $0xc20] sm:$0xff]
    %v504 = vld [vmem:[#allocation5 + $0xc28] sm:$0xff]
    %v505 = vld [vmem:[#allocation5 + $0xc30] sm:$0xff]
    %v506 = vld [vmem:[#allocation5 + $0xc38] sm:$0xff]
    %v507 = vld [vmem:[#allocation5 + $0xc40] sm:$0xff]
    %v508 = vld [vmem:[#allocation5 + $0xc48] sm:$0xff]
    %v509 = vld [vmem:[#allocation5 + $0xc50] sm:$0xff]
    %v510 = vld [vmem:[#allocation5 + $0xc58] sm:$0xff]
    %v511 = vld [vmem:[#allocation5 + $0xc60] sm:$0xff]
    %v512 = vld [vmem:[#allocation5 + $0xc68] sm:$0xff]
    %v513 = vld [vmem:[#allocation5 + $0xc70] sm:$0xff]
    %v514 = vld [vmem:[#allocation5 + $0xc78] sm:$0xff]
    %v515 = vld [vmem:[#allocation5 + $0xc80] sm:$0xff]
    %v516 = vld [vmem:[#allocation5 + $0xc88] sm:$0xff]
    %v517 = vld [vmem:[#allocation5 + $0xc90] sm:$0xff]
    %v518 = vld [vmem:[#allocation5 + $0xc98] sm:$0xff]
    %v519 = vld [vmem:[#allocation5 + $0xca0] sm:$0xff]
    %v520 = vld [vmem:[#allocation5 + $0xca8] sm:$0xff]
    %v521 = vld [vmem:[#allocation5 + $0xcb0] sm:$0xff]
    %v522 = vld [vmem:[#allocation5 + $0xcb8] sm:$0xff]
    %v523 = vld [vmem:[#allocation5 + $0xcc0] sm:$0xff]
    %v524 = vld [vmem:[#allocation5 + $0xcc8] sm:$0xff]
    %v525 = vld [vmem:[#allocation5 + $0xcd0] sm:$0xff]
    %v526 = vld [vmem:[#allocation5 + $0xcd8] sm:$0xff]
    %v527 = vld [vmem:[#allocation5 + $0xce0] sm:$0xff]
    %v528 = vld [vmem:[#allocation5 + $0xce8] sm:$0xff]
    %v529 = vld [vmem:[#allocation5 + $0xcf0] sm:$0xff]
    %v530 = vld [vmem:[#allocation5 + $0xcf8] sm:$0xff]
    %v531 = vld [vmem:[#allocation5 + $0xd00] sm:$0xff]
    %v532 = vld [vmem:[#allocation5 + $0xd08] sm:$0xff]
    %v533 = vld [vmem:[#allocation5 + $0xd10] sm:$0xff]
    %v534 = vld [vmem:[#allocation5 + $0xd18] sm:$0xff]
    %v535 = vld [vmem:[#allocation5 + $0xd20] sm:$0xff]
    %v536 = vld [vmem:[#allocation5 + $0xd28] sm:$0xff]
    %v537 = vld [vmem:[#allocation5 + $0xd30] sm:$0xff]
    %v538 = vld [vmem:[#allocation5 + $0xd38] sm:$0xff]
    %v539 = vld [vmem:[#allocation5 + $0xd40] sm:$0xff]
    %v540 = vld [vmem:[#allocation5 + $0xd48] sm:$0xff]
    %v541 = vld [vmem:[#allocation5 + $0xd50] sm:$0xff]
    %v542 = vld [vmem:[#allocation5 + $0xd58] sm:$0xff]
    %v543 = vld [vmem:[#allocation5 + $0xd60] sm:$0xff]
    %v544 = vld [vmem:[#allocation5 + $0xd68] sm:$0xff]
    %v545 = vld [vmem:[#allocation5 + $0xd70] sm:$0xff]
    %v546 = vld [vmem:[#allocation5 + $0xd78] sm:$0xff]
    %v547 = vld [vmem:[#allocation5 + $0xd80] sm:$0xff]
    %v548 = vld [vmem:[#allocation5 + $0xd88] sm:$0xff]
    %v549 = vld [vmem:[#allocation5 + $0xd90] sm:$0xff]
    %v550 = vld [vmem:[#allocation5 + $0xd98] sm:$0xff]
    %v551 = vld [vmem:[#allocation5 + $0xda0] sm:$0xff]
    %v552 = vld [vmem:[#allocation5 + $0xda8] sm:$0xff]
    %v553 = vld [vmem:[#allocation5 + $0xdb0] sm:$0xff]
    %v554 = vld [vmem:[#allocation5 + $0xdb8] sm:$0xff]
    %v555 = vld [vmem:[#allocation5 + $0xdc0] sm:$0xff]
    %v556 = vld [vmem:[#allocation5 + $0xdc8] sm:$0xff]
    %v557 = vld [vmem:[#allocation5 + $0xdd0] sm:$0xff]
    %v558 = vld [vmem:[#allocation5 + $0xdd8] sm:$0xff]
    %v559 = vld [vmem:[#allocation5 + $0xde0] sm:$0xff]
    %v560 = vld [vmem:[#allocation5 + $0xde8] sm:$0xff]
    %v561 = vld [vmem:[#allocation5 + $0xdf0] sm:$0xff]
    %v562 = vld [vmem:[#allocation5 + $0xdf8] sm:$0xff]
    %v563 = vld [vmem:[#allocation5 + $0xe00] sm:$0xff]
    %v564 = vld [vmem:[#allocation5 + $0xe08] sm:$0xff]
    %v565 = vld [vmem:[#allocation5 + $0xe10] sm:$0xff]
    %v566 = vld [vmem:[#allocation5 + $0xe18] sm:$0xff]
    %v567 = vld [vmem:[#allocation5 + $0xe20] sm:$0xff]
    %v568 = vld [vmem:[#allocation5 + $0xe28] sm:$0xff]
    %v569 = vld [vmem:[#allocation5 + $0xe30] sm:$0xff]
    %v570 = vld [vmem:[#allocation5 + $0xe38] sm:$0xff]
    %v571 = vld [vmem:[#allocation5 + $0xe40] sm:$0xff]
    %v572 = vld [vmem:[#allocation5 + $0xe48] sm:$0xff]
    %v573 = vld [vmem:[#allocation5 + $0xe50] sm:$0xff]
    %v574 = vld [vmem:[#allocation5 + $0xe58] sm:$0xff]
    %v575 = vld [vmem:[#allocation5 + $0xe60] sm:$0xff]
    %v576 = vld [vmem:[#allocation5 + $0xe68] sm:$0xff]
    %v577 = vld [vmem:[#allocation5 + $0xe70] sm:$0xff]
    %v578 = vld [vmem:[#allocation5 + $0xe78] sm:$0xff]
    %v579 = vld [vmem:[#allocation5 + $0xe80] sm:$0xff]
    %v580 = vld [vmem:[#allocation5 + $0xe88] sm:$0xff]
    %v581 = vld [vmem:[#allocation5 + $0xe90] sm:$0xff]
    %v582 = vld [vmem:[#allocation5 + $0xe98] sm:$0xff]
    %v583 = vld [vmem:[#allocation5 + $0xea0] sm:$0xff]
    %v584 = vld [vmem:[#allocation5 + $0xea8] sm:$0xff]
    %v585 = vld [vmem:[#allocation5 + $0xeb0] sm:$0xff]
    %v586 = vld [vmem:[#allocation5 + $0xeb8] sm:$0xff]
    %v587 = vld [vmem:[#allocation5 + $0xec0] sm:$0xff]
    %v588 = vld [vmem:[#allocation5 + $0xec8] sm:$0xff]
    %v589 = vld [vmem:[#allocation5 + $0xed0] sm:$0xff]
    %v590 = vld [vmem:[#allocation5 + $0xed8] sm:$0xff]
    %v591 = vld [vmem:[#allocation5 + $0xee0] sm:$0xff]
    %v592 = vld [vmem:[#allocation5 + $0xee8] sm:$0xff]
    %v593 = vld [vmem:[#allocation5 + $0xef0] sm:$0xff]
    %v594 = vld [vmem:[#allocation5 + $0xef8] sm:$0xff]
    %v595 = vld [vmem:[#allocation5 + $0xf00] sm:$0xff]
    %v596 = vld [vmem:[#allocation5 + $0xf08] sm:$0xff]
    %v597 = vld [vmem:[#allocation5 + $0xf10] sm:$0xff]
    %v598 = vld [vmem:[#allocation5 + $0xf18] sm:$0xff]
    %v599 = vld [vmem:[#allocation5 + $0xf20] sm:$0xff]
    %v600 = vld [vmem:[#allocation5 + $0xf28] sm:$0xff]
    %v601 = vld [vmem:[#allocation5 + $0xf30] sm:$0xff]
    %v602 = vld [vmem:[#allocation5 + $0xf38] sm:$0xff]
    %v603 = vld [vmem:[#allocation5 + $0xf40] sm:$0xff]
    %v604 = vld [vmem:[#allocation5 + $0xf48] sm:$0xff]
    %v605 = vld [vmem:[#allocation5 + $0xf50] sm:$0xff]
    %v606 = vld [vmem:[#allocation5 + $0xf58] sm:$0xff]
    %v607 = vld [vmem:[#allocation5 + $0xf60] sm:$0xff]
    %v608 = vld [vmem:[#allocation5 + $0xf68] sm:$0xff]
    %v609 = vld [vmem:[#allocation5 + $0xf70] sm:$0xff]
    %v610 = vld [vmem:[#allocation5 + $0xf78] sm:$0xff]
    %v611 = vld [vmem:[#allocation5 + $0xf80] sm:$0xff]
    %v612 = vld [vmem:[#allocation5 + $0xf88] sm:$0xff]
    %v613 = vld [vmem:[#allocation5 + $0xf90] sm:$0xff]
    %v614 = vld [vmem:[#allocation5 + $0xf98] sm:$0xff]
    %v615 = vld [vmem:[#allocation5 + $0xfa0] sm:$0xff]
    %v616 = vld [vmem:[#allocation5 + $0xfa8] sm:$0xff]
    %v617 = vld [vmem:[#allocation5 + $0xfb0] sm:$0xff]
    %v618 = vld [vmem:[#allocation5 + $0xfb8] sm:$0xff]
    %v619 = vld [vmem:[#allocation5 + $0xfc0] sm:$0xff]
    %v620 = vld [vmem:[#allocation5 + $0xfc8] sm:$0xff]
    %v621 = vld [vmem:[#allocation5 + $0xfd0] sm:$0xff]
    %v622 = vld [vmem:[#allocation5 + $0xfd8] sm:$0xff]
    %v623 = vld [vmem:[#allocation5 + $0xfe0] sm:$0xff]
    %v624 = vld [vmem:[#allocation5 + $0xfe8] sm:$0xff]
    %v625 = vld [vmem:[#allocation5 + $0xff0] sm:$0xff]
    %v626 = vld [vmem:[#allocation5 + $0xff8] sm:$0xff]
    %v627 = vld [vmem:[#allocation8] sm:$0xf]
    %v628 = vld [vmem:[#allocation8 + $0x4] sm:$0xf]
    %v629 = vld [vmem:[#allocation8 + $0x8] sm:$0xf]
    %v630 = vld [vmem:[#allocation8 + $0xc] sm:$0xf]
    %v631 = vld [vmem:[#allocation8 + $0x10] sm:$0xf]
    %v632 = vld [vmem:[#allocation8 + $0x14] sm:$0xf]
    %v633 = vld [vmem:[#allocation8 + $0x18] sm:$0xf]
    %v634 = vld [vmem:[#allocation8 + $0x1c] sm:$0xf]
    %v635 = vld [vmem:[#allocation8 + $0x20] sm:$0xf]
    %v636 = vld [vmem:[#allocation8 + $0x24] sm:$0xf]
    %v637 = vld [vmem:[#allocation8 + $0x28] sm:$0xf]
    %v638 = vld [vmem:[#allocation8 + $0x2c] sm:$0xf]
    %v639 = vld [vmem:[#allocation8 + $0x30] sm:$0xf]
    %v640 = vld [vmem:[#allocation8 + $0x34] sm:$0xf]
    %v641 = vld [vmem:[#allocation8 + $0x38] sm:$0xf]
    %v642 = vld [vmem:[#allocation8 + $0x3c] sm:$0xf]
    %v643 = vld [vmem:[#allocation8 + $0x40] sm:$0xf]
    %v644 = vld [vmem:[#allocation8 + $0x44] sm:$0xf]
    %v645 = vld [vmem:[#allocation8 + $0x48] sm:$0xf]
    %v646 = vld [vmem:[#allocation8 + $0x4c] sm:$0xf]
    %v647 = vld [vmem:[#allocation8 + $0x50] sm:$0xf]
    %v648 = vld [vmem:[#allocation8 + $0x54] sm:$0xf]
    %v649 = vld [vmem:[#allocation8 + $0x58] sm:$0xf]
    %v650 = vld [vmem:[#allocation8 + $0x5c] sm:$0xf]
    %v651 = vld [vmem:[#allocation8 + $0x60] sm:$0xf]
    %v652 = vld [vmem:[#allocation8 + $0x64] sm:$0xf]
    %v653 = vld [vmem:[#allocation8 + $0x68] sm:$0xf]
    %v654 = vld [vmem:[#allocation8 + $0x6c] sm:$0xf]
    %v655 = vld [vmem:[#allocation8 + $0x70] sm:$0xf]
    %v656 = vld [vmem:[#allocation8 + $0x74] sm:$0xf]
    %v657 = vld [vmem:[#allocation8 + $0x78] sm:$0xf]
    %v658 = vld [vmem:[#allocation8 + $0x7c] sm:$0xf]
    %v659 = vld [vmem:[#allocation8 + $0x80] sm:$0xf]
    %v660 = vld [vmem:[#allocation8 + $0x84] sm:$0xf]
    %v661 = vld [vmem:[#allocation8 + $0x88] sm:$0xf]
    %v662 = vld [vmem:[#allocation8 + $0x8c] sm:$0xf]
    %v663 = vld [vmem:[#allocation8 + $0x90] sm:$0xf]
    %v664 = vld [vmem:[#allocation8 + $0x94] sm:$0xf]
    %v665 = vld [vmem:[#allocation8 + $0x98] sm:$0xf]
    %v666 = vld [vmem:[#allocation8 + $0x9c] sm:$0xf]
    %v667 = vld [vmem:[#allocation8 + $0xa0] sm:$0xf]
    %v668 = vld [vmem:[#allocation8 + $0xa4] sm:$0xf]
    %v669 = vld [vmem:[#allocation8 + $0xa8] sm:$0xf]
    %v670 = vld [vmem:[#allocation8 + $0xac] sm:$0xf]
    %v671 = vld [vmem:[#allocation8 + $0xb0] sm:$0xf]
    %v672 = vld [vmem:[#allocation8 + $0xb4] sm:$0xf]
    %v673 = vld [vmem:[#allocation8 + $0xb8] sm:$0xf]
    %v674 = vld [vmem:[#allocation8 + $0xbc] sm:$0xf]
    %v675 = vld [vmem:[#allocation8 + $0xc0] sm:$0xf]
    %v676 = vld [vmem:[#allocation8 + $0xc4] sm:$0xf]
    %v677 = vld [vmem:[#allocation8 + $0xc8] sm:$0xf]
    %v678 = vld [vmem:[#allocation8 + $0xcc] sm:$0xf]
    %v679 = vld [vmem:[#allocation8 + $0xd0] sm:$0xf]
    %v680 = vld [vmem:[#allocation8 + $0xd4] sm:$0xf]
    %v681 = vld [vmem:[#allocation8 + $0xd8] sm:$0xf]
    %v682 = vld [vmem:[#allocation8 + $0xdc] sm:$0xf]
    %v683 = vld [vmem:[#allocation8 + $0xe0] sm:$0xf]
    %v684 = vld [vmem:[#allocation8 + $0xe4] sm:$0xf]
    %v685 = vld [vmem:[#allocation8 + $0xe8] sm:$0xf]
    %v686 = vld [vmem:[#allocation8 + $0xec] sm:$0xf]
    %v687 = vld [vmem:[#allocation8 + $0xf0] sm:$0xf]
    %v688 = vld [vmem:[#allocation8 + $0xf4] sm:$0xf]
    %v689 = vld [vmem:[#allocation8 + $0xf8] sm:$0xf]
    %v690 = vld [vmem:[#allocation8 + $0xfc] sm:$0xf]
    %v691 = vld [vmem:[#allocation8 + $0x100] sm:$0xf]
    %v692 = vld [vmem:[#allocation8 + $0x104] sm:$0xf]
    %v693 = vld [vmem:[#allocation8 + $0x108] sm:$0xf]
    %v694 = vld [vmem:[#allocation8 + $0x10c] sm:$0xf]
    %v695 = vld [vmem:[#allocation8 + $0x110] sm:$0xf]
    %v696 = vld [vmem:[#allocation8 + $0x114] sm:$0xf]
    %v697 = vld [vmem:[#allocation8 + $0x118] sm:$0xf]
    %v698 = vld [vmem:[#allocation8 + $0x11c] sm:$0xf]
    %v699 = vld [vmem:[#allocation8 + $0x120] sm:$0xf]
    %v700 = vld [vmem:[#allocation8 + $0x124] sm:$0xf]
    %v701 = vld [vmem:[#allocation8 + $0x128] sm:$0xf]
    %v702 = vld [vmem:[#allocation8 + $0x12c] sm:$0xf]
    %v703 = vld [vmem:[#allocation8 + $0x130] sm:$0xf]
    %v704 = vld [vmem:[#allocation8 + $0x134] sm:$0xf]
    %v705 = vld [vmem:[#allocation8 + $0x138] sm:$0xf]
    %v706 = vld [vmem:[#allocation8 + $0x13c] sm:$0xf]
    %v707 = vld [vmem:[#allocation8 + $0x140] sm:$0xf]
    %v708 = vld [vmem:[#allocation8 + $0x144] sm:$0xf]
    %v709 = vld [vmem:[#allocation8 + $0x148] sm:$0xf]
    %v710 = vld [vmem:[#allocation8 + $0x14c] sm:$0xf]
    %v711 = vld [vmem:[#allocation8 + $0x150] sm:$0xf]
    %v712 = vld [vmem:[#allocation8 + $0x154] sm:$0xf]
    %v713 = vld [vmem:[#allocation8 + $0x158] sm:$0xf]
    %v714 = vld [vmem:[#allocation8 + $0x15c] sm:$0xf]
    %v715 = vld [vmem:[#allocation8 + $0x160] sm:$0xf]
    %v716 = vld [vmem:[#allocation8 + $0x164] sm:$0xf]
    %v717 = vld [vmem:[#allocation8 + $0x168] sm:$0xf]
    %v718 = vld [vmem:[#allocation8 + $0x16c] sm:$0xf]
    %v719 = vld [vmem:[#allocation8 + $0x170] sm:$0xf]
    %v720 = vld [vmem:[#allocation8 + $0x174] sm:$0xf]
    %v721 = vld [vmem:[#allocation8 + $0x178] sm:$0xf]
    %v722 = vld [vmem:[#allocation8 + $0x17c] sm:$0xf]
    %v723 = vld [vmem:[#allocation8 + $0x180] sm:$0xf]
    %v724 = vld [vmem:[#allocation8 + $0x184] sm:$0xf]
    %v725 = vld [vmem:[#allocation8 + $0x188] sm:$0xf]
    %v726 = vld [vmem:[#allocation8 + $0x18c] sm:$0xf]
    %v727 = vld [vmem:[#allocation8 + $0x190] sm:$0xf]
    %v728 = vld [vmem:[#allocation8 + $0x194] sm:$0xf]
    %v729 = vld [vmem:[#allocation8 + $0x198] sm:$0xf]
    %v730 = vld [vmem:[#allocation8 + $0x19c] sm:$0xf]
    %v731 = vld [vmem:[#allocation8 + $0x1a0] sm:$0xf]
    %v732 = vld [vmem:[#allocation8 + $0x1a4] sm:$0xf]
    %v733 = vld [vmem:[#allocation8 + $0x1a8] sm:$0xf]
    %v734 = vld [vmem:[#allocation8 + $0x1ac] sm:$0xf]
    %v735 = vld [vmem:[#allocation8 + $0x1b0] sm:$0xf]
    %v736 = vld [vmem:[#allocation8 + $0x1b4] sm:$0xf]
    %v737 = vld [vmem:[#allocation8 + $0x1b8] sm:$0xf]
    %v738 = vld [vmem:[#allocation8 + $0x1bc] sm:$0xf]
    %v739 = vld [vmem:[#allocation8 + $0x1c0] sm:$0xf]
    %v740 = vld [vmem:[#allocation8 + $0x1c4] sm:$0xf]
    %v741 = vld [vmem:[#allocation8 + $0x1c8] sm:$0xf]
    %v742 = vld [vmem:[#allocation8 + $0x1cc] sm:$0xf]
    %v743 = vld [vmem:[#allocation8 + $0x1d0] sm:$0xf]
    %v744 = vld [vmem:[#allocation8 + $0x1d4] sm:$0xf]
    %v745 = vld [vmem:[#allocation8 + $0x1d8] sm:$0xf]
    %v746 = vld [vmem:[#allocation8 + $0x1dc] sm:$0xf]
    %v747 = vld [vmem:[#allocation8 + $0x1e0] sm:$0xf]
    %v748 = vld [vmem:[#allocation8 + $0x1e4] sm:$0xf]
    %v749 = vld [vmem:[#allocation8 + $0x1e8] sm:$0xf]
    %v750 = vld [vmem:[#allocation8 + $0x1ec] sm:$0xf]
    %v751 = vld [vmem:[#allocation8 + $0x1f0] sm:$0xf]
    %v752 = vld [vmem:[#allocation8 + $0x1f4] sm:$0xf]
    %v753 = vld [vmem:[#allocation8 + $0x1f8] sm:$0xf]
    %v754 = vld [vmem:[#allocation8 + $0x1fc] sm:$0xf]
    %v755 = vld [vmem:[#allocation11] sm:$0xf]
    %v756 = vld [vmem:[#allocation11 + $0x4] sm:$0xf]
    %v757 = vld [vmem:[#allocation11 + $0x8] sm:$0xf]
    %v758 = vld [vmem:[#allocation11 + $0xc] sm:$0xf]
    %v759 = vld [vmem:[#allocation11 + $0x10] sm:$0xf]
    %v760 = vld [vmem:[#allocation11 + $0x14] sm:$0xf]
    %v761 = vld [vmem:[#allocation11 + $0x18] sm:$0xf]
    %v762 = vld [vmem:[#allocation11 + $0x1c] sm:$0xf]
    %v763 = vld [vmem:[#allocation11 + $0x20] sm:$0xf]
    %v764 = vld [vmem:[#allocation11 + $0x24] sm:$0xf]
    %v765 = vld [vmem:[#allocation11 + $0x28] sm:$0xf]
    %v766 = vld [vmem:[#allocation11 + $0x2c] sm:$0xf]
    %v767 = vld [vmem:[#allocation11 + $0x30] sm:$0xf]
    %v768 = vld [vmem:[#allocation11 + $0x34] sm:$0xf]
    %v769 = vld [vmem:[#allocation11 + $0x38] sm:$0xf]
    %v770 = vld [vmem:[#allocation11 + $0x3c] sm:$0xf]
    %v771 = vld [vmem:[#allocation7] sm:$0xff]
    %v772 = vld [vmem:[#allocation10] sm:$0x1]
    %v773 = vld [vmem:[#allocation13] sm:$0x1]
    %v774 = vld [vmem:[#allocation2] sm:$0xff]
    %v776 = vlaneseq
    %v777 = vshrl.u32 %v776, 7
    %v778 = vsub.s32 0, %v777
    %v779 = vrot.slane %v771, %v778
    %v780 = vlaneseq
    %v781 = vshrl.u32 %v780, 7
    %v782 = vsub.s32 1, %v781
    %v783 = vrot.slane %v771, %v782
    %v784 = vlaneseq
    %v785 = vshrl.u32 %v784, 7
    %v786 = vsub.s32 2, %v785
    %v787 = vrot.slane %v771, %v786
    %v788 = vlaneseq
    %v789 = vshrl.u32 %v788, 7
    %v790 = vsub.s32 3, %v789
    %v791 = vrot.slane %v771, %v790
    %v792 = vlaneseq
    %v793 = vshrl.u32 %v792, 7
    %v794 = vsub.s32 4, %v793
    %v795 = vrot.slane %v771, %v794
    %v796 = vlaneseq
    %v797 = vshrl.u32 %v796, 7
    %v798 = vsub.s32 5, %v797
    %v799 = vrot.slane %v771, %v798
    %v800 = vlaneseq
    %v801 = vshrl.u32 %v800, 7
    %v802 = vsub.s32 6, %v801
    %v803 = vrot.slane %v771, %v802
    %v804 = vlaneseq
    %v805 = vshrl.u32 %v804, 7
    %v806 = vsub.s32 7, %v805
    %v807 = vrot.slane %v771, %v806
    %v817 = vcombine.high %v774, %v774
    %v819 = vunpack.c.l.s4 1966171168
    %v820 = vunpack.c.0.s8 %v819
    %v821 = vlaneseq
    %v822 = vshrl.u32 %v821, 7
    %v823 = vsub.s32 %v820, %v822
    %v824 = vrot.slane %v774, %v823
    %v826 = vunpack.c.l.s4 1966171168
    %v827 = vunpack.c.0.s8 %v826
    %v828 = vlaneseq
    %v829 = vshrl.u32 %v828, 7
    %v830 = vsub.s32 %v827, %v829
    %v831 = vrot.slane %v817, %v830
    %v832 = vcombine.high %v824, %v824
    %v833 = vcombine.high %v831, %v831
    %v835 = vunpack.c.l.s4 1966171168
    %v836 = vunpack.c.0.s8 %v835
    %v837 = vlaneseq
    %v838 = vshrl.u32 %v837, 7
    %v839 = vsub.s32 %v836, %v838
    %v840 = vrot.slane %v824, %v839
    %v842 = vunpack.c.l.s4 1966171168
    %v843 = vunpack.c.0.s8 %v842
    %v844 = vlaneseq
    %v845 = vshrl.u32 %v844, 7
    %v846 = vsub.s32 %v843, %v845
    %v847 = vrot.slane %v831, %v846
    %v849 = vunpack.c.l.s4 1966171168
    %v850 = vunpack.c.0.s8 %v849
    %v851 = vlaneseq
    %v852 = vshrl.u32 %v851, 7
    %v853 = vsub.s32 %v850, %v852
    %v854 = vrot.slane %v832, %v853
    %v856 = vunpack.c.l.s4 1966171168
    %v857 = vunpack.c.0.s8 %v856
    %v858 = vlaneseq
    %v859 = vshrl.u32 %v858, 7
    %v860 = vsub.s32 %v857, %v859
    %v861 = vrot.slane %v833, %v860
    %v862 = vcombine.high %v840, %v840
    %v863 = vcombine.high %v847, %v847
    %v864 = vcombine.high %v854, %v854
    %v865 = vcombine.high %v861, %v861
    %v1386 = vunpack.c.l.b16 %v115
    %v1387 = vunpack.c.h.b16 %v115
    %v1388 = vunpack.c.l.b16 %v116
    %v1389 = vunpack.c.h.b16 %v116
    %v1390 = vunpack.c.l.b16 %v117
    %v1391 = vunpack.c.h.b16 %v117
    %v1392 = vunpack.c.l.b16 %v118
    %v1393 = vunpack.c.h.b16 %v118
    %v1394 = vunpack.c.l.b16 %v119
    %v1395 = vunpack.c.h.b16 %v119
    %v1396 = vunpack.c.l.b16 %v120
    %v1397 = vunpack.c.h.b16 %v120
    %v1398 = vunpack.c.l.b16 %v121
    %v1399 = vunpack.c.h.b16 %v121
    %v1400 = vunpack.c.l.b16 %v122
    %v1401 = vunpack.c.h.b16 %v122
    %v1402 = vunpack.c.l.b16 %v123
    %v1403 = vunpack.c.h.b16 %v123
    %v1404 = vunpack.c.l.b16 %v124
    %v1405 = vunpack.c.h.b16 %v124
    %v1406 = vunpack.c.l.b16 %v125
    %v1407 = vunpack.c.h.b16 %v125
    %v1408 = vunpack.c.l.b16 %v126
    %v1409 = vunpack.c.h.b16 %v126
    %v1410 = vunpack.c.l.b16 %v127
    %v1411 = vunpack.c.h.b16 %v127
    %v1412 = vunpack.c.l.b16 %v128
    %v1413 = vunpack.c.h.b16 %v128
    %v1414 = vunpack.c.l.b16 %v129
    %v1415 = vunpack.c.h.b16 %v129
    %v1416 = vunpack.c.l.b16 %v130
    %v1417 = vunpack.c.h.b16 %v130
    %v1418 = vunpack.c.l.b16 %v131
    %v1419 = vunpack.c.h.b16 %v131
    %v1420 = vunpack.c.l.b16 %v132
    %v1421 = vunpack.c.h.b16 %v132
    %v1422 = vunpack.c.l.b16 %v133
    %v1423 = vunpack.c.h.b16 %v133
    %v1424 = vunpack.c.l.b16 %v134
    %v1425 = vunpack.c.h.b16 %v134
    %v1426 = vunpack.c.l.b16 %v135
    %v1427 = vunpack.c.h.b16 %v135
    %v1428 = vunpack.c.l.b16 %v136
    %v1429 = vunpack.c.h.b16 %v136
    %v1430 = vunpack.c.l.b16 %v137
    %v1431 = vunpack.c.h.b16 %v137
    %v1432 = vunpack.c.l.b16 %v138
    %v1433 = vunpack.c.h.b16 %v138
    %v1434 = vunpack.c.l.b16 %v139
    %v1435 = vunpack.c.h.b16 %v139
    %v1436 = vunpack.c.l.b16 %v140
    %v1437 = vunpack.c.h.b16 %v140
    %v1438 = vunpack.c.l.b16 %v141
    %v1439 = vunpack.c.h.b16 %v141
    %v1440 = vunpack.c.l.b16 %v142
    %v1441 = vunpack.c.h.b16 %v142
    %v1442 = vunpack.c.l.b16 %v143
    %v1443 = vunpack.c.h.b16 %v143
    %v1444 = vunpack.c.l.b16 %v144
    %v1445 = vunpack.c.h.b16 %v144
    %v1446 = vunpack.c.l.b16 %v145
    %v1447 = vunpack.c.h.b16 %v145
    %v1448 = vunpack.c.l.b16 %v146
    %v1449 = vunpack.c.h.b16 %v146
    %v1450 = vunpack.c.l.b16 %v147
    %v1451 = vunpack.c.h.b16 %v147
    %v1452 = vunpack.c.l.b16 %v148
    %v1453 = vunpack.c.h.b16 %v148
    %v1454 = vunpack.c.l.b16 %v149
    %v1455 = vunpack.c.h.b16 %v149
    %v1456 = vunpack.c.l.b16 %v150
    %v1457 = vunpack.c.h.b16 %v150
    %v1458 = vunpack.c.l.b16 %v151
    %v1459 = vunpack.c.h.b16 %v151
    %v1460 = vunpack.c.l.b16 %v152
    %v1461 = vunpack.c.h.b16 %v152
    %v1462 = vunpack.c.l.b16 %v153
    %v1463 = vunpack.c.h.b16 %v153
    %v1464 = vunpack.c.l.b16 %v154
    %v1465 = vunpack.c.h.b16 %v154
    %v1466 = vunpack.c.l.b16 %v155
    %v1467 = vunpack.c.h.b16 %v155
    %v1468 = vunpack.c.l.b16 %v156
    %v1469 = vunpack.c.h.b16 %v156
    %v1470 = vunpack.c.l.b16 %v157
    %v1471 = vunpack.c.h.b16 %v157
    %v1472 = vunpack.c.l.b16 %v158
    %v1473 = vunpack.c.h.b16 %v158
    %v1474 = vunpack.c.l.b16 %v159
    %v1475 = vunpack.c.h.b16 %v159
    %v1476 = vunpack.c.l.b16 %v160
    %v1477 = vunpack.c.h.b16 %v160
    %v1478 = vunpack.c.l.b16 %v161
    %v1479 = vunpack.c.h.b16 %v161
    %v1480 = vunpack.c.l.b16 %v162
    %v1481 = vunpack.c.h.b16 %v162
    %v1482 = vunpack.c.l.b16 %v163
    %v1483 = vunpack.c.h.b16 %v163
    %v1484 = vunpack.c.l.b16 %v164
    %v1485 = vunpack.c.h.b16 %v164
    %v1486 = vunpack.c.l.b16 %v165
    %v1487 = vunpack.c.h.b16 %v165
    %v1488 = vunpack.c.l.b16 %v166
    %v1489 = vunpack.c.h.b16 %v166
    %v1490 = vunpack.c.l.b16 %v167
    %v1491 = vunpack.c.h.b16 %v167
    %v1492 = vunpack.c.l.b16 %v168
    %v1493 = vunpack.c.h.b16 %v168
    %v1494 = vunpack.c.l.b16 %v169
    %v1495 = vunpack.c.h.b16 %v169
    %v1496 = vunpack.c.l.b16 %v170
    %v1497 = vunpack.c.h.b16 %v170
    %v1498 = vunpack.c.l.b16 %v171
    %v1499 = vunpack.c.h.b16 %v171
    %v1500 = vunpack.c.l.b16 %v172
    %v1501 = vunpack.c.h.b16 %v172
    %v1502 = vunpack.c.l.b16 %v173
    %v1503 = vunpack.c.h.b16 %v173
    %v1504 = vunpack.c.l.b16 %v174
    %v1505 = vunpack.c.h.b16 %v174
    %v1506 = vunpack.c.l.b16 %v175
    %v1507 = vunpack.c.h.b16 %v175
    %v1508 = vunpack.c.l.b16 %v176
    %v1509 = vunpack.c.h.b16 %v176
    %v1510 = vunpack.c.l.b16 %v177
    %v1511 = vunpack.c.h.b16 %v177
    %v1512 = vunpack.c.l.b16 %v178
    %v1513 = vunpack.c.h.b16 %v178
    %v1514 = vunpack.c.l.b16 %v179
    %v1515 = vunpack.c.h.b16 %v179
    %v1516 = vunpack.c.l.b16 %v180
    %v1517 = vunpack.c.h.b16 %v180
    %v1518 = vunpack.c.l.b16 %v181
    %v1519 = vunpack.c.h.b16 %v181
    %v1520 = vunpack.c.l.b16 %v182
    %v1521 = vunpack.c.h.b16 %v182
    %v1522 = vunpack.c.l.b16 %v183
    %v1523 = vunpack.c.h.b16 %v183
    %v1524 = vunpack.c.l.b16 %v184
    %v1525 = vunpack.c.h.b16 %v184
    %v1526 = vunpack.c.l.b16 %v185
    %v1527 = vunpack.c.h.b16 %v185
    %v1528 = vunpack.c.l.b16 %v186
    %v1529 = vunpack.c.h.b16 %v186
    %v1530 = vunpack.c.l.b16 %v187
    %v1531 = vunpack.c.h.b16 %v187
    %v1532 = vunpack.c.l.b16 %v188
    %v1533 = vunpack.c.h.b16 %v188
    %v1534 = vunpack.c.l.b16 %v189
    %v1535 = vunpack.c.h.b16 %v189
    %v1536 = vunpack.c.l.b16 %v190
    %v1537 = vunpack.c.h.b16 %v190
    %v1538 = vunpack.c.l.b16 %v191
    %v1539 = vunpack.c.h.b16 %v191
    %v1540 = vunpack.c.l.b16 %v192
    %v1541 = vunpack.c.h.b16 %v192
    %v1542 = vunpack.c.l.b16 %v193
    %v1543 = vunpack.c.h.b16 %v193
    %v1544 = vunpack.c.l.b16 %v194
    %v1545 = vunpack.c.h.b16 %v194
    %v1546 = vunpack.c.l.b16 %v195
    %v1547 = vunpack.c.h.b16 %v195
    %v1548 = vunpack.c.l.b16 %v196
    %v1549 = vunpack.c.h.b16 %v196
    %v1550 = vunpack.c.l.b16 %v197
    %v1551 = vunpack.c.h.b16 %v197
    %v1552 = vunpack.c.l.b16 %v198
    %v1553 = vunpack.c.h.b16 %v198
    %v1554 = vunpack.c.l.b16 %v199
    %v1555 = vunpack.c.h.b16 %v199
    %v1556 = vunpack.c.l.b16 %v200
    %v1557 = vunpack.c.h.b16 %v200
    %v1558 = vunpack.c.l.b16 %v201
    %v1559 = vunpack.c.h.b16 %v201
    %v1560 = vunpack.c.l.b16 %v202
    %v1561 = vunpack.c.h.b16 %v202
    %v1562 = vunpack.c.l.b16 %v203
    %v1563 = vunpack.c.h.b16 %v203
    %v1564 = vunpack.c.l.b16 %v204
    %v1565 = vunpack.c.h.b16 %v204
    %v1566 = vunpack.c.l.b16 %v205
    %v1567 = vunpack.c.h.b16 %v205
    %v1568 = vunpack.c.l.b16 %v206
    %v1569 = vunpack.c.h.b16 %v206
    %v1570 = vunpack.c.l.b16 %v207
    %v1571 = vunpack.c.h.b16 %v207
    %v1572 = vunpack.c.l.b16 %v208
    %v1573 = vunpack.c.h.b16 %v208
    %v1574 = vunpack.c.l.b16 %v209
    %v1575 = vunpack.c.h.b16 %v209
    %v1576 = vunpack.c.l.b16 %v210
    %v1577 = vunpack.c.h.b16 %v210
    %v1578 = vunpack.c.l.b16 %v211
    %v1579 = vunpack.c.h.b16 %v211
    %v1580 = vunpack.c.l.b16 %v212
    %v1581 = vunpack.c.h.b16 %v212
    %v1582 = vunpack.c.l.b16 %v213
    %v1583 = vunpack.c.h.b16 %v213
    %v1584 = vunpack.c.l.b16 %v214
    %v1585 = vunpack.c.h.b16 %v214
    %v1586 = vunpack.c.l.b16 %v215
    %v1587 = vunpack.c.h.b16 %v215
    %v1588 = vunpack.c.l.b16 %v216
    %v1589 = vunpack.c.h.b16 %v216
    %v1590 = vunpack.c.l.b16 %v217
    %v1591 = vunpack.c.h.b16 %v217
    %v1592 = vunpack.c.l.b16 %v218
    %v1593 = vunpack.c.h.b16 %v218
    %v1594 = vunpack.c.l.b16 %v219
    %v1595 = vunpack.c.h.b16 %v219
    %v1596 = vunpack.c.l.b16 %v220
    %v1597 = vunpack.c.h.b16 %v220
    %v1598 = vunpack.c.l.b16 %v221
    %v1599 = vunpack.c.h.b16 %v221
    %v1600 = vunpack.c.l.b16 %v222
    %v1601 = vunpack.c.h.b16 %v222
    %v1602 = vunpack.c.l.b16 %v223
    %v1603 = vunpack.c.h.b16 %v223
    %v1604 = vunpack.c.l.b16 %v224
    %v1605 = vunpack.c.h.b16 %v224
    %v1606 = vunpack.c.l.b16 %v225
    %v1607 = vunpack.c.h.b16 %v225
    %v1608 = vunpack.c.l.b16 %v226
    %v1609 = vunpack.c.h.b16 %v226
    %v1610 = vunpack.c.l.b16 %v227
    %v1611 = vunpack.c.h.b16 %v227
    %v1612 = vunpack.c.l.b16 %v228
    %v1613 = vunpack.c.h.b16 %v228
    %v1614 = vunpack.c.l.b16 %v229
    %v1615 = vunpack.c.h.b16 %v229
    %v1616 = vunpack.c.l.b16 %v230
    %v1617 = vunpack.c.h.b16 %v230
    %v1618 = vunpack.c.l.b16 %v231
    %v1619 = vunpack.c.h.b16 %v231
    %v1620 = vunpack.c.l.b16 %v232
    %v1621 = vunpack.c.h.b16 %v232
    %v1622 = vunpack.c.l.b16 %v233
    %v1623 = vunpack.c.h.b16 %v233
    %v1624 = vunpack.c.l.b16 %v234
    %v1625 = vunpack.c.h.b16 %v234
    %v1626 = vunpack.c.l.b16 %v235
    %v1627 = vunpack.c.h.b16 %v235
    %v1628 = vunpack.c.l.b16 %v236
    %v1629 = vunpack.c.h.b16 %v236
    %v1630 = vunpack.c.l.b16 %v237
    %v1631 = vunpack.c.h.b16 %v237
    %v1632 = vunpack.c.l.b16 %v238
    %v1633 = vunpack.c.h.b16 %v238
    %v1634 = vunpack.c.l.b16 %v239
    %v1635 = vunpack.c.h.b16 %v239
    %v1636 = vunpack.c.l.b16 %v240
    %v1637 = vunpack.c.h.b16 %v240
    %v1638 = vunpack.c.l.b16 %v241
    %v1639 = vunpack.c.h.b16 %v241
    %v1640 = vunpack.c.l.b16 %v242
    %v1641 = vunpack.c.h.b16 %v242
    %v1642 = vunpack.c.l.b16 %v243
    %v1643 = vunpack.c.h.b16 %v243
    %v1644 = vunpack.c.l.b16 %v244
    %v1645 = vunpack.c.h.b16 %v244
    %v1646 = vunpack.c.l.b16 %v245
    %v1647 = vunpack.c.h.b16 %v245
    %v1648 = vunpack.c.l.b16 %v246
    %v1649 = vunpack.c.h.b16 %v246
    %v1650 = vunpack.c.l.b16 %v247
    %v1651 = vunpack.c.h.b16 %v247
    %v1652 = vunpack.c.l.b16 %v248
    %v1653 = vunpack.c.h.b16 %v248
    %v1654 = vunpack.c.l.b16 %v249
    %v1655 = vunpack.c.h.b16 %v249
    %v1656 = vunpack.c.l.b16 %v250
    %v1657 = vunpack.c.h.b16 %v250
    %v1658 = vunpack.c.l.b16 %v251
    %v1659 = vunpack.c.h.b16 %v251
    %v1660 = vunpack.c.l.b16 %v252
    %v1661 = vunpack.c.h.b16 %v252
    %v1662 = vunpack.c.l.b16 %v253
    %v1663 = vunpack.c.h.b16 %v253
    %v1664 = vunpack.c.l.b16 %v254
    %v1665 = vunpack.c.h.b16 %v254
    %v1666 = vunpack.c.l.b16 %v255
    %v1667 = vunpack.c.h.b16 %v255
    %v1668 = vunpack.c.l.b16 %v256
    %v1669 = vunpack.c.h.b16 %v256
    %v1670 = vunpack.c.l.b16 %v257
    %v1671 = vunpack.c.h.b16 %v257
    %v1672 = vunpack.c.l.b16 %v258
    %v1673 = vunpack.c.h.b16 %v258
    %v1674 = vunpack.c.l.b16 %v259
    %v1675 = vunpack.c.h.b16 %v259
    %v1676 = vunpack.c.l.b16 %v260
    %v1677 = vunpack.c.h.b16 %v260
    %v1678 = vunpack.c.l.b16 %v261
    %v1679 = vunpack.c.h.b16 %v261
    %v1680 = vunpack.c.l.b16 %v262
    %v1681 = vunpack.c.h.b16 %v262
    %v1682 = vunpack.c.l.b16 %v263
    %v1683 = vunpack.c.h.b16 %v263
    %v1684 = vunpack.c.l.b16 %v264
    %v1685 = vunpack.c.h.b16 %v264
    %v1686 = vunpack.c.l.b16 %v265
    %v1687 = vunpack.c.h.b16 %v265
    %v1688 = vunpack.c.l.b16 %v266
    %v1689 = vunpack.c.h.b16 %v266
    %v1690 = vunpack.c.l.b16 %v267
    %v1691 = vunpack.c.h.b16 %v267
    %v1692 = vunpack.c.l.b16 %v268
    %v1693 = vunpack.c.h.b16 %v268
    %v1694 = vunpack.c.l.b16 %v269
    %v1695 = vunpack.c.h.b16 %v269
    %v1696 = vunpack.c.l.b16 %v270
    %v1697 = vunpack.c.h.b16 %v270
    %v1698 = vunpack.c.l.b16 %v271
    %v1699 = vunpack.c.h.b16 %v271
    %v1700 = vunpack.c.l.b16 %v272
    %v1701 = vunpack.c.h.b16 %v272
    %v1702 = vunpack.c.l.b16 %v273
    %v1703 = vunpack.c.h.b16 %v273
    %v1704 = vunpack.c.l.b16 %v274
    %v1705 = vunpack.c.h.b16 %v274
    %v1706 = vunpack.c.l.b16 %v275
    %v1707 = vunpack.c.h.b16 %v275
    %v1708 = vunpack.c.l.b16 %v276
    %v1709 = vunpack.c.h.b16 %v276
    %v1710 = vunpack.c.l.b16 %v277
    %v1711 = vunpack.c.h.b16 %v277
    %v1712 = vunpack.c.l.b16 %v278
    %v1713 = vunpack.c.h.b16 %v278
    %v1714 = vunpack.c.l.b16 %v279
    %v1715 = vunpack.c.h.b16 %v279
    %v1716 = vunpack.c.l.b16 %v280
    %v1717 = vunpack.c.h.b16 %v280
    %v1718 = vunpack.c.l.b16 %v281
    %v1719 = vunpack.c.h.b16 %v281
    %v1720 = vunpack.c.l.b16 %v282
    %v1721 = vunpack.c.h.b16 %v282
    %v1722 = vunpack.c.l.b16 %v283
    %v1723 = vunpack.c.h.b16 %v283
    %v1724 = vunpack.c.l.b16 %v284
    %v1725 = vunpack.c.h.b16 %v284
    %v1726 = vunpack.c.l.b16 %v285
    %v1727 = vunpack.c.h.b16 %v285
    %v1728 = vunpack.c.l.b16 %v286
    %v1729 = vunpack.c.h.b16 %v286
    %v1730 = vunpack.c.l.b16 %v287
    %v1731 = vunpack.c.h.b16 %v287
    %v1732 = vunpack.c.l.b16 %v288
    %v1733 = vunpack.c.h.b16 %v288
    %v1734 = vunpack.c.l.b16 %v289
    %v1735 = vunpack.c.h.b16 %v289
    %v1736 = vunpack.c.l.b16 %v290
    %v1737 = vunpack.c.h.b16 %v290
    %v1738 = vunpack.c.l.b16 %v291
    %v1739 = vunpack.c.h.b16 %v291
    %v1740 = vunpack.c.l.b16 %v292
    %v1741 = vunpack.c.h.b16 %v292
    %v1742 = vunpack.c.l.b16 %v293
    %v1743 = vunpack.c.h.b16 %v293
    %v1744 = vunpack.c.l.b16 %v294
    %v1745 = vunpack.c.h.b16 %v294
    %v1746 = vunpack.c.l.b16 %v295
    %v1747 = vunpack.c.h.b16 %v295
    %v1748 = vunpack.c.l.b16 %v296
    %v1749 = vunpack.c.h.b16 %v296
    %v1750 = vunpack.c.l.b16 %v297
    %v1751 = vunpack.c.h.b16 %v297
    %v1752 = vunpack.c.l.b16 %v298
    %v1753 = vunpack.c.h.b16 %v298
    %v1754 = vunpack.c.l.b16 %v299
    %v1755 = vunpack.c.h.b16 %v299
    %v1756 = vunpack.c.l.b16 %v300
    %v1757 = vunpack.c.h.b16 %v300
    %v1758 = vunpack.c.l.b16 %v301
    %v1759 = vunpack.c.h.b16 %v301
    %v1760 = vunpack.c.l.b16 %v302
    %v1761 = vunpack.c.h.b16 %v302
    %v1762 = vunpack.c.l.b16 %v303
    %v1763 = vunpack.c.h.b16 %v303
    %v1764 = vunpack.c.l.b16 %v304
    %v1765 = vunpack.c.h.b16 %v304
    %v1766 = vunpack.c.l.b16 %v305
    %v1767 = vunpack.c.h.b16 %v305
    %v1768 = vunpack.c.l.b16 %v306
    %v1769 = vunpack.c.h.b16 %v306
    %v1770 = vunpack.c.l.b16 %v307
    %v1771 = vunpack.c.h.b16 %v307
    %v1772 = vunpack.c.l.b16 %v308
    %v1773 = vunpack.c.h.b16 %v308
    %v1774 = vunpack.c.l.b16 %v309
    %v1775 = vunpack.c.h.b16 %v309
    %v1776 = vunpack.c.l.b16 %v310
    %v1777 = vunpack.c.h.b16 %v310
    %v1778 = vunpack.c.l.b16 %v311
    %v1779 = vunpack.c.h.b16 %v311
    %v1780 = vunpack.c.l.b16 %v312
    %v1781 = vunpack.c.h.b16 %v312
    %v1782 = vunpack.c.l.b16 %v313
    %v1783 = vunpack.c.h.b16 %v313
    %v1784 = vunpack.c.l.b16 %v314
    %v1785 = vunpack.c.h.b16 %v314
    %v1786 = vunpack.c.l.b16 %v315
    %v1787 = vunpack.c.h.b16 %v315
    %v1788 = vunpack.c.l.b16 %v316
    %v1789 = vunpack.c.h.b16 %v316
    %v1790 = vunpack.c.l.b16 %v317
    %v1791 = vunpack.c.h.b16 %v317
    %v1792 = vunpack.c.l.b16 %v318
    %v1793 = vunpack.c.h.b16 %v318
    %v1794 = vunpack.c.l.b16 %v319
    %v1795 = vunpack.c.h.b16 %v319
    %v1796 = vunpack.c.l.b16 %v320
    %v1797 = vunpack.c.h.b16 %v320
    %v1798 = vunpack.c.l.b16 %v321
    %v1799 = vunpack.c.h.b16 %v321
    %v1800 = vunpack.c.l.b16 %v322
    %v1801 = vunpack.c.h.b16 %v322
    %v1802 = vunpack.c.l.b16 %v323
    %v1803 = vunpack.c.h.b16 %v323
    %v1804 = vunpack.c.l.b16 %v324
    %v1805 = vunpack.c.h.b16 %v324
    %v1806 = vunpack.c.l.b16 %v325
    %v1807 = vunpack.c.h.b16 %v325
    %v1808 = vunpack.c.l.b16 %v326
    %v1809 = vunpack.c.h.b16 %v326
    %v1810 = vunpack.c.l.b16 %v327
    %v1811 = vunpack.c.h.b16 %v327
    %v1812 = vunpack.c.l.b16 %v328
    %v1813 = vunpack.c.h.b16 %v328
    %v1814 = vunpack.c.l.b16 %v329
    %v1815 = vunpack.c.h.b16 %v329
    %v1816 = vunpack.c.l.b16 %v330
    %v1817 = vunpack.c.h.b16 %v330
    %v1818 = vunpack.c.l.b16 %v331
    %v1819 = vunpack.c.h.b16 %v331
    %v1820 = vunpack.c.l.b16 %v332
    %v1821 = vunpack.c.h.b16 %v332
    %v1822 = vunpack.c.l.b16 %v333
    %v1823 = vunpack.c.h.b16 %v333
    %v1824 = vunpack.c.l.b16 %v334
    %v1825 = vunpack.c.h.b16 %v334
    %v1826 = vunpack.c.l.b16 %v335
    %v1827 = vunpack.c.h.b16 %v335
    %v1828 = vunpack.c.l.b16 %v336
    %v1829 = vunpack.c.h.b16 %v336
    %v1830 = vunpack.c.l.b16 %v337
    %v1831 = vunpack.c.h.b16 %v337
    %v1832 = vunpack.c.l.b16 %v338
    %v1833 = vunpack.c.h.b16 %v338
    %v1834 = vunpack.c.l.b16 %v339
    %v1835 = vunpack.c.h.b16 %v339
    %v1836 = vunpack.c.l.b16 %v340
    %v1837 = vunpack.c.h.b16 %v340
    %v1838 = vunpack.c.l.b16 %v341
    %v1839 = vunpack.c.h.b16 %v341
    %v1840 = vunpack.c.l.b16 %v342
    %v1841 = vunpack.c.h.b16 %v342
    %v1842 = vunpack.c.l.b16 %v343
    %v1843 = vunpack.c.h.b16 %v343
    %v1844 = vunpack.c.l.b16 %v344
    %v1845 = vunpack.c.h.b16 %v344
    %v1846 = vunpack.c.l.b16 %v345
    %v1847 = vunpack.c.h.b16 %v345
    %v1848 = vunpack.c.l.b16 %v346
    %v1849 = vunpack.c.h.b16 %v346
    %v1850 = vunpack.c.l.b16 %v347
    %v1851 = vunpack.c.h.b16 %v347
    %v1852 = vunpack.c.l.b16 %v348
    %v1853 = vunpack.c.h.b16 %v348
    %v1854 = vunpack.c.l.b16 %v349
    %v1855 = vunpack.c.h.b16 %v349
    %v1856 = vunpack.c.l.b16 %v350
    %v1857 = vunpack.c.h.b16 %v350
    %v1858 = vunpack.c.l.b16 %v351
    %v1859 = vunpack.c.h.b16 %v351
    %v1860 = vunpack.c.l.b16 %v352
    %v1861 = vunpack.c.h.b16 %v352
    %v1862 = vunpack.c.l.b16 %v353
    %v1863 = vunpack.c.h.b16 %v353
    %v1864 = vunpack.c.l.b16 %v354
    %v1865 = vunpack.c.h.b16 %v354
    %v1866 = vunpack.c.l.b16 %v355
    %v1867 = vunpack.c.h.b16 %v355
    %v1868 = vunpack.c.l.b16 %v356
    %v1869 = vunpack.c.h.b16 %v356
    %v1870 = vunpack.c.l.b16 %v357
    %v1871 = vunpack.c.h.b16 %v357
    %v1872 = vunpack.c.l.b16 %v358
    %v1873 = vunpack.c.h.b16 %v358
    %v1874 = vunpack.c.l.b16 %v359
    %v1875 = vunpack.c.h.b16 %v359
    %v1876 = vunpack.c.l.b16 %v360
    %v1877 = vunpack.c.h.b16 %v360
    %v1878 = vunpack.c.l.b16 %v361
    %v1879 = vunpack.c.h.b16 %v361
    %v1880 = vunpack.c.l.b16 %v362
    %v1881 = vunpack.c.h.b16 %v362
    %v1882 = vunpack.c.l.b16 %v363
    %v1883 = vunpack.c.h.b16 %v363
    %v1884 = vunpack.c.l.b16 %v364
    %v1885 = vunpack.c.h.b16 %v364
    %v1886 = vunpack.c.l.b16 %v365
    %v1887 = vunpack.c.h.b16 %v365
    %v1888 = vunpack.c.l.b16 %v366
    %v1889 = vunpack.c.h.b16 %v366
    %v1890 = vunpack.c.l.b16 %v367
    %v1891 = vunpack.c.h.b16 %v367
    %v1892 = vunpack.c.l.b16 %v368
    %v1893 = vunpack.c.h.b16 %v368
    %v1894 = vunpack.c.l.b16 %v369
    %v1895 = vunpack.c.h.b16 %v369
    %v1896 = vunpack.c.l.b16 %v370
    %v1897 = vunpack.c.h.b16 %v370
    %v1898 = vunpack.c.l.b16 %v371
    %v1899 = vunpack.c.h.b16 %v371
    %v1900 = vunpack.c.l.b16 %v372
    %v1901 = vunpack.c.h.b16 %v372
    %v1902 = vunpack.c.l.b16 %v373
    %v1903 = vunpack.c.h.b16 %v373
    %v1904 = vunpack.c.l.b16 %v374
    %v1905 = vunpack.c.h.b16 %v374
    %v1906 = vunpack.c.l.b16 %v375
    %v1907 = vunpack.c.h.b16 %v375
    %v1908 = vunpack.c.l.b16 %v376
    %v1909 = vunpack.c.h.b16 %v376
    %v1910 = vunpack.c.l.b16 %v377
    %v1911 = vunpack.c.h.b16 %v377
    %v1912 = vunpack.c.l.b16 %v378
    %v1913 = vunpack.c.h.b16 %v378
    %v1914 = vunpack.c.l.b16 %v379
    %v1915 = vunpack.c.h.b16 %v379
    %v1916 = vunpack.c.l.b16 %v380
    %v1917 = vunpack.c.h.b16 %v380
    %v1918 = vunpack.c.l.b16 %v381
    %v1919 = vunpack.c.h.b16 %v381
    %v1920 = vunpack.c.l.b16 %v382
    %v1921 = vunpack.c.h.b16 %v382
    %v1922 = vunpack.c.l.b16 %v383
    %v1923 = vunpack.c.h.b16 %v383
    %v1924 = vunpack.c.l.b16 %v384
    %v1925 = vunpack.c.h.b16 %v384
    %v1926 = vunpack.c.l.b16 %v385
    %v1927 = vunpack.c.h.b16 %v385
    %v1928 = vunpack.c.l.b16 %v386
    %v1929 = vunpack.c.h.b16 %v386
    %v1930 = vunpack.c.l.b16 %v387
    %v1931 = vunpack.c.h.b16 %v387
    %v1932 = vunpack.c.l.b16 %v388
    %v1933 = vunpack.c.h.b16 %v388
    %v1934 = vunpack.c.l.b16 %v389
    %v1935 = vunpack.c.h.b16 %v389
    %v1936 = vunpack.c.l.b16 %v390
    %v1937 = vunpack.c.h.b16 %v390
    %v1938 = vunpack.c.l.b16 %v391
    %v1939 = vunpack.c.h.b16 %v391
    %v1940 = vunpack.c.l.b16 %v392
    %v1941 = vunpack.c.h.b16 %v392
    %v1942 = vunpack.c.l.b16 %v393
    %v1943 = vunpack.c.h.b16 %v393
    %v1944 = vunpack.c.l.b16 %v394
    %v1945 = vunpack.c.h.b16 %v394
    %v1946 = vunpack.c.l.b16 %v395
    %v1947 = vunpack.c.h.b16 %v395
    %v1948 = vunpack.c.l.b16 %v396
    %v1949 = vunpack.c.h.b16 %v396
    %v1950 = vunpack.c.l.b16 %v397
    %v1951 = vunpack.c.h.b16 %v397
    %v1952 = vunpack.c.l.b16 %v398
    %v1953 = vunpack.c.h.b16 %v398
    %v1954 = vunpack.c.l.b16 %v399
    %v1955 = vunpack.c.h.b16 %v399
    %v1956 = vunpack.c.l.b16 %v400
    %v1957 = vunpack.c.h.b16 %v400
    %v1958 = vunpack.c.l.b16 %v401
    %v1959 = vunpack.c.h.b16 %v401
    %v1960 = vunpack.c.l.b16 %v402
    %v1961 = vunpack.c.h.b16 %v402
    %v1962 = vunpack.c.l.b16 %v403
    %v1963 = vunpack.c.h.b16 %v403
    %v1964 = vunpack.c.l.b16 %v404
    %v1965 = vunpack.c.h.b16 %v404
    %v1966 = vunpack.c.l.b16 %v405
    %v1967 = vunpack.c.h.b16 %v405
    %v1968 = vunpack.c.l.b16 %v406
    %v1969 = vunpack.c.h.b16 %v406
    %v1970 = vunpack.c.l.b16 %v407
    %v1971 = vunpack.c.h.b16 %v407
    %v1972 = vunpack.c.l.b16 %v408
    %v1973 = vunpack.c.h.b16 %v408
    %v1974 = vunpack.c.l.b16 %v409
    %v1975 = vunpack.c.h.b16 %v409
    %v1976 = vunpack.c.l.b16 %v410
    %v1977 = vunpack.c.h.b16 %v410
    %v1978 = vunpack.c.l.b16 %v411
    %v1979 = vunpack.c.h.b16 %v411
    %v1980 = vunpack.c.l.b16 %v412
    %v1981 = vunpack.c.h.b16 %v412
    %v1982 = vunpack.c.l.b16 %v413
    %v1983 = vunpack.c.h.b16 %v413
    %v1984 = vunpack.c.l.b16 %v414
    %v1985 = vunpack.c.h.b16 %v414
    %v1986 = vunpack.c.l.b16 %v415
    %v1987 = vunpack.c.h.b16 %v415
    %v1988 = vunpack.c.l.b16 %v416
    %v1989 = vunpack.c.h.b16 %v416
    %v1990 = vunpack.c.l.b16 %v417
    %v1991 = vunpack.c.h.b16 %v417
    %v1992 = vunpack.c.l.b16 %v418
    %v1993 = vunpack.c.h.b16 %v418
    %v1994 = vunpack.c.l.b16 %v419
    %v1995 = vunpack.c.h.b16 %v419
    %v1996 = vunpack.c.l.b16 %v420
    %v1997 = vunpack.c.h.b16 %v420
    %v1998 = vunpack.c.l.b16 %v421
    %v1999 = vunpack.c.h.b16 %v421
    %v2000 = vunpack.c.l.b16 %v422
    %v2001 = vunpack.c.h.b16 %v422
    %v2002 = vunpack.c.l.b16 %v423
    %v2003 = vunpack.c.h.b16 %v423
    %v2004 = vunpack.c.l.b16 %v424
    %v2005 = vunpack.c.h.b16 %v424
    %v2006 = vunpack.c.l.b16 %v425
    %v2007 = vunpack.c.h.b16 %v425
    %v2008 = vunpack.c.l.b16 %v426
    %v2009 = vunpack.c.h.b16 %v426
    %v2010 = vunpack.c.l.b16 %v427
    %v2011 = vunpack.c.h.b16 %v427
    %v2012 = vunpack.c.l.b16 %v428
    %v2013 = vunpack.c.h.b16 %v428
    %v2014 = vunpack.c.l.b16 %v429
    %v2015 = vunpack.c.h.b16 %v429
    %v2016 = vunpack.c.l.b16 %v430
    %v2017 = vunpack.c.h.b16 %v430
    %v2018 = vunpack.c.l.b16 %v431
    %v2019 = vunpack.c.h.b16 %v431
    %v2020 = vunpack.c.l.b16 %v432
    %v2021 = vunpack.c.h.b16 %v432
    %v2022 = vunpack.c.l.b16 %v433
    %v2023 = vunpack.c.h.b16 %v433
    %v2024 = vunpack.c.l.b16 %v434
    %v2025 = vunpack.c.h.b16 %v434
    %v2026 = vunpack.c.l.b16 %v435
    %v2027 = vunpack.c.h.b16 %v435
    %v2028 = vunpack.c.l.b16 %v436
    %v2029 = vunpack.c.h.b16 %v436
    %v2030 = vunpack.c.l.b16 %v437
    %v2031 = vunpack.c.h.b16 %v437
    %v2032 = vunpack.c.l.b16 %v438
    %v2033 = vunpack.c.h.b16 %v438
    %v2034 = vunpack.c.l.b16 %v439
    %v2035 = vunpack.c.h.b16 %v439
    %v2036 = vunpack.c.l.b16 %v440
    %v2037 = vunpack.c.h.b16 %v440
    %v2038 = vunpack.c.l.b16 %v441
    %v2039 = vunpack.c.h.b16 %v441
    %v2040 = vunpack.c.l.b16 %v442
    %v2041 = vunpack.c.h.b16 %v442
    %v2042 = vunpack.c.l.b16 %v443
    %v2043 = vunpack.c.h.b16 %v443
    %v2044 = vunpack.c.l.b16 %v444
    %v2045 = vunpack.c.h.b16 %v444
    %v2046 = vunpack.c.l.b16 %v445
    %v2047 = vunpack.c.h.b16 %v445
    %v2048 = vunpack.c.l.b16 %v446
    %v2049 = vunpack.c.h.b16 %v446
    %v2050 = vunpack.c.l.b16 %v447
    %v2051 = vunpack.c.h.b16 %v447
    %v2052 = vunpack.c.l.b16 %v448
    %v2053 = vunpack.c.h.b16 %v448
    %v2054 = vunpack.c.l.b16 %v449
    %v2055 = vunpack.c.h.b16 %v449
    %v2056 = vunpack.c.l.b16 %v450
    %v2057 = vunpack.c.h.b16 %v450
    %v2058 = vunpack.c.l.b16 %v451
    %v2059 = vunpack.c.h.b16 %v451
    %v2060 = vunpack.c.l.b16 %v452
    %v2061 = vunpack.c.h.b16 %v452
    %v2062 = vunpack.c.l.b16 %v453
    %v2063 = vunpack.c.h.b16 %v453
    %v2064 = vunpack.c.l.b16 %v454
    %v2065 = vunpack.c.h.b16 %v454
    %v2066 = vunpack.c.l.b16 %v455
    %v2067 = vunpack.c.h.b16 %v455
    %v2068 = vunpack.c.l.b16 %v456
    %v2069 = vunpack.c.h.b16 %v456
    %v2070 = vunpack.c.l.b16 %v457
    %v2071 = vunpack.c.h.b16 %v457
    %v2072 = vunpack.c.l.b16 %v458
    %v2073 = vunpack.c.h.b16 %v458
    %v2074 = vunpack.c.l.b16 %v459
    %v2075 = vunpack.c.h.b16 %v459
    %v2076 = vunpack.c.l.b16 %v460
    %v2077 = vunpack.c.h.b16 %v460
    %v2078 = vunpack.c.l.b16 %v461
    %v2079 = vunpack.c.h.b16 %v461
    %v2080 = vunpack.c.l.b16 %v462
    %v2081 = vunpack.c.h.b16 %v462
    %v2082 = vunpack.c.l.b16 %v463
    %v2083 = vunpack.c.h.b16 %v463
    %v2084 = vunpack.c.l.b16 %v464
    %v2085 = vunpack.c.h.b16 %v464
    %v2086 = vunpack.c.l.b16 %v465
    %v2087 = vunpack.c.h.b16 %v465
    %v2088 = vunpack.c.l.b16 %v466
    %v2089 = vunpack.c.h.b16 %v466
    %v2090 = vunpack.c.l.b16 %v467
    %v2091 = vunpack.c.h.b16 %v467
    %v2092 = vunpack.c.l.b16 %v468
    %v2093 = vunpack.c.h.b16 %v468
    %v2094 = vunpack.c.l.b16 %v469
    %v2095 = vunpack.c.h.b16 %v469
    %v2096 = vunpack.c.l.b16 %v470
    %v2097 = vunpack.c.h.b16 %v470
    %v2098 = vunpack.c.l.b16 %v471
    %v2099 = vunpack.c.h.b16 %v471
    %v2100 = vunpack.c.l.b16 %v472
    %v2101 = vunpack.c.h.b16 %v472
    %v2102 = vunpack.c.l.b16 %v473
    %v2103 = vunpack.c.h.b16 %v473
    %v2104 = vunpack.c.l.b16 %v474
    %v2105 = vunpack.c.h.b16 %v474
    %v2106 = vunpack.c.l.b16 %v475
    %v2107 = vunpack.c.h.b16 %v475
    %v2108 = vunpack.c.l.b16 %v476
    %v2109 = vunpack.c.h.b16 %v476
    %v2110 = vunpack.c.l.b16 %v477
    %v2111 = vunpack.c.h.b16 %v477
    %v2112 = vunpack.c.l.b16 %v478
    %v2113 = vunpack.c.h.b16 %v478
    %v2114 = vunpack.c.l.b16 %v479
    %v2115 = vunpack.c.h.b16 %v479
    %v2116 = vunpack.c.l.b16 %v480
    %v2117 = vunpack.c.h.b16 %v480
    %v2118 = vunpack.c.l.b16 %v481
    %v2119 = vunpack.c.h.b16 %v481
    %v2120 = vunpack.c.l.b16 %v482
    %v2121 = vunpack.c.h.b16 %v482
    %v2122 = vunpack.c.l.b16 %v483
    %v2123 = vunpack.c.h.b16 %v483
    %v2124 = vunpack.c.l.b16 %v484
    %v2125 = vunpack.c.h.b16 %v484
    %v2126 = vunpack.c.l.b16 %v485
    %v2127 = vunpack.c.h.b16 %v485
    %v2128 = vunpack.c.l.b16 %v486
    %v2129 = vunpack.c.h.b16 %v486
    %v2130 = vunpack.c.l.b16 %v487
    %v2131 = vunpack.c.h.b16 %v487
    %v2132 = vunpack.c.l.b16 %v488
    %v2133 = vunpack.c.h.b16 %v488
    %v2134 = vunpack.c.l.b16 %v489
    %v2135 = vunpack.c.h.b16 %v489
    %v2136 = vunpack.c.l.b16 %v490
    %v2137 = vunpack.c.h.b16 %v490
    %v2138 = vunpack.c.l.b16 %v491
    %v2139 = vunpack.c.h.b16 %v491
    %v2140 = vunpack.c.l.b16 %v492
    %v2141 = vunpack.c.h.b16 %v492
    %v2142 = vunpack.c.l.b16 %v493
    %v2143 = vunpack.c.h.b16 %v493
    %v2144 = vunpack.c.l.b16 %v494
    %v2145 = vunpack.c.h.b16 %v494
    %v2146 = vunpack.c.l.b16 %v495
    %v2147 = vunpack.c.h.b16 %v495
    %v2148 = vunpack.c.l.b16 %v496
    %v2149 = vunpack.c.h.b16 %v496
    %v2150 = vunpack.c.l.b16 %v497
    %v2151 = vunpack.c.h.b16 %v497
    %v2152 = vunpack.c.l.b16 %v498
    %v2153 = vunpack.c.h.b16 %v498
    %v2154 = vunpack.c.l.b16 %v499
    %v2155 = vunpack.c.h.b16 %v499
    %v2156 = vunpack.c.l.b16 %v500
    %v2157 = vunpack.c.h.b16 %v500
    %v2158 = vunpack.c.l.b16 %v501
    %v2159 = vunpack.c.h.b16 %v501
    %v2160 = vunpack.c.l.b16 %v502
    %v2161 = vunpack.c.h.b16 %v502
    %v2162 = vunpack.c.l.b16 %v503
    %v2163 = vunpack.c.h.b16 %v503
    %v2164 = vunpack.c.l.b16 %v504
    %v2165 = vunpack.c.h.b16 %v504
    %v2166 = vunpack.c.l.b16 %v505
    %v2167 = vunpack.c.h.b16 %v505
    %v2168 = vunpack.c.l.b16 %v506
    %v2169 = vunpack.c.h.b16 %v506
    %v2170 = vunpack.c.l.b16 %v507
    %v2171 = vunpack.c.h.b16 %v507
    %v2172 = vunpack.c.l.b16 %v508
    %v2173 = vunpack.c.h.b16 %v508
    %v2174 = vunpack.c.l.b16 %v509
    %v2175 = vunpack.c.h.b16 %v509
    %v2176 = vunpack.c.l.b16 %v510
    %v2177 = vunpack.c.h.b16 %v510
    %v2178 = vunpack.c.l.b16 %v511
    %v2179 = vunpack.c.h.b16 %v511
    %v2180 = vunpack.c.l.b16 %v512
    %v2181 = vunpack.c.h.b16 %v512
    %v2182 = vunpack.c.l.b16 %v513
    %v2183 = vunpack.c.h.b16 %v513
    %v2184 = vunpack.c.l.b16 %v514
    %v2185 = vunpack.c.h.b16 %v514
    %v2186 = vunpack.c.l.b16 %v515
    %v2187 = vunpack.c.h.b16 %v515
    %v2188 = vunpack.c.l.b16 %v516
    %v2189 = vunpack.c.h.b16 %v516
    %v2190 = vunpack.c.l.b16 %v517
    %v2191 = vunpack.c.h.b16 %v517
    %v2192 = vunpack.c.l.b16 %v518
    %v2193 = vunpack.c.h.b16 %v518
    %v2194 = vunpack.c.l.b16 %v519
    %v2195 = vunpack.c.h.b16 %v519
    %v2196 = vunpack.c.l.b16 %v520
    %v2197 = vunpack.c.h.b16 %v520
    %v2198 = vunpack.c.l.b16 %v521
    %v2199 = vunpack.c.h.b16 %v521
    %v2200 = vunpack.c.l.b16 %v522
    %v2201 = vunpack.c.h.b16 %v522
    %v2202 = vunpack.c.l.b16 %v523
    %v2203 = vunpack.c.h.b16 %v523
    %v2204 = vunpack.c.l.b16 %v524
    %v2205 = vunpack.c.h.b16 %v524
    %v2206 = vunpack.c.l.b16 %v525
    %v2207 = vunpack.c.h.b16 %v525
    %v2208 = vunpack.c.l.b16 %v526
    %v2209 = vunpack.c.h.b16 %v526
    %v2210 = vunpack.c.l.b16 %v527
    %v2211 = vunpack.c.h.b16 %v527
    %v2212 = vunpack.c.l.b16 %v528
    %v2213 = vunpack.c.h.b16 %v528
    %v2214 = vunpack.c.l.b16 %v529
    %v2215 = vunpack.c.h.b16 %v529
    %v2216 = vunpack.c.l.b16 %v530
    %v2217 = vunpack.c.h.b16 %v530
    %v2218 = vunpack.c.l.b16 %v531
    %v2219 = vunpack.c.h.b16 %v531
    %v2220 = vunpack.c.l.b16 %v532
    %v2221 = vunpack.c.h.b16 %v532
    %v2222 = vunpack.c.l.b16 %v533
    %v2223 = vunpack.c.h.b16 %v533
    %v2224 = vunpack.c.l.b16 %v534
    %v2225 = vunpack.c.h.b16 %v534
    %v2226 = vunpack.c.l.b16 %v535
    %v2227 = vunpack.c.h.b16 %v535
    %v2228 = vunpack.c.l.b16 %v536
    %v2229 = vunpack.c.h.b16 %v536
    %v2230 = vunpack.c.l.b16 %v537
    %v2231 = vunpack.c.h.b16 %v537
    %v2232 = vunpack.c.l.b16 %v538
    %v2233 = vunpack.c.h.b16 %v538
    %v2234 = vunpack.c.l.b16 %v539
    %v2235 = vunpack.c.h.b16 %v539
    %v2236 = vunpack.c.l.b16 %v540
    %v2237 = vunpack.c.h.b16 %v540
    %v2238 = vunpack.c.l.b16 %v541
    %v2239 = vunpack.c.h.b16 %v541
    %v2240 = vunpack.c.l.b16 %v542
    %v2241 = vunpack.c.h.b16 %v542
    %v2242 = vunpack.c.l.b16 %v543
    %v2243 = vunpack.c.h.b16 %v543
    %v2244 = vunpack.c.l.b16 %v544
    %v2245 = vunpack.c.h.b16 %v544
    %v2246 = vunpack.c.l.b16 %v545
    %v2247 = vunpack.c.h.b16 %v545
    %v2248 = vunpack.c.l.b16 %v546
    %v2249 = vunpack.c.h.b16 %v546
    %v2250 = vunpack.c.l.b16 %v547
    %v2251 = vunpack.c.h.b16 %v547
    %v2252 = vunpack.c.l.b16 %v548
    %v2253 = vunpack.c.h.b16 %v548
    %v2254 = vunpack.c.l.b16 %v549
    %v2255 = vunpack.c.h.b16 %v549
    %v2256 = vunpack.c.l.b16 %v550
    %v2257 = vunpack.c.h.b16 %v550
    %v2258 = vunpack.c.l.b16 %v551
    %v2259 = vunpack.c.h.b16 %v551
    %v2260 = vunpack.c.l.b16 %v552
    %v2261 = vunpack.c.h.b16 %v552
    %v2262 = vunpack.c.l.b16 %v553
    %v2263 = vunpack.c.h.b16 %v553
    %v2264 = vunpack.c.l.b16 %v554
    %v2265 = vunpack.c.h.b16 %v554
    %v2266 = vunpack.c.l.b16 %v555
    %v2267 = vunpack.c.h.b16 %v555
    %v2268 = vunpack.c.l.b16 %v556
    %v2269 = vunpack.c.h.b16 %v556
    %v2270 = vunpack.c.l.b16 %v557
    %v2271 = vunpack.c.h.b16 %v557
    %v2272 = vunpack.c.l.b16 %v558
    %v2273 = vunpack.c.h.b16 %v558
    %v2274 = vunpack.c.l.b16 %v559
    %v2275 = vunpack.c.h.b16 %v559
    %v2276 = vunpack.c.l.b16 %v560
    %v2277 = vunpack.c.h.b16 %v560
    %v2278 = vunpack.c.l.b16 %v561
    %v2279 = vunpack.c.h.b16 %v561
    %v2280 = vunpack.c.l.b16 %v562
    %v2281 = vunpack.c.h.b16 %v562
    %v2282 = vunpack.c.l.b16 %v563
    %v2283 = vunpack.c.h.b16 %v563
    %v2284 = vunpack.c.l.b16 %v564
    %v2285 = vunpack.c.h.b16 %v564
    %v2286 = vunpack.c.l.b16 %v565
    %v2287 = vunpack.c.h.b16 %v565
    %v2288 = vunpack.c.l.b16 %v566
    %v2289 = vunpack.c.h.b16 %v566
    %v2290 = vunpack.c.l.b16 %v567
    %v2291 = vunpack.c.h.b16 %v567
    %v2292 = vunpack.c.l.b16 %v568
    %v2293 = vunpack.c.h.b16 %v568
    %v2294 = vunpack.c.l.b16 %v569
    %v2295 = vunpack.c.h.b16 %v569
    %v2296 = vunpack.c.l.b16 %v570
    %v2297 = vunpack.c.h.b16 %v570
    %v2298 = vunpack.c.l.b16 %v571
    %v2299 = vunpack.c.h.b16 %v571
    %v2300 = vunpack.c.l.b16 %v572
    %v2301 = vunpack.c.h.b16 %v572
    %v2302 = vunpack.c.l.b16 %v573
    %v2303 = vunpack.c.h.b16 %v573
    %v2304 = vunpack.c.l.b16 %v574
    %v2305 = vunpack.c.h.b16 %v574
    %v2306 = vunpack.c.l.b16 %v575
    %v2307 = vunpack.c.h.b16 %v575
    %v2308 = vunpack.c.l.b16 %v576
    %v2309 = vunpack.c.h.b16 %v576
    %v2310 = vunpack.c.l.b16 %v577
    %v2311 = vunpack.c.h.b16 %v577
    %v2312 = vunpack.c.l.b16 %v578
    %v2313 = vunpack.c.h.b16 %v578
    %v2314 = vunpack.c.l.b16 %v579
    %v2315 = vunpack.c.h.b16 %v579
    %v2316 = vunpack.c.l.b16 %v580
    %v2317 = vunpack.c.h.b16 %v580
    %v2318 = vunpack.c.l.b16 %v581
    %v2319 = vunpack.c.h.b16 %v581
    %v2320 = vunpack.c.l.b16 %v582
    %v2321 = vunpack.c.h.b16 %v582
    %v2322 = vunpack.c.l.b16 %v583
    %v2323 = vunpack.c.h.b16 %v583
    %v2324 = vunpack.c.l.b16 %v584
    %v2325 = vunpack.c.h.b16 %v584
    %v2326 = vunpack.c.l.b16 %v585
    %v2327 = vunpack.c.h.b16 %v585
    %v2328 = vunpack.c.l.b16 %v586
    %v2329 = vunpack.c.h.b16 %v586
    %v2330 = vunpack.c.l.b16 %v587
    %v2331 = vunpack.c.h.b16 %v587
    %v2332 = vunpack.c.l.b16 %v588
    %v2333 = vunpack.c.h.b16 %v588
    %v2334 = vunpack.c.l.b16 %v589
    %v2335 = vunpack.c.h.b16 %v589
    %v2336 = vunpack.c.l.b16 %v590
    %v2337 = vunpack.c.h.b16 %v590
    %v2338 = vunpack.c.l.b16 %v591
    %v2339 = vunpack.c.h.b16 %v591
    %v2340 = vunpack.c.l.b16 %v592
    %v2341 = vunpack.c.h.b16 %v592
    %v2342 = vunpack.c.l.b16 %v593
    %v2343 = vunpack.c.h.b16 %v593
    %v2344 = vunpack.c.l.b16 %v594
    %v2345 = vunpack.c.h.b16 %v594
    %v2346 = vunpack.c.l.b16 %v595
    %v2347 = vunpack.c.h.b16 %v595
    %v2348 = vunpack.c.l.b16 %v596
    %v2349 = vunpack.c.h.b16 %v596
    %v2350 = vunpack.c.l.b16 %v597
    %v2351 = vunpack.c.h.b16 %v597
    %v2352 = vunpack.c.l.b16 %v598
    %v2353 = vunpack.c.h.b16 %v598
    %v2354 = vunpack.c.l.b16 %v599
    %v2355 = vunpack.c.h.b16 %v599
    %v2356 = vunpack.c.l.b16 %v600
    %v2357 = vunpack.c.h.b16 %v600
    %v2358 = vunpack.c.l.b16 %v601
    %v2359 = vunpack.c.h.b16 %v601
    %v2360 = vunpack.c.l.b16 %v602
    %v2361 = vunpack.c.h.b16 %v602
    %v2362 = vunpack.c.l.b16 %v603
    %v2363 = vunpack.c.h.b16 %v603
    %v2364 = vunpack.c.l.b16 %v604
    %v2365 = vunpack.c.h.b16 %v604
    %v2366 = vunpack.c.l.b16 %v605
    %v2367 = vunpack.c.h.b16 %v605
    %v2368 = vunpack.c.l.b16 %v606
    %v2369 = vunpack.c.h.b16 %v606
    %v2370 = vunpack.c.l.b16 %v607
    %v2371 = vunpack.c.h.b16 %v607
    %v2372 = vunpack.c.l.b16 %v608
    %v2373 = vunpack.c.h.b16 %v608
    %v2374 = vunpack.c.l.b16 %v609
    %v2375 = vunpack.c.h.b16 %v609
    %v2376 = vunpack.c.l.b16 %v610
    %v2377 = vunpack.c.h.b16 %v610
    %v2378 = vunpack.c.l.b16 %v611
    %v2379 = vunpack.c.h.b16 %v611
    %v2380 = vunpack.c.l.b16 %v612
    %v2381 = vunpack.c.h.b16 %v612
    %v2382 = vunpack.c.l.b16 %v613
    %v2383 = vunpack.c.h.b16 %v613
    %v2384 = vunpack.c.l.b16 %v614
    %v2385 = vunpack.c.h.b16 %v614
    %v2386 = vunpack.c.l.b16 %v615
    %v2387 = vunpack.c.h.b16 %v615
    %v2388 = vunpack.c.l.b16 %v616
    %v2389 = vunpack.c.h.b16 %v616
    %v2390 = vunpack.c.l.b16 %v617
    %v2391 = vunpack.c.h.b16 %v617
    %v2392 = vunpack.c.l.b16 %v618
    %v2393 = vunpack.c.h.b16 %v618
    %v2394 = vunpack.c.l.b16 %v619
    %v2395 = vunpack.c.h.b16 %v619
    %v2396 = vunpack.c.l.b16 %v620
    %v2397 = vunpack.c.h.b16 %v620
    %v2398 = vunpack.c.l.b16 %v621
    %v2399 = vunpack.c.h.b16 %v621
    %v2400 = vunpack.c.l.b16 %v622
    %v2401 = vunpack.c.h.b16 %v622
    %v2402 = vunpack.c.l.b16 %v623
    %v2403 = vunpack.c.h.b16 %v623
    %v2404 = vunpack.c.l.b16 %v624
    %v2405 = vunpack.c.h.b16 %v624
    %v2406 = vunpack.c.l.b16 %v625
    %v2407 = vunpack.c.h.b16 %v625
    %v2408 = vunpack.c.l.b16 %v626
    %v2409 = vunpack.c.h.b16 %v626
    %v2410 = vpack.c.b16 %v1394, %v1386
    %v2411 = vpack.c.b16 %v1395, %v1387
    %v2412 = vpack.c.b16 %v1396, %v1388
    %v2413 = vpack.c.b16 %v1397, %v1389
    %v2414 = vpack.c.b16 %v1398, %v1390
    %v2415 = vpack.c.b16 %v1399, %v1391
    %v2416 = vpack.c.b16 %v1400, %v1392
    %v2417 = vpack.c.b16 %v1401, %v1393
    %v2418 = vpack.c.b16 %v1410, %v1402
    %v2419 = vpack.c.b16 %v1411, %v1403
    %v2420 = vpack.c.b16 %v1412, %v1404
    %v2421 = vpack.c.b16 %v1413, %v1405
    %v2422 = vpack.c.b16 %v1414, %v1406
    %v2423 = vpack.c.b16 %v1415, %v1407
    %v2424 = vpack.c.b16 %v1416, %v1408
    %v2425 = vpack.c.b16 %v1417, %v1409
    %v2426 = vpack.c.b16 %v1426, %v1418
    %v2427 = vpack.c.b16 %v1427, %v1419
    %v2428 = vpack.c.b16 %v1428, %v1420
    %v2429 = vpack.c.b16 %v1429, %v1421
    %v2430 = vpack.c.b16 %v1430, %v1422
    %v2431 = vpack.c.b16 %v1431, %v1423
    %v2432 = vpack.c.b16 %v1432, %v1424
    %v2433 = vpack.c.b16 %v1433, %v1425
    %v2434 = vpack.c.b16 %v1442, %v1434
    %v2435 = vpack.c.b16 %v1443, %v1435
    %v2436 = vpack.c.b16 %v1444, %v1436
    %v2437 = vpack.c.b16 %v1445, %v1437
    %v2438 = vpack.c.b16 %v1446, %v1438
    %v2439 = vpack.c.b16 %v1447, %v1439
    %v2440 = vpack.c.b16 %v1448, %v1440
    %v2441 = vpack.c.b16 %v1449, %v1441
    %v2442 = vpack.c.b16 %v1458, %v1450
    %v2443 = vpack.c.b16 %v1459, %v1451
    %v2444 = vpack.c.b16 %v1460, %v1452
    %v2445 = vpack.c.b16 %v1461, %v1453
    %v2446 = vpack.c.b16 %v1462, %v1454
    %v2447 = vpack.c.b16 %v1463, %v1455
    %v2448 = vpack.c.b16 %v1464, %v1456
    %v2449 = vpack.c.b16 %v1465, %v1457
    %v2450 = vpack.c.b16 %v1474, %v1466
    %v2451 = vpack.c.b16 %v1475, %v1467
    %v2452 = vpack.c.b16 %v1476, %v1468
    %v2453 = vpack.c.b16 %v1477, %v1469
    %v2454 = vpack.c.b16 %v1478, %v1470
    %v2455 = vpack.c.b16 %v1479, %v1471
    %v2456 = vpack.c.b16 %v1480, %v1472
    %v2457 = vpack.c.b16 %v1481, %v1473
    %v2458 = vpack.c.b16 %v1490, %v1482
    %v2459 = vpack.c.b16 %v1491, %v1483
    %v2460 = vpack.c.b16 %v1492, %v1484
    %v2461 = vpack.c.b16 %v1493, %v1485
    %v2462 = vpack.c.b16 %v1494, %v1486
    %v2463 = vpack.c.b16 %v1495, %v1487
    %v2464 = vpack.c.b16 %v1496, %v1488
    %v2465 = vpack.c.b16 %v1497, %v1489
    %v2466 = vpack.c.b16 %v1506, %v1498
    %v2467 = vpack.c.b16 %v1507, %v1499
    %v2468 = vpack.c.b16 %v1508, %v1500
    %v2469 = vpack.c.b16 %v1509, %v1501
    %v2470 = vpack.c.b16 %v1510, %v1502
    %v2471 = vpack.c.b16 %v1511, %v1503
    %v2472 = vpack.c.b16 %v1512, %v1504
    %v2473 = vpack.c.b16 %v1513, %v1505
    %v2474 = vpack.c.b16 %v1522, %v1514
    %v2475 = vpack.c.b16 %v1523, %v1515
    %v2476 = vpack.c.b16 %v1524, %v1516
    %v2477 = vpack.c.b16 %v1525, %v1517
    %v2478 = vpack.c.b16 %v1526, %v1518
    %v2479 = vpack.c.b16 %v1527, %v1519
    %v2480 = vpack.c.b16 %v1528, %v1520
    %v2481 = vpack.c.b16 %v1529, %v1521
    %v2482 = vpack.c.b16 %v1538, %v1530
    %v2483 = vpack.c.b16 %v1539, %v1531
    %v2484 = vpack.c.b16 %v1540, %v1532
    %v2485 = vpack.c.b16 %v1541, %v1533
    %v2486 = vpack.c.b16 %v1542, %v1534
    %v2487 = vpack.c.b16 %v1543, %v1535
    %v2488 = vpack.c.b16 %v1544, %v1536
    %v2489 = vpack.c.b16 %v1545, %v1537
    %v2490 = vpack.c.b16 %v1554, %v1546
    %v2491 = vpack.c.b16 %v1555, %v1547
    %v2492 = vpack.c.b16 %v1556, %v1548
    %v2493 = vpack.c.b16 %v1557, %v1549
    %v2494 = vpack.c.b16 %v1558, %v1550
    %v2495 = vpack.c.b16 %v1559, %v1551
    %v2496 = vpack.c.b16 %v1560, %v1552
    %v2497 = vpack.c.b16 %v1561, %v1553
    %v2498 = vpack.c.b16 %v1570, %v1562
    %v2499 = vpack.c.b16 %v1571, %v1563
    %v2500 = vpack.c.b16 %v1572, %v1564
    %v2501 = vpack.c.b16 %v1573, %v1565
    %v2502 = vpack.c.b16 %v1574, %v1566
    %v2503 = vpack.c.b16 %v1575, %v1567
    %v2504 = vpack.c.b16 %v1576, %v1568
    %v2505 = vpack.c.b16 %v1577, %v1569
    %v2506 = vpack.c.b16 %v1586, %v1578
    %v2507 = vpack.c.b16 %v1587, %v1579
    %v2508 = vpack.c.b16 %v1588, %v1580
    %v2509 = vpack.c.b16 %v1589, %v1581
    %v2510 = vpack.c.b16 %v1590, %v1582
    %v2511 = vpack.c.b16 %v1591, %v1583
    %v2512 = vpack.c.b16 %v1592, %v1584
    %v2513 = vpack.c.b16 %v1593, %v1585
    %v2514 = vpack.c.b16 %v1602, %v1594
    %v2515 = vpack.c.b16 %v1603, %v1595
    %v2516 = vpack.c.b16 %v1604, %v1596
    %v2517 = vpack.c.b16 %v1605, %v1597
    %v2518 = vpack.c.b16 %v1606, %v1598
    %v2519 = vpack.c.b16 %v1607, %v1599
    %v2520 = vpack.c.b16 %v1608, %v1600
    %v2521 = vpack.c.b16 %v1609, %v1601
    %v2522 = vpack.c.b16 %v1618, %v1610
    %v2523 = vpack.c.b16 %v1619, %v1611
    %v2524 = vpack.c.b16 %v1620, %v1612
    %v2525 = vpack.c.b16 %v1621, %v1613
    %v2526 = vpack.c.b16 %v1622, %v1614
    %v2527 = vpack.c.b16 %v1623, %v1615
    %v2528 = vpack.c.b16 %v1624, %v1616
    %v2529 = vpack.c.b16 %v1625, %v1617
    %v2530 = vpack.c.b16 %v1634, %v1626
    %v2531 = vpack.c.b16 %v1635, %v1627
    %v2532 = vpack.c.b16 %v1636, %v1628
    %v2533 = vpack.c.b16 %v1637, %v1629
    %v2534 = vpack.c.b16 %v1638, %v1630
    %v2535 = vpack.c.b16 %v1639, %v1631
    %v2536 = vpack.c.b16 %v1640, %v1632
    %v2537 = vpack.c.b16 %v1641, %v1633
    %v2538 = vpack.c.b16 %v1650, %v1642
    %v2539 = vpack.c.b16 %v1651, %v1643
    %v2540 = vpack.c.b16 %v1652, %v1644
    %v2541 = vpack.c.b16 %v1653, %v1645
    %v2542 = vpack.c.b16 %v1654, %v1646
    %v2543 = vpack.c.b16 %v1655, %v1647
    %v2544 = vpack.c.b16 %v1656, %v1648
    %v2545 = vpack.c.b16 %v1657, %v1649
    %v2546 = vpack.c.b16 %v1666, %v1658
    %v2547 = vpack.c.b16 %v1667, %v1659
    %v2548 = vpack.c.b16 %v1668, %v1660
    %v2549 = vpack.c.b16 %v1669, %v1661
    %v2550 = vpack.c.b16 %v1670, %v1662
    %v2551 = vpack.c.b16 %v1671, %v1663
    %v2552 = vpack.c.b16 %v1672, %v1664
    %v2553 = vpack.c.b16 %v1673, %v1665
    %v2554 = vpack.c.b16 %v1682, %v1674
    %v2555 = vpack.c.b16 %v1683, %v1675
    %v2556 = vpack.c.b16 %v1684, %v1676
    %v2557 = vpack.c.b16 %v1685, %v1677
    %v2558 = vpack.c.b16 %v1686, %v1678
    %v2559 = vpack.c.b16 %v1687, %v1679
    %v2560 = vpack.c.b16 %v1688, %v1680
    %v2561 = vpack.c.b16 %v1689, %v1681
    %v2562 = vpack.c.b16 %v1698, %v1690
    %v2563 = vpack.c.b16 %v1699, %v1691
    %v2564 = vpack.c.b16 %v1700, %v1692
    %v2565 = vpack.c.b16 %v1701, %v1693
    %v2566 = vpack.c.b16 %v1702, %v1694
    %v2567 = vpack.c.b16 %v1703, %v1695
    %v2568 = vpack.c.b16 %v1704, %v1696
    %v2569 = vpack.c.b16 %v1705, %v1697
    %v2570 = vpack.c.b16 %v1714, %v1706
    %v2571 = vpack.c.b16 %v1715, %v1707
    %v2572 = vpack.c.b16 %v1716, %v1708
    %v2573 = vpack.c.b16 %v1717, %v1709
    %v2574 = vpack.c.b16 %v1718, %v1710
    %v2575 = vpack.c.b16 %v1719, %v1711
    %v2576 = vpack.c.b16 %v1720, %v1712
    %v2577 = vpack.c.b16 %v1721, %v1713
    %v2578 = vpack.c.b16 %v1730, %v1722
    %v2579 = vpack.c.b16 %v1731, %v1723
    %v2580 = vpack.c.b16 %v1732, %v1724
    %v2581 = vpack.c.b16 %v1733, %v1725
    %v2582 = vpack.c.b16 %v1734, %v1726
    %v2583 = vpack.c.b16 %v1735, %v1727
    %v2584 = vpack.c.b16 %v1736, %v1728
    %v2585 = vpack.c.b16 %v1737, %v1729
    %v2586 = vpack.c.b16 %v1746, %v1738
    %v2587 = vpack.c.b16 %v1747, %v1739
    %v2588 = vpack.c.b16 %v1748, %v1740
    %v2589 = vpack.c.b16 %v1749, %v1741
    %v2590 = vpack.c.b16 %v1750, %v1742
    %v2591 = vpack.c.b16 %v1751, %v1743
    %v2592 = vpack.c.b16 %v1752, %v1744
    %v2593 = vpack.c.b16 %v1753, %v1745
    %v2594 = vpack.c.b16 %v1762, %v1754
    %v2595 = vpack.c.b16 %v1763, %v1755
    %v2596 = vpack.c.b16 %v1764, %v1756
    %v2597 = vpack.c.b16 %v1765, %v1757
    %v2598 = vpack.c.b16 %v1766, %v1758
    %v2599 = vpack.c.b16 %v1767, %v1759
    %v2600 = vpack.c.b16 %v1768, %v1760
    %v2601 = vpack.c.b16 %v1769, %v1761
    %v2602 = vpack.c.b16 %v1778, %v1770
    %v2603 = vpack.c.b16 %v1779, %v1771
    %v2604 = vpack.c.b16 %v1780, %v1772
    %v2605 = vpack.c.b16 %v1781, %v1773
    %v2606 = vpack.c.b16 %v1782, %v1774
    %v2607 = vpack.c.b16 %v1783, %v1775
    %v2608 = vpack.c.b16 %v1784, %v1776
    %v2609 = vpack.c.b16 %v1785, %v1777
    %v2610 = vpack.c.b16 %v1794, %v1786
    %v2611 = vpack.c.b16 %v1795, %v1787
    %v2612 = vpack.c.b16 %v1796, %v1788
    %v2613 = vpack.c.b16 %v1797, %v1789
    %v2614 = vpack.c.b16 %v1798, %v1790
    %v2615 = vpack.c.b16 %v1799, %v1791
    %v2616 = vpack.c.b16 %v1800, %v1792
    %v2617 = vpack.c.b16 %v1801, %v1793
    %v2618 = vpack.c.b16 %v1810, %v1802
    %v2619 = vpack.c.b16 %v1811, %v1803
    %v2620 = vpack.c.b16 %v1812, %v1804
    %v2621 = vpack.c.b16 %v1813, %v1805
    %v2622 = vpack.c.b16 %v1814, %v1806
    %v2623 = vpack.c.b16 %v1815, %v1807
    %v2624 = vpack.c.b16 %v1816, %v1808
    %v2625 = vpack.c.b16 %v1817, %v1809
    %v2626 = vpack.c.b16 %v1826, %v1818
    %v2627 = vpack.c.b16 %v1827, %v1819
    %v2628 = vpack.c.b16 %v1828, %v1820
    %v2629 = vpack.c.b16 %v1829, %v1821
    %v2630 = vpack.c.b16 %v1830, %v1822
    %v2631 = vpack.c.b16 %v1831, %v1823
    %v2632 = vpack.c.b16 %v1832, %v1824
    %v2633 = vpack.c.b16 %v1833, %v1825
    %v2634 = vpack.c.b16 %v1842, %v1834
    %v2635 = vpack.c.b16 %v1843, %v1835
    %v2636 = vpack.c.b16 %v1844, %v1836
    %v2637 = vpack.c.b16 %v1845, %v1837
    %v2638 = vpack.c.b16 %v1846, %v1838
    %v2639 = vpack.c.b16 %v1847, %v1839
    %v2640 = vpack.c.b16 %v1848, %v1840
    %v2641 = vpack.c.b16 %v1849, %v1841
    %v2642 = vpack.c.b16 %v1858, %v1850
    %v2643 = vpack.c.b16 %v1859, %v1851
    %v2644 = vpack.c.b16 %v1860, %v1852
    %v2645 = vpack.c.b16 %v1861, %v1853
    %v2646 = vpack.c.b16 %v1862, %v1854
    %v2647 = vpack.c.b16 %v1863, %v1855
    %v2648 = vpack.c.b16 %v1864, %v1856
    %v2649 = vpack.c.b16 %v1865, %v1857
    %v2650 = vpack.c.b16 %v1874, %v1866
    %v2651 = vpack.c.b16 %v1875, %v1867
    %v2652 = vpack.c.b16 %v1876, %v1868
    %v2653 = vpack.c.b16 %v1877, %v1869
    %v2654 = vpack.c.b16 %v1878, %v1870
    %v2655 = vpack.c.b16 %v1879, %v1871
    %v2656 = vpack.c.b16 %v1880, %v1872
    %v2657 = vpack.c.b16 %v1881, %v1873
    %v2658 = vpack.c.b16 %v1890, %v1882
    %v2659 = vpack.c.b16 %v1891, %v1883
    %v2660 = vpack.c.b16 %v1892, %v1884
    %v2661 = vpack.c.b16 %v1893, %v1885
    %v2662 = vpack.c.b16 %v1894, %v1886
    %v2663 = vpack.c.b16 %v1895, %v1887
    %v2664 = vpack.c.b16 %v1896, %v1888
    %v2665 = vpack.c.b16 %v1897, %v1889
    %v2666 = vpack.c.b16 %v1906, %v1898
    %v2667 = vpack.c.b16 %v1907, %v1899
    %v2668 = vpack.c.b16 %v1908, %v1900
    %v2669 = vpack.c.b16 %v1909, %v1901
    %v2670 = vpack.c.b16 %v1910, %v1902
    %v2671 = vpack.c.b16 %v1911, %v1903
    %v2672 = vpack.c.b16 %v1912, %v1904
    %v2673 = vpack.c.b16 %v1913, %v1905
    %v2674 = vpack.c.b16 %v1922, %v1914
    %v2675 = vpack.c.b16 %v1923, %v1915
    %v2676 = vpack.c.b16 %v1924, %v1916
    %v2677 = vpack.c.b16 %v1925, %v1917
    %v2678 = vpack.c.b16 %v1926, %v1918
    %v2679 = vpack.c.b16 %v1927, %v1919
    %v2680 = vpack.c.b16 %v1928, %v1920
    %v2681 = vpack.c.b16 %v1929, %v1921
    %v2682 = vpack.c.b16 %v1938, %v1930
    %v2683 = vpack.c.b16 %v1939, %v1931
    %v2684 = vpack.c.b16 %v1940, %v1932
    %v2685 = vpack.c.b16 %v1941, %v1933
    %v2686 = vpack.c.b16 %v1942, %v1934
    %v2687 = vpack.c.b16 %v1943, %v1935
    %v2688 = vpack.c.b16 %v1944, %v1936
    %v2689 = vpack.c.b16 %v1945, %v1937
    %v2690 = vpack.c.b16 %v1954, %v1946
    %v2691 = vpack.c.b16 %v1955, %v1947
    %v2692 = vpack.c.b16 %v1956, %v1948
    %v2693 = vpack.c.b16 %v1957, %v1949
    %v2694 = vpack.c.b16 %v1958, %v1950
    %v2695 = vpack.c.b16 %v1959, %v1951
    %v2696 = vpack.c.b16 %v1960, %v1952
    %v2697 = vpack.c.b16 %v1961, %v1953
    %v2698 = vpack.c.b16 %v1970, %v1962
    %v2699 = vpack.c.b16 %v1971, %v1963
    %v2700 = vpack.c.b16 %v1972, %v1964
    %v2701 = vpack.c.b16 %v1973, %v1965
    %v2702 = vpack.c.b16 %v1974, %v1966
    %v2703 = vpack.c.b16 %v1975, %v1967
    %v2704 = vpack.c.b16 %v1976, %v1968
    %v2705 = vpack.c.b16 %v1977, %v1969
    %v2706 = vpack.c.b16 %v1986, %v1978
    %v2707 = vpack.c.b16 %v1987, %v1979
    %v2708 = vpack.c.b16 %v1988, %v1980
    %v2709 = vpack.c.b16 %v1989, %v1981
    %v2710 = vpack.c.b16 %v1990, %v1982
    %v2711 = vpack.c.b16 %v1991, %v1983
    %v2712 = vpack.c.b16 %v1992, %v1984
    %v2713 = vpack.c.b16 %v1993, %v1985
    %v2714 = vpack.c.b16 %v2002, %v1994
    %v2715 = vpack.c.b16 %v2003, %v1995
    %v2716 = vpack.c.b16 %v2004, %v1996
    %v2717 = vpack.c.b16 %v2005, %v1997
    %v2718 = vpack.c.b16 %v2006, %v1998
    %v2719 = vpack.c.b16 %v2007, %v1999
    %v2720 = vpack.c.b16 %v2008, %v2000
    %v2721 = vpack.c.b16 %v2009, %v2001
    %v2722 = vpack.c.b16 %v2018, %v2010
    %v2723 = vpack.c.b16 %v2019, %v2011
    %v2724 = vpack.c.b16 %v2020, %v2012
    %v2725 = vpack.c.b16 %v2021, %v2013
    %v2726 = vpack.c.b16 %v2022, %v2014
    %v2727 = vpack.c.b16 %v2023, %v2015
    %v2728 = vpack.c.b16 %v2024, %v2016
    %v2729 = vpack.c.b16 %v2025, %v2017
    %v2730 = vpack.c.b16 %v2034, %v2026
    %v2731 = vpack.c.b16 %v2035, %v2027
    %v2732 = vpack.c.b16 %v2036, %v2028
    %v2733 = vpack.c.b16 %v2037, %v2029
    %v2734 = vpack.c.b16 %v2038, %v2030
    %v2735 = vpack.c.b16 %v2039, %v2031
    %v2736 = vpack.c.b16 %v2040, %v2032
    %v2737 = vpack.c.b16 %v2041, %v2033
    %v2738 = vpack.c.b16 %v2050, %v2042
    %v2739 = vpack.c.b16 %v2051, %v2043
    %v2740 = vpack.c.b16 %v2052, %v2044
    %v2741 = vpack.c.b16 %v2053, %v2045
    %v2742 = vpack.c.b16 %v2054, %v2046
    %v2743 = vpack.c.b16 %v2055, %v2047
    %v2744 = vpack.c.b16 %v2056, %v2048
    %v2745 = vpack.c.b16 %v2057, %v2049
    %v2746 = vpack.c.b16 %v2066, %v2058
    %v2747 = vpack.c.b16 %v2067, %v2059
    %v2748 = vpack.c.b16 %v2068, %v2060
    %v2749 = vpack.c.b16 %v2069, %v2061
    %v2750 = vpack.c.b16 %v2070, %v2062
    %v2751 = vpack.c.b16 %v2071, %v2063
    %v2752 = vpack.c.b16 %v2072, %v2064
    %v2753 = vpack.c.b16 %v2073, %v2065
    %v2754 = vpack.c.b16 %v2082, %v2074
    %v2755 = vpack.c.b16 %v2083, %v2075
    %v2756 = vpack.c.b16 %v2084, %v2076
    %v2757 = vpack.c.b16 %v2085, %v2077
    %v2758 = vpack.c.b16 %v2086, %v2078
    %v2759 = vpack.c.b16 %v2087, %v2079
    %v2760 = vpack.c.b16 %v2088, %v2080
    %v2761 = vpack.c.b16 %v2089, %v2081
    %v2762 = vpack.c.b16 %v2098, %v2090
    %v2763 = vpack.c.b16 %v2099, %v2091
    %v2764 = vpack.c.b16 %v2100, %v2092
    %v2765 = vpack.c.b16 %v2101, %v2093
    %v2766 = vpack.c.b16 %v2102, %v2094
    %v2767 = vpack.c.b16 %v2103, %v2095
    %v2768 = vpack.c.b16 %v2104, %v2096
    %v2769 = vpack.c.b16 %v2105, %v2097
    %v2770 = vpack.c.b16 %v2114, %v2106
    %v2771 = vpack.c.b16 %v2115, %v2107
    %v2772 = vpack.c.b16 %v2116, %v2108
    %v2773 = vpack.c.b16 %v2117, %v2109
    %v2774 = vpack.c.b16 %v2118, %v2110
    %v2775 = vpack.c.b16 %v2119, %v2111
    %v2776 = vpack.c.b16 %v2120, %v2112
    %v2777 = vpack.c.b16 %v2121, %v2113
    %v2778 = vpack.c.b16 %v2130, %v2122
    %v2779 = vpack.c.b16 %v2131, %v2123
    %v2780 = vpack.c.b16 %v2132, %v2124
    %v2781 = vpack.c.b16 %v2133, %v2125
    %v2782 = vpack.c.b16 %v2134, %v2126
    %v2783 = vpack.c.b16 %v2135, %v2127
    %v2784 = vpack.c.b16 %v2136, %v2128
    %v2785 = vpack.c.b16 %v2137, %v2129
    %v2786 = vpack.c.b16 %v2146, %v2138
    %v2787 = vpack.c.b16 %v2147, %v2139
    %v2788 = vpack.c.b16 %v2148, %v2140
    %v2789 = vpack.c.b16 %v2149, %v2141
    %v2790 = vpack.c.b16 %v2150, %v2142
    %v2791 = vpack.c.b16 %v2151, %v2143
    %v2792 = vpack.c.b16 %v2152, %v2144
    %v2793 = vpack.c.b16 %v2153, %v2145
    %v2794 = vpack.c.b16 %v2162, %v2154
    %v2795 = vpack.c.b16 %v2163, %v2155
    %v2796 = vpack.c.b16 %v2164, %v2156
    %v2797 = vpack.c.b16 %v2165, %v2157
    %v2798 = vpack.c.b16 %v2166, %v2158
    %v2799 = vpack.c.b16 %v2167, %v2159
    %v2800 = vpack.c.b16 %v2168, %v2160
    %v2801 = vpack.c.b16 %v2169, %v2161
    %v2802 = vpack.c.b16 %v2178, %v2170
    %v2803 = vpack.c.b16 %v2179, %v2171
    %v2804 = vpack.c.b16 %v2180, %v2172
    %v2805 = vpack.c.b16 %v2181, %v2173
    %v2806 = vpack.c.b16 %v2182, %v2174
    %v2807 = vpack.c.b16 %v2183, %v2175
    %v2808 = vpack.c.b16 %v2184, %v2176
    %v2809 = vpack.c.b16 %v2185, %v2177
    %v2810 = vpack.c.b16 %v2194, %v2186
    %v2811 = vpack.c.b16 %v2195, %v2187
    %v2812 = vpack.c.b16 %v2196, %v2188
    %v2813 = vpack.c.b16 %v2197, %v2189
    %v2814 = vpack.c.b16 %v2198, %v2190
    %v2815 = vpack.c.b16 %v2199, %v2191
    %v2816 = vpack.c.b16 %v2200, %v2192
    %v2817 = vpack.c.b16 %v2201, %v2193
    %v2818 = vpack.c.b16 %v2210, %v2202
    %v2819 = vpack.c.b16 %v2211, %v2203
    %v2820 = vpack.c.b16 %v2212, %v2204
    %v2821 = vpack.c.b16 %v2213, %v2205
    %v2822 = vpack.c.b16 %v2214, %v2206
    %v2823 = vpack.c.b16 %v2215, %v2207
    %v2824 = vpack.c.b16 %v2216, %v2208
    %v2825 = vpack.c.b16 %v2217, %v2209
    %v2826 = vpack.c.b16 %v2226, %v2218
    %v2827 = vpack.c.b16 %v2227, %v2219
    %v2828 = vpack.c.b16 %v2228, %v2220
    %v2829 = vpack.c.b16 %v2229, %v2221
    %v2830 = vpack.c.b16 %v2230, %v2222
    %v2831 = vpack.c.b16 %v2231, %v2223
    %v2832 = vpack.c.b16 %v2232, %v2224
    %v2833 = vpack.c.b16 %v2233, %v2225
    %v2834 = vpack.c.b16 %v2242, %v2234
    %v2835 = vpack.c.b16 %v2243, %v2235
    %v2836 = vpack.c.b16 %v2244, %v2236
    %v2837 = vpack.c.b16 %v2245, %v2237
    %v2838 = vpack.c.b16 %v2246, %v2238
    %v2839 = vpack.c.b16 %v2247, %v2239
    %v2840 = vpack.c.b16 %v2248, %v2240
    %v2841 = vpack.c.b16 %v2249, %v2241
    %v2842 = vpack.c.b16 %v2258, %v2250
    %v2843 = vpack.c.b16 %v2259, %v2251
    %v2844 = vpack.c.b16 %v2260, %v2252
    %v2845 = vpack.c.b16 %v2261, %v2253
    %v2846 = vpack.c.b16 %v2262, %v2254
    %v2847 = vpack.c.b16 %v2263, %v2255
    %v2848 = vpack.c.b16 %v2264, %v2256
    %v2849 = vpack.c.b16 %v2265, %v2257
    %v2850 = vpack.c.b16 %v2274, %v2266
    %v2851 = vpack.c.b16 %v2275, %v2267
    %v2852 = vpack.c.b16 %v2276, %v2268
    %v2853 = vpack.c.b16 %v2277, %v2269
    %v2854 = vpack.c.b16 %v2278, %v2270
    %v2855 = vpack.c.b16 %v2279, %v2271
    %v2856 = vpack.c.b16 %v2280, %v2272
    %v2857 = vpack.c.b16 %v2281, %v2273
    %v2858 = vpack.c.b16 %v2290, %v2282
    %v2859 = vpack.c.b16 %v2291, %v2283
    %v2860 = vpack.c.b16 %v2292, %v2284
    %v2861 = vpack.c.b16 %v2293, %v2285
    %v2862 = vpack.c.b16 %v2294, %v2286
    %v2863 = vpack.c.b16 %v2295, %v2287
    %v2864 = vpack.c.b16 %v2296, %v2288
    %v2865 = vpack.c.b16 %v2297, %v2289
    %v2866 = vpack.c.b16 %v2306, %v2298
    %v2867 = vpack.c.b16 %v2307, %v2299
    %v2868 = vpack.c.b16 %v2308, %v2300
    %v2869 = vpack.c.b16 %v2309, %v2301
    %v2870 = vpack.c.b16 %v2310, %v2302
    %v2871 = vpack.c.b16 %v2311, %v2303
    %v2872 = vpack.c.b16 %v2312, %v2304
    %v2873 = vpack.c.b16 %v2313, %v2305
    %v2874 = vpack.c.b16 %v2322, %v2314
    %v2875 = vpack.c.b16 %v2323, %v2315
    %v2876 = vpack.c.b16 %v2324, %v2316
    %v2877 = vpack.c.b16 %v2325, %v2317
    %v2878 = vpack.c.b16 %v2326, %v2318
    %v2879 = vpack.c.b16 %v2327, %v2319
    %v2880 = vpack.c.b16 %v2328, %v2320
    %v2881 = vpack.c.b16 %v2329, %v2321
    %v2882 = vpack.c.b16 %v2338, %v2330
    %v2883 = vpack.c.b16 %v2339, %v2331
    %v2884 = vpack.c.b16 %v2340, %v2332
    %v2885 = vpack.c.b16 %v2341, %v2333
    %v2886 = vpack.c.b16 %v2342, %v2334
    %v2887 = vpack.c.b16 %v2343, %v2335
    %v2888 = vpack.c.b16 %v2344, %v2336
    %v2889 = vpack.c.b16 %v2345, %v2337
    %v2890 = vpack.c.b16 %v2354, %v2346
    %v2891 = vpack.c.b16 %v2355, %v2347
    %v2892 = vpack.c.b16 %v2356, %v2348
    %v2893 = vpack.c.b16 %v2357, %v2349
    %v2894 = vpack.c.b16 %v2358, %v2350
    %v2895 = vpack.c.b16 %v2359, %v2351
    %v2896 = vpack.c.b16 %v2360, %v2352
    %v2897 = vpack.c.b16 %v2361, %v2353
    %v2898 = vpack.c.b16 %v2370, %v2362
    %v2899 = vpack.c.b16 %v2371, %v2363
    %v2900 = vpack.c.b16 %v2372, %v2364
    %v2901 = vpack.c.b16 %v2373, %v2365
    %v2902 = vpack.c.b16 %v2374, %v2366
    %v2903 = vpack.c.b16 %v2375, %v2367
    %v2904 = vpack.c.b16 %v2376, %v2368
    %v2905 = vpack.c.b16 %v2377, %v2369
    %v2906 = vpack.c.b16 %v2386, %v2378
    %v2907 = vpack.c.b16 %v2387, %v2379
    %v2908 = vpack.c.b16 %v2388, %v2380
    %v2909 = vpack.c.b16 %v2389, %v2381
    %v2910 = vpack.c.b16 %v2390, %v2382
    %v2911 = vpack.c.b16 %v2391, %v2383
    %v2912 = vpack.c.b16 %v2392, %v2384
    %v2913 = vpack.c.b16 %v2393, %v2385
    %v2914 = vpack.c.b16 %v2402, %v2394
    %v2915 = vpack.c.b16 %v2403, %v2395
    %v2916 = vpack.c.b16 %v2404, %v2396
    %v2917 = vpack.c.b16 %v2405, %v2397
    %v2918 = vpack.c.b16 %v2406, %v2398
    %v2919 = vpack.c.b16 %v2407, %v2399
    %v2920 = vpack.c.b16 %v2408, %v2400
    %v2921 = vpack.c.b16 %v2409, %v2401
    %3434 = vmatprep.subr.bf16.mxu0 %v2411
    %3435 = vmatpush1.bf16.msra.mxu0 %v2410
    %3436 = vmatprep.subr.bf16.mxu0 %v2419
    %3437 = vmatpush1.bf16.msra.mxu0 %v2418
    %3438 = vmatprep.subr.bf16.mxu0 %v2427
    %3439 = vmatpush1.bf16.msra.mxu0 %v2426
    %3440 = vmatprep.subr.bf16.mxu0 %v2435
    %3441 = vmatpush1.bf16.msra.mxu0 %v2434
    %3442 = vmatprep.subr.bf16.mxu0 %v2443
    %3443 = vmatpush1.bf16.msra.mxu0 %v2442
    %3444 = vmatprep.subr.bf16.mxu0 %v2451
    %3445 = vmatpush1.bf16.msra.mxu0 %v2450
    %3446 = vmatprep.subr.bf16.mxu0 %v2459
    %3447 = vmatpush1.bf16.msra.mxu0 %v2458
    %3448 = vmatprep.subr.bf16.mxu0 %v2467
    %3449 = vmatpush1.bf16.msra.mxu0 %v2466
    %3450 = vmatprep.subr.bf16.mxu0 %v2475
    %3451 = vmatpush1.bf16.msra.mxu0 %v2474
    %3452 = vmatprep.subr.bf16.mxu0 %v2483
    %3453 = vmatpush1.bf16.msra.mxu0 %v2482
    %3454 = vmatprep.subr.bf16.mxu0 %v2491
    %3455 = vmatpush1.bf16.msra.mxu0 %v2490
    %3456 = vmatprep.subr.bf16.mxu0 %v2499
    %3457 = vmatpush1.bf16.msra.mxu0 %v2498
    %3458 = vmatprep.subr.bf16.mxu0 %v2507
    %3459 = vmatpush1.bf16.msra.mxu0 %v2506
    %3460 = vmatprep.subr.bf16.mxu0 %v2515
    %3461 = vmatpush1.bf16.msra.mxu0 %v2514
    %3462 = vmatprep.subr.bf16.mxu0 %v2523
    %3463 = vmatpush1.bf16.msra.mxu0 %v2522
    %3464 = vmatprep.subr.bf16.mxu0 %v2531
    %3465 = vmatpush1.bf16.msra.mxu0 %v2530
    %3466 = vmatprep.mubr.bf16.mxu0 %v854
    %3467 = vmatmul.mubr.bf16.gmra.mrb[0].mxu0 %v840
    %v3468 = vpop.f32.mrb[0].mxu0
    %v3469 = vadd.f32 %v779, %v3468
    %v3470 = vpop.f32.mrb[0].mxu0
    %v3471 = vadd.f32 %v783, %v3470
    %v3472 = vpop.f32.mrb[0].mxu0
    %v3473 = vpop.f32.mrb[0].mxu0
    %3474 = vdwg.mxu0
    %3475 = vmatprep.subr.bf16.mxu0 %v2539
    %3476 = vmatpush1.bf16.msra.mxu0 %v2538
    %3477 = vmatprep.subr.bf16.mxu0 %v2547
    %3478 = vmatpush1.bf16.msra.mxu0 %v2546
    %3479 = vmatprep.subr.bf16.mxu0 %v2555
    %3480 = vmatpush1.bf16.msra.mxu0 %v2554
    %3481 = vmatprep.subr.bf16.mxu0 %v2563
    %3482 = vmatpush1.bf16.msra.mxu0 %v2562
    %3483 = vmatprep.subr.bf16.mxu0 %v2571
    %3484 = vmatpush1.bf16.msra.mxu0 %v2570
    %3485 = vmatprep.subr.bf16.mxu0 %v2579
    %3486 = vmatpush1.bf16.msra.mxu0 %v2578
    %3487 = vmatprep.subr.bf16.mxu0 %v2587
    %3488 = vmatpush1.bf16.msra.mxu0 %v2586
    %3489 = vmatprep.subr.bf16.mxu0 %v2595
    %3490 = vmatpush1.bf16.msra.mxu0 %v2594
    %3491 = vmatprep.subr.bf16.mxu0 %v2603
    %3492 = vmatpush1.bf16.msra.mxu0 %v2602
    %3493 = vmatprep.subr.bf16.mxu0 %v2611
    %3494 = vmatpush1.bf16.msra.mxu0 %v2610
    %3495 = vmatprep.subr.bf16.mxu0 %v2619
    %3496 = vmatpush1.bf16.msra.mxu0 %v2618
    %3497 = vmatprep.subr.bf16.mxu0 %v2627
    %3498 = vmatpush1.bf16.msra.mxu0 %v2626
    %3499 = vmatprep.subr.bf16.mxu0 %v2635
    %3500 = vmatpush1.bf16.msra.mxu0 %v2634
    %3501 = vmatprep.subr.bf16.mxu0 %v2643
    %3502 = vmatpush1.bf16.msra.mxu0 %v2642
    %3503 = vmatprep.subr.bf16.mxu0 %v2651
    %3504 = vmatpush1.bf16.msra.mxu0 %v2650
    %3505 = vmatprep.subr.bf16.mxu0 %v2659
    %3506 = vmatpush1.bf16.msra.mxu0 %v2658
    %3507 = vmatprep.mubr.bf16.mxu0 %v864
    %3508 = vmatmul.mubr.bf16.gmra.mrb[0].mxu0 %v862
    %v3509 = vpop.f32.mrb[0].mxu0
    %v3510 = vadd.f32 %v3469, %v3509
    %v3511 = vpop.f32.mrb[0].mxu0
    %v3512 = vadd.f32 %v3471, %v3511
    %v3513 = vpop.f32.mrb[0].mxu0
    %v3514 = vpop.f32.mrb[0].mxu0
    %3515 = vdwg.mxu0
    %3516 = vmatprep.subr.bf16.mxu0 %v2667
    %3517 = vmatpush1.bf16.msra.mxu0 %v2666
    %3518 = vmatprep.subr.bf16.mxu0 %v2675
    %3519 = vmatpush1.bf16.msra.mxu0 %v2674
    %3520 = vmatprep.subr.bf16.mxu0 %v2683
    %3521 = vmatpush1.bf16.msra.mxu0 %v2682
    %3522 = vmatprep.subr.bf16.mxu0 %v2691
    %3523 = vmatpush1.bf16.msra.mxu0 %v2690
    %3524 = vmatprep.subr.bf16.mxu0 %v2699
    %3525 = vmatpush1.bf16.msra.mxu0 %v2698
    %3526 = vmatprep.subr.bf16.mxu0 %v2707
    %3527 = vmatpush1.bf16.msra.mxu0 %v2706
    %3528 = vmatprep.subr.bf16.mxu0 %v2715
    %3529 = vmatpush1.bf16.msra.mxu0 %v2714
    %3530 = vmatprep.subr.bf16.mxu0 %v2723
    %3531 = vmatpush1.bf16.msra.mxu0 %v2722
    %3532 = vmatprep.subr.bf16.mxu0 %v2731
    %3533 = vmatpush1.bf16.msra.mxu0 %v2730
    %3534 = vmatprep.subr.bf16.mxu0 %v2739
    %3535 = vmatpush1.bf16.msra.mxu0 %v2738
    %3536 = vmatprep.subr.bf16.mxu0 %v2747
    %3537 = vmatpush1.bf16.msra.mxu0 %v2746
    %3538 = vmatprep.subr.bf16.mxu0 %v2755
    %3539 = vmatpush1.bf16.msra.mxu0 %v2754
    %3540 = vmatprep.subr.bf16.mxu0 %v2763
    %3541 = vmatpush1.bf16.msra.mxu0 %v2762
    %3542 = vmatprep.subr.bf16.mxu0 %v2771
    %3543 = vmatpush1.bf16.msra.mxu0 %v2770
    %3544 = vmatprep.subr.bf16.mxu0 %v2779
    %3545 = vmatpush1.bf16.msra.mxu0 %v2778
    %3546 = vmatprep.subr.bf16.mxu0 %v2787
    %3547 = vmatpush1.bf16.msra.mxu0 %v2786
    %3548 = vmatprep.mubr.bf16.mxu0 %v861
    %3549 = vmatmul.mubr.bf16.gmra.mrb[0].mxu0 %v847
    %v3550 = vpop.f32.mrb[0].mxu0
    %v3551 = vadd.f32 %v3510, %v3550
    %v3552 = vpop.f32.mrb[0].mxu0
    %v3553 = vadd.f32 %v3512, %v3552
    %v3554 = vpop.f32.mrb[0].mxu0
    %v3555 = vpop.f32.mrb[0].mxu0
    %3556 = vdwg.mxu0
    %3557 = vmatprep.subr.bf16.mxu0 %v2795
    %3558 = vmatpush1.bf16.msra.mxu0 %v2794
    %3559 = vmatprep.subr.bf16.mxu0 %v2803
    %3560 = vmatpush1.bf16.msra.mxu0 %v2802
    %3561 = vmatprep.subr.bf16.mxu0 %v2811
    %3562 = vmatpush1.bf16.msra.mxu0 %v2810
    %3563 = vmatprep.subr.bf16.mxu0 %v2819
    %3564 = vmatpush1.bf16.msra.mxu0 %v2818
    %3565 = vmatprep.subr.bf16.mxu0 %v2827
    %3566 = vmatpush1.bf16.msra.mxu0 %v2826
    %3567 = vmatprep.subr.bf16.mxu0 %v2835
    %3568 = vmatpush1.bf16.msra.mxu0 %v2834
    %3569 = vmatprep.subr.bf16.mxu0 %v2843
    %3570 = vmatpush1.bf16.msra.mxu0 %v2842
    %3571 = vmatprep.subr.bf16.mxu0 %v2851
    %3572 = vmatpush1.bf16.msra.mxu0 %v2850
    %3573 = vmatprep.subr.bf16.mxu0 %v2859
    %3574 = vmatpush1.bf16.msra.mxu0 %v2858
    %3575 = vmatprep.subr.bf16.mxu0 %v2867
    %3576 = vmatpush1.bf16.msra.mxu0 %v2866
    %3577 = vmatprep.subr.bf16.mxu0 %v2875
    %3578 = vmatpush1.bf16.msra.mxu0 %v2874
    %3579 = vmatprep.subr.bf16.mxu0 %v2883
    %3580 = vmatpush1.bf16.msra.mxu0 %v2882
    %3581 = vmatprep.subr.bf16.mxu0 %v2891
    %3582 = vmatpush1.bf16.msra.mxu0 %v2890
    %3583 = vmatprep.subr.bf16.mxu0 %v2899
    %3584 = vmatpush1.bf16.msra.mxu0 %v2898
    %3585 = vmatprep.subr.bf16.mxu0 %v2907
    %3586 = vmatpush1.bf16.msra.mxu0 %v2906
    %3587 = vmatprep.subr.bf16.mxu0 %v2915
    %3588 = vmatpush1.bf16.msra.mxu0 %v2914
    %3589 = vmatprep.mubr.bf16.mxu0 %v865
    %3590 = vmatmul.mubr.bf16.gmra.mrb[0].mxu0 %v863
    %v3591 = vpop.f32.mrb[0].mxu0
    %v3592 = vadd.f32 %v3551, %v3591
    %v3593 = vpop.f32.mrb[0].mxu0
    %v3594 = vadd.f32 %v3553, %v3593
    %v3595 = vpop.f32.mrb[0].mxu0
    %v3596 = vpop.f32.mrb[0].mxu0
    %3597 = vdwg.mxu0
    %3598 = vmatprep.subr.bf16.mxu0 %v2413
    %3599 = vmatpush1.bf16.msra.mxu0 %v2412
    %3600 = vmatprep.subr.bf16.mxu0 %v2421
    %3601 = vmatpush1.bf16.msra.mxu0 %v2420
    %3602 = vmatprep.subr.bf16.mxu0 %v2429
    %3603 = vmatpush1.bf16.msra.mxu0 %v2428
    %3604 = vmatprep.subr.bf16.mxu0 %v2437
    %3605 = vmatpush1.bf16.msra.mxu0 %v2436
    %3606 = vmatprep.subr.bf16.mxu0 %v2445
    %3607 = vmatpush1.bf16.msra.mxu0 %v2444
    %3608 = vmatprep.subr.bf16.mxu0 %v2453
    %3609 = vmatpush1.bf16.msra.mxu0 %v2452
    %3610 = vmatprep.subr.bf16.mxu0 %v2461
    %3611 = vmatpush1.bf16.msra.mxu0 %v2460
    %3612 = vmatprep.subr.bf16.mxu0 %v2469
    %3613 = vmatpush1.bf16.msra.mxu0 %v2468
    %3614 = vmatprep.subr.bf16.mxu0 %v2477
    %3615 = vmatpush1.bf16.msra.mxu0 %v2476
    %3616 = vmatprep.subr.bf16.mxu0 %v2485
    %3617 = vmatpush1.bf16.msra.mxu0 %v2484
    %3618 = vmatprep.subr.bf16.mxu0 %v2493
    %3619 = vmatpush1.bf16.msra.mxu0 %v2492
    %3620 = vmatprep.subr.bf16.mxu0 %v2501
    %3621 = vmatpush1.bf16.msra.mxu0 %v2500
    %3622 = vmatprep.subr.bf16.mxu0 %v2509
    %3623 = vmatpush1.bf16.msra.mxu0 %v2508
    %3624 = vmatprep.subr.bf16.mxu0 %v2517
    %3625 = vmatpush1.bf16.msra.mxu0 %v2516
    %3626 = vmatprep.subr.bf16.mxu0 %v2525
    %3627 = vmatpush1.bf16.msra.mxu0 %v2524
    %3628 = vmatprep.subr.bf16.mxu0 %v2533
    %3629 = vmatpush1.bf16.msra.mxu0 %v2532
    %3630 = vmatprep.mubr.bf16.mxu0 %v854
    %3631 = vmatmul.mubr.bf16.gmra.mrb[0].mxu0 %v840
    %v3632 = vpop.f32.mrb[0].mxu0
    %v3633 = vadd.f32 %v787, %v3632
    %v3634 = vpop.f32.mrb[0].mxu0
    %v3635 = vadd.f32 %v791, %v3634
    %v3636 = vpop.f32.mrb[0].mxu0
    %v3637 = vpop.f32.mrb[0].mxu0
    %3638 = vdwg.mxu0
    %3639 = vmatprep.subr.bf16.mxu0 %v2541
    %3640 = vmatpush1.bf16.msra.mxu0 %v2540
    %3641 = vmatprep.subr.bf16.mxu0 %v2549
    %3642 = vmatpush1.bf16.msra.mxu0 %v2548
    %3643 = vmatprep.subr.bf16.mxu0 %v2557
    %3644 = vmatpush1.bf16.msra.mxu0 %v2556
    %3645 = vmatprep.subr.bf16.mxu0 %v2565
    %3646 = vmatpush1.bf16.msra.mxu0 %v2564
    %3647 = vmatprep.subr.bf16.mxu0 %v2573
    %3648 = vmatpush1.bf16.msra.mxu0 %v2572
    %3649 = vmatprep.subr.bf16.mxu0 %v2581
    %3650 = vmatpush1.bf16.msra.mxu0 %v2580
    %3651 = vmatprep.subr.bf16.mxu0 %v2589
    %3652 = vmatpush1.bf16.msra.mxu0 %v2588
    %3653 = vmatprep.subr.bf16.mxu0 %v2597
    %3654 = vmatpush1.bf16.msra.mxu0 %v2596
    %3655 = vmatprep.subr.bf16.mxu0 %v2605
    %3656 = vmatpush1.bf16.msra.mxu0 %v2604
    %3657 = vmatprep.subr.bf16.mxu0 %v2613
    %3658 = vmatpush1.bf16.msra.mxu0 %v2612
    %3659 = vmatprep.subr.bf16.mxu0 %v2621
    %3660 = vmatpush1.bf16.msra.mxu0 %v2620
    %3661 = vmatprep.subr.bf16.mxu0 %v2629
    %3662 = vmatpush1.bf16.msra.mxu0 %v2628
    %3663 = vmatprep.subr.bf16.mxu0 %v2637
    %3664 = vmatpush1.bf16.msra.mxu0 %v2636
    %3665 = vmatprep.subr.bf16.mxu0 %v2645
    %3666 = vmatpush1.bf16.msra.mxu0 %v2644
    %3667 = vmatprep.subr.bf16.mxu0 %v2653
    %3668 = vmatpush1.bf16.msra.mxu0 %v2652
    %3669 = vmatprep.subr.bf16.mxu0 %v2661
    %3670 = vmatpush1.bf16.msra.mxu0 %v2660
    %3671 = vmatprep.mubr.bf16.mxu0 %v864
    %3672 = vmatmul.mubr.bf16.gmra.mrb[0].mxu0 %v862
    %v3673 = vpop.f32.mrb[0].mxu0
    %v3674 = vadd.f32 %v3633, %v3673
    %v3675 = vpop.f32.mrb[0].mxu0
    %v3676 = vadd.f32 %v3635, %v3675
    %v3677 = vpop.f32.mrb[0].mxu0
    %v3678 = vpop.f32.mrb[0].mxu0
    %3679 = vdwg.mxu0
    %3680 = vmatprep.subr.bf16.mxu0 %v2669
    %3681 = vmatpush1.bf16.msra.mxu0 %v2668
    %3682 = vmatprep.subr.bf16.mxu0 %v2677
    %3683 = vmatpush1.bf16.msra.mxu0 %v2676
    %3684 = vmatprep.subr.bf16.mxu0 %v2685
    %3685 = vmatpush1.bf16.msra.mxu0 %v2684
    %3686 = vmatprep.subr.bf16.mxu0 %v2693
    %3687 = vmatpush1.bf16.msra.mxu0 %v2692
    %3688 = vmatprep.subr.bf16.mxu0 %v2701
    %3689 = vmatpush1.bf16.msra.mxu0 %v2700
    %3690 = vmatprep.subr.bf16.mxu0 %v2709
    %3691 = vmatpush1.bf16.msra.mxu0 %v2708
    %3692 = vmatprep.subr.bf16.mxu0 %v2717
    %3693 = vmatpush1.bf16.msra.mxu0 %v2716
    %3694 = vmatprep.subr.bf16.mxu0 %v2725
    %3695 = vmatpush1.bf16.msra.mxu0 %v2724
    %3696 = vmatprep.subr.bf16.mxu0 %v2733
    %3697 = vmatpush1.bf16.msra.mxu0 %v2732
    %3698 = vmatprep.subr.bf16.mxu0 %v2741
    %3699 = vmatpush1.bf16.msra.mxu0 %v2740
    %3700 = vmatprep.subr.bf16.mxu0 %v2749
    %3701 = vmatpush1.bf16.msra.mxu0 %v2748
    %3702 = vmatprep.subr.bf16.mxu0 %v2757
    %3703 = vmatpush1.bf16.msra.mxu0 %v2756
    %3704 = vmatprep.subr.bf16.mxu0 %v2765
    %3705 = vmatpush1.bf16.msra.mxu0 %v2764
    %3706 = vmatprep.subr.bf16.mxu0 %v2773
    %3707 = vmatpush1.bf16.msra.mxu0 %v2772
    %3708 = vmatprep.subr.bf16.mxu0 %v2781
    %3709 = vmatpush1.bf16.msra.mxu0 %v2780
    %3710 = vmatprep.subr.bf16.mxu0 %v2789
    %3711 = vmatpush1.bf16.msra.mxu0 %v2788
    %3712 = vmatprep.mubr.bf16.mxu0 %v861
    %3713 = vmatmul.mubr.bf16.gmra.mrb[0].mxu0 %v847
    %v3714 = vpop.f32.mrb[0].mxu0
    %v3715 = vadd.f32 %v3674, %v3714
    %v3716 = vpop.f32.mrb[0].mxu0
    %v3717 = vadd.f32 %v3676, %v3716
    %v3718 = vpop.f32.mrb[0].mxu0
    %v3719 = vpop.f32.mrb[0].mxu0
    %3720 = vdwg.mxu0
    %3721 = vmatprep.subr.bf16.mxu0 %v2797
    %3722 = vmatpush1.bf16.msra.mxu0 %v2796
    %3723 = vmatprep.subr.bf16.mxu0 %v2805
    %3724 = vmatpush1.bf16.msra.mxu0 %v2804
    %3725 = vmatprep.subr.bf16.mxu0 %v2813
    %3726 = vmatpush1.bf16.msra.mxu0 %v2812
    %3727 = vmatprep.subr.bf16.mxu0 %v2821
    %3728 = vmatpush1.bf16.msra.mxu0 %v2820
    %3729 = vmatprep.subr.bf16.mxu0 %v2829
    %3730 = vmatpush1.bf16.msra.mxu0 %v2828
    %3731 = vmatprep.subr.bf16.mxu0 %v2837
    %3732 = vmatpush1.bf16.msra.mxu0 %v2836
    %3733 = vmatprep.subr.bf16.mxu0 %v2845
    %3734 = vmatpush1.bf16.msra.mxu0 %v2844
    %3735 = vmatprep.subr.bf16.mxu0 %v2853
    %3736 = vmatpush1.bf16.msra.mxu0 %v2852
    %3737 = vmatprep.subr.bf16.mxu0 %v2861
    %3738 = vmatpush1.bf16.msra.mxu0 %v2860
    %3739 = vmatprep.subr.bf16.mxu0 %v2869
    %3740 = vmatpush1.bf16.msra.mxu0 %v2868
    %3741 = vmatprep.subr.bf16.mxu0 %v2877
    %3742 = vmatpush1.bf16.msra.mxu0 %v2876
    %3743 = vmatprep.subr.bf16.mxu0 %v2885
    %3744 = vmatpush1.bf16.msra.mxu0 %v2884
    %3745 = vmatprep.subr.bf16.mxu0 %v2893
    %3746 = vmatpush1.bf16.msra.mxu0 %v2892
    %3747 = vmatprep.subr.bf16.mxu0 %v2901
    %3748 = vmatpush1.bf16.msra.mxu0 %v2900
    %3749 = vmatprep.subr.bf16.mxu0 %v2909
    %3750 = vmatpush1.bf16.msra.mxu0 %v2908
    %3751 = vmatprep.subr.bf16.mxu0 %v2917
    %3752 = vmatpush1.bf16.msra.mxu0 %v2916
    %3753 = vmatprep.mubr.bf16.mxu0 %v865
    %3754 = vmatmul.mubr.bf16.gmra.mrb[0].mxu0 %v863
    %v3755 = vpop.f32.mrb[0].mxu0
    %v3756 = vadd.f32 %v3715, %v3755
    %v3757 = vpop.f32.mrb[0].mxu0
    %v3758 = vadd.f32 %v3717, %v3757
    %v3759 = vpop.f32.mrb[0].mxu0
    %v3760 = vpop.f32.mrb[0].mxu0
    %3761 = vdwg.mxu0
    %3762 = vmatprep.subr.bf16.mxu0 %v2415
    %3763 = vmatpush1.bf16.msra.mxu0 %v2414
    %3764 = vmatprep.subr.bf16.mxu0 %v2423
    %3765 = vmatpush1.bf16.msra.mxu0 %v2422
    %3766 = vmatprep.subr.bf16.mxu0 %v2431
    %3767 = vmatpush1.bf16.msra.mxu0 %v2430
    %3768 = vmatprep.subr.bf16.mxu0 %v2439
    %3769 = vmatpush1.bf16.msra.mxu0 %v2438
    %3770 = vmatprep.subr.bf16.mxu0 %v2447
    %3771 = vmatpush1.bf16.msra.mxu0 %v2446
    %3772 = vmatprep.subr.bf16.mxu0 %v2455
    %3773 = vmatpush1.bf16.msra.mxu0 %v2454
    %3774 = vmatprep.subr.bf16.mxu0 %v2463
    %3775 = vmatpush1.bf16.msra.mxu0 %v2462
    %3776 = vmatprep.subr.bf16.mxu0 %v2471
    %3777 = vmatpush1.bf16.msra.mxu0 %v2470
    %3778 = vmatprep.subr.bf16.mxu0 %v2479
    %3779 = vmatpush1.bf16.msra.mxu0 %v2478
    %3780 = vmatprep.subr.bf16.mxu0 %v2487
    %3781 = vmatpush1.bf16.msra.mxu0 %v2486
    %3782 = vmatprep.subr.bf16.mxu0 %v2495
    %3783 = vmatpush1.bf16.msra.mxu0 %v2494
    %3784 = vmatprep.subr.bf16.mxu0 %v2503
    %3785 = vmatpush1.bf16.msra.mxu0 %v2502
    %3786 = vmatprep.subr.bf16.mxu0 %v2511
    %3787 = vmatpush1.bf16.msra.mxu0 %v2510
    %3788 = vmatprep.subr.bf16.mxu0 %v2519
    %3789 = vmatpush1.bf16.msra.mxu0 %v2518
    %3790 = vmatprep.subr.bf16.mxu0 %v2527
    %3791 = vmatpush1.bf16.msra.mxu0 %v2526
    %3792 = vmatprep.subr.bf16.mxu0 %v2535
    %3793 = vmatpush1.bf16.msra.mxu0 %v2534
    %3794 = vmatprep.mubr.bf16.mxu0 %v854
    %3795 = vmatmul.mubr.bf16.gmra.mrb[0].mxu0 %v840
    %v3796 = vpop.f32.mrb[0].mxu0
    %v3797 = vadd.f32 %v795, %v3796
    %v3798 = vpop.f32.mrb[0].mxu0
    %v3799 = vadd.f32 %v799, %v3798
    %v3800 = vpop.f32.mrb[0].mxu0
    %v3801 = vpop.f32.mrb[0].mxu0
    %3802 = vdwg.mxu0
    %3803 = vmatprep.subr.bf16.mxu0 %v2543
    %3804 = vmatpush1.bf16.msra.mxu0 %v2542
    %3805 = vmatprep.subr.bf16.mxu0 %v2551
    %3806 = vmatpush1.bf16.msra.mxu0 %v2550
    %3807 = vmatprep.subr.bf16.mxu0 %v2559
    %3808 = vmatpush1.bf16.msra.mxu0 %v2558
    %3809 = vmatprep.subr.bf16.mxu0 %v2567
    %3810 = vmatpush1.bf16.msra.mxu0 %v2566
    %3811 = vmatprep.subr.bf16.mxu0 %v2575
    %3812 = vmatpush1.bf16.msra.mxu0 %v2574
    %3813 = vmatprep.subr.bf16.mxu0 %v2583
    %3814 = vmatpush1.bf16.msra.mxu0 %v2582
    %3815 = vmatprep.subr.bf16.mxu0 %v2591
    %3816 = vmatpush1.bf16.msra.mxu0 %v2590
    %3817 = vmatprep.subr.bf16.mxu0 %v2599
    %3818 = vmatpush1.bf16.msra.mxu0 %v2598
    %3819 = vmatprep.subr.bf16.mxu0 %v2607
    %3820 = vmatpush1.bf16.msra.mxu0 %v2606
    %3821 = vmatprep.subr.bf16.mxu0 %v2615
    %3822 = vmatpush1.bf16.msra.mxu0 %v2614
    %3823 = vmatprep.subr.bf16.mxu0 %v2623
    %3824 = vmatpush1.bf16.msra.mxu0 %v2622
    %3825 = vmatprep.subr.bf16.mxu0 %v2631
    %3826 = vmatpush1.bf16.msra.mxu0 %v2630
    %3827 = vmatprep.subr.bf16.mxu0 %v2639
    %3828 = vmatpush1.bf16.msra.mxu0 %v2638
    %3829 = vmatprep.subr.bf16.mxu0 %v2647
    %3830 = vmatpush1.bf16.msra.mxu0 %v2646
    %3831 = vmatprep.subr.bf16.mxu0 %v2655
    %3832 = vmatpush1.bf16.msra.mxu0 %v2654
    %3833 = vmatprep.subr.bf16.mxu0 %v2663
    %3834 = vmatpush1.bf16.msra.mxu0 %v2662
    %3835 = vmatprep.mubr.bf16.mxu0 %v864
    %3836 = vmatmul.mubr.bf16.gmra.mrb[0].mxu0 %v862
    %v3837 = vpop.f32.mrb[0].mxu0
    %v3838 = vadd.f32 %v3797, %v3837
    %v3839 = vpop.f32.mrb[0].mxu0
    %v3840 = vadd.f32 %v3799, %v3839
    %v3841 = vpop.f32.mrb[0].mxu0
    %v3842 = vpop.f32.mrb[0].mxu0
    %3843 = vdwg.mxu0
    %3844 = vmatprep.subr.bf16.mxu0 %v2671
    %3845 = vmatpush1.bf16.msra.mxu0 %v2670
    %3846 = vmatprep.subr.bf16.mxu0 %v2679
    %3847 = vmatpush1.bf16.msra.mxu0 %v2678
    %3848 = vmatprep.subr.bf16.mxu0 %v2687
    %3849 = vmatpush1.bf16.msra.mxu0 %v2686
    %3850 = vmatprep.subr.bf16.mxu0 %v2695
    %3851 = vmatpush1.bf16.msra.mxu0 %v2694
    %3852 = vmatprep.subr.bf16.mxu0 %v2703
    %3853 = vmatpush1.bf16.msra.mxu0 %v2702
    %3854 = vmatprep.subr.bf16.mxu0 %v2711
    %3855 = vmatpush1.bf16.msra.mxu0 %v2710
    %3856 = vmatprep.subr.bf16.mxu0 %v2719
    %3857 = vmatpush1.bf16.msra.mxu0 %v2718
    %3858 = vmatprep.subr.bf16.mxu0 %v2727
    %3859 = vmatpush1.bf16.msra.mxu0 %v2726
    %3860 = vmatprep.subr.bf16.mxu0 %v2735
    %3861 = vmatpush1.bf16.msra.mxu0 %v2734
    %3862 = vmatprep.subr.bf16.mxu0 %v2743
    %3863 = vmatpush1.bf16.msra.mxu0 %v2742
    %3864 = vmatprep.subr.bf16.mxu0 %v2751
    %3865 = vmatpush1.bf16.msra.mxu0 %v2750
    %3866 = vmatprep.subr.bf16.mxu0 %v2759
    %3867 = vmatpush1.bf16.msra.mxu0 %v2758
    %3868 = vmatprep.subr.bf16.mxu0 %v2767
    %3869 = vmatpush1.bf16.msra.mxu0 %v2766
    %3870 = vmatprep.subr.bf16.mxu0 %v2775
    %3871 = vmatpush1.bf16.msra.mxu0 %v2774
    %3872 = vmatprep.subr.bf16.mxu0 %v2783
    %3873 = vmatpush1.bf16.msra.mxu0 %v2782
    %3874 = vmatprep.subr.bf16.mxu0 %v2791
    %3875 = vmatpush1.bf16.msra.mxu0 %v2790
    %3876 = vmatprep.mubr.bf16.mxu0 %v861
    %3877 = vmatmul.mubr.bf16.gmra.mrb[0].mxu0 %v847
    %v3878 = vpop.f32.mrb[0].mxu0
    %v3879 = vadd.f32 %v3838, %v3878
    %v3880 = vpop.f32.mrb[0].mxu0
    %v3881 = vadd.f32 %v3840, %v3880
    %v3882 = vpop.f32.mrb[0].mxu0
    %v3883 = vpop.f32.mrb[0].mxu0
    %3884 = vdwg.mxu0
    %3885 = vmatprep.subr.bf16.mxu0 %v2799
    %3886 = vmatpush1.bf16.msra.mxu0 %v2798
    %3887 = vmatprep.subr.bf16.mxu0 %v2807
    %3888 = vmatpush1.bf16.msra.mxu0 %v2806
    %3889 = vmatprep.subr.bf16.mxu0 %v2815
    %3890 = vmatpush1.bf16.msra.mxu0 %v2814
    %3891 = vmatprep.subr.bf16.mxu0 %v2823
    %3892 = vmatpush1.bf16.msra.mxu0 %v2822
    %3893 = vmatprep.subr.bf16.mxu0 %v2831
    %3894 = vmatpush1.bf16.msra.mxu0 %v2830
    %3895 = vmatprep.subr.bf16.mxu0 %v2839
    %3896 = vmatpush1.bf16.msra.mxu0 %v2838
    %3897 = vmatprep.subr.bf16.mxu0 %v2847
    %3898 = vmatpush1.bf16.msra.mxu0 %v2846
    %3899 = vmatprep.subr.bf16.mxu0 %v2855
    %3900 = vmatpush1.bf16.msra.mxu0 %v2854
    %3901 = vmatprep.subr.bf16.mxu0 %v2863
    %3902 = vmatpush1.bf16.msra.mxu0 %v2862
    %3903 = vmatprep.subr.bf16.mxu0 %v2871
    %3904 = vmatpush1.bf16.msra.mxu0 %v2870
    %3905 = vmatprep.subr.bf16.mxu0 %v2879
    %3906 = vmatpush1.bf16.msra.mxu0 %v2878
    %3907 = vmatprep.subr.bf16.mxu0 %v2887
    %3908 = vmatpush1.bf16.msra.mxu0 %v2886
    %3909 = vmatprep.subr.bf16.mxu0 %v2895
    %3910 = vmatpush1.bf16.msra.mxu0 %v2894
    %3911 = vmatprep.subr.bf16.mxu0 %v2903
    %3912 = vmatpush1.bf16.msra.mxu0 %v2902
    %3913 = vmatprep.subr.bf16.mxu0 %v2911
    %3914 = vmatpush1.bf16.msra.mxu0 %v2910
    %3915 = vmatprep.subr.bf16.mxu0 %v2919
    %3916 = vmatpush1.bf16.msra.mxu0 %v2918
    %3917 = vmatprep.mubr.bf16.mxu0 %v865
    %3918 = vmatmul.mubr.bf16.gmra.mrb[0].mxu0 %v863
    %v3919 = vpop.f32.mrb[0].mxu0
    %v3920 = vadd.f32 %v3879, %v3919
    %v3921 = vpop.f32.mrb[0].mxu0
    %v3922 = vadd.f32 %v3881, %v3921
    %v3923 = vpop.f32.mrb[0].mxu0
    %v3924 = vpop.f32.mrb[0].mxu0
    %3925 = vdwg.mxu0
    %3926 = vmatprep.subr.bf16.mxu0 %v2417
    %3927 = vmatpush1.bf16.msra.mxu0 %v2416
    %3928 = vmatprep.subr.bf16.mxu0 %v2425
    %3929 = vmatpush1.bf16.msra.mxu0 %v2424
    %3930 = vmatprep.subr.bf16.mxu0 %v2433
    %3931 = vmatpush1.bf16.msra.mxu0 %v2432
    %3932 = vmatprep.subr.bf16.mxu0 %v2441
    %3933 = vmatpush1.bf16.msra.mxu0 %v2440
    %3934 = vmatprep.subr.bf16.mxu0 %v2449
    %3935 = vmatpush1.bf16.msra.mxu0 %v2448
    %3936 = vmatprep.subr.bf16.mxu0 %v2457
    %3937 = vmatpush1.bf16.msra.mxu0 %v2456
    %3938 = vmatprep.subr.bf16.mxu0 %v2465
    %3939 = vmatpush1.bf16.msra.mxu0 %v2464
    %3940 = vmatprep.subr.bf16.mxu0 %v2473
    %3941 = vmatpush1.bf16.msra.mxu0 %v2472
    %3942 = vmatprep.subr.bf16.mxu0 %v2481
    %3943 = vmatpush1.bf16.msra.mxu0 %v2480
    %3944 = vmatprep.subr.bf16.mxu0 %v2489
    %3945 = vmatpush1.bf16.msra.mxu0 %v2488
    %3946 = vmatprep.subr.bf16.mxu0 %v2497
    %3947 = vmatpush1.bf16.msra.mxu0 %v2496
    %3948 = vmatprep.subr.bf16.mxu0 %v2505
    %3949 = vmatpush1.bf16.msra.mxu0 %v2504
    %3950 = vmatprep.subr.bf16.mxu0 %v2513
    %3951 = vmatpush1.bf16.msra.mxu0 %v2512
    %3952 = vmatprep.subr.bf16.mxu0 %v2521
    %3953 = vmatpush1.bf16.msra.mxu0 %v2520
    %3954 = vmatprep.subr.bf16.mxu0 %v2529
    %3955 = vmatpush1.bf16.msra.mxu0 %v2528
    %3956 = vmatprep.subr.bf16.mxu0 %v2537
    %3957 = vmatpush1.bf16.msra.mxu0 %v2536
    %3958 = vmatprep.mubr.bf16.mxu0 %v854
    %3959 = vmatmul.mubr.bf16.gmra.mrb[0].mxu0 %v840
    %v3960 = vpop.f32.mrb[0].mxu0
    %v3961 = vadd.f32 %v803, %v3960
    %v3962 = vpop.f32.mrb[0].mxu0
    %v3963 = vadd.f32 %v807, %v3962
    %v3964 = vpop.f32.mrb[0].mxu0
    %v3965 = vpop.f32.mrb[0].mxu0
    %3966 = vdwg.mxu0
    %3967 = vmatprep.subr.bf16.mxu0 %v2545
    %3968 = vmatpush1.bf16.msra.mxu0 %v2544
    %3969 = vmatprep.subr.bf16.mxu0 %v2553
    %3970 = vmatpush1.bf16.msra.mxu0 %v2552
    %3971 = vmatprep.subr.bf16.mxu0 %v2561
    %3972 = vmatpush1.bf16.msra.mxu0 %v2560
    %3973 = vmatprep.subr.bf16.mxu0 %v2569
    %3974 = vmatpush1.bf16.msra.mxu0 %v2568
    %3975 = vmatprep.subr.bf16.mxu0 %v2577
    %3976 = vmatpush1.bf16.msra.mxu0 %v2576
    %3977 = vmatprep.subr.bf16.mxu0 %v2585
    %3978 = vmatpush1.bf16.msra.mxu0 %v2584
    %3979 = vmatprep.subr.bf16.mxu0 %v2593
    %3980 = vmatpush1.bf16.msra.mxu0 %v2592
    %3981 = vmatprep.subr.bf16.mxu0 %v2601
    %3982 = vmatpush1.bf16.msra.mxu0 %v2600
    %3983 = vmatprep.subr.bf16.mxu0 %v2609
    %3984 = vmatpush1.bf16.msra.mxu0 %v2608
    %3985 = vmatprep.subr.bf16.mxu0 %v2617
    %3986 = vmatpush1.bf16.msra.mxu0 %v2616
    %3987 = vmatprep.subr.bf16.mxu0 %v2625
    %3988 = vmatpush1.bf16.msra.mxu0 %v2624
    %3989 = vmatprep.subr.bf16.mxu0 %v2633
    %3990 = vmatpush1.bf16.msra.mxu0 %v2632
    %3991 = vmatprep.subr.bf16.mxu0 %v2641
    %3992 = vmatpush1.bf16.msra.mxu0 %v2640
    %3993 = vmatprep.subr.bf16.mxu0 %v2649
    %3994 = vmatpush1.bf16.msra.mxu0 %v2648
    %3995 = vmatprep.subr.bf16.mxu0 %v2657
    %3996 = vmatpush1.bf16.msra.mxu0 %v2656
    %3997 = vmatprep.subr.bf16.mxu0 %v2665
    %3998 = vmatpush1.bf16.msra.mxu0 %v2664
    %3999 = vmatprep.mubr.bf16.mxu0 %v864
    %4000 = vmatmul.mubr.bf16.gmra.mrb[0].mxu0 %v862
    %v4001 = vpop.f32.mrb[0].mxu0
    %v4002 = vadd.f32 %v3961, %v4001
    %v4003 = vpop.f32.mrb[0].mxu0
    %v4004 = vadd.f32 %v3963, %v4003
    %v4005 = vpop.f32.mrb[0].mxu0
    %v4006 = vpop.f32.mrb[0].mxu0
    %4007 = vdwg.mxu0
    %4008 = vmatprep.subr.bf16.mxu0 %v2673
    %4009 = vmatpush1.bf16.msra.mxu0 %v2672
    %4010 = vmatprep.subr.bf16.mxu0 %v2681
    %4011 = vmatpush1.bf16.msra.mxu0 %v2680
    %4012 = vmatprep.subr.bf16.mxu0 %v2689
    %4013 = vmatpush1.bf16.msra.mxu0 %v2688
    %4014 = vmatprep.subr.bf16.mxu0 %v2697
    %4015 = vmatpush1.bf16.msra.mxu0 %v2696
    %4016 = vmatprep.subr.bf16.mxu0 %v2705
    %4017 = vmatpush1.bf16.msra.mxu0 %v2704
    %4018 = vmatprep.subr.bf16.mxu0 %v2713
    %4019 = vmatpush1.bf16.msra.mxu0 %v2712
    %4020 = vmatprep.subr.bf16.mxu0 %v2721
    %4021 = vmatpush1.bf16.msra.mxu0 %v2720
    %4022 = vmatprep.subr.bf16.mxu0 %v2729
    %4023 = vmatpush1.bf16.msra.mxu0 %v2728
    %4024 = vmatprep.subr.bf16.mxu0 %v2737
    %4025 = vmatpush1.bf16.msra.mxu0 %v2736
    %4026 = vmatprep.subr.bf16.mxu0 %v2745
    %4027 = vmatpush1.bf16.msra.mxu0 %v2744
    %4028 = vmatprep.subr.bf16.mxu0 %v2753
    %4029 = vmatpush1.bf16.msra.mxu0 %v2752
    %4030 = vmatprep.subr.bf16.mxu0 %v2761
    %4031 = vmatpush1.bf16.msra.mxu0 %v2760
    %4032 = vmatprep.subr.bf16.mxu0 %v2769
    %4033 = vmatpush1.bf16.msra.mxu0 %v2768
    %4034 = vmatprep.subr.bf16.mxu0 %v2777
    %4035 = vmatpush1.bf16.msra.mxu0 %v2776
    %4036 = vmatprep.subr.bf16.mxu0 %v2785
    %4037 = vmatpush1.bf16.msra.mxu0 %v2784
    %4038 = vmatprep.subr.bf16.mxu0 %v2793
    %4039 = vmatpush1.bf16.msra.mxu0 %v2792
    %4040 = vmatprep.mubr.bf16.mxu0 %v861
    %4041 = vmatmul.mubr.bf16.gmra.mrb[0].mxu0 %v847
    %v4042 = vpop.f32.mrb[0].mxu0
    %v4043 = vadd.f32 %v4002, %v4042
    %v4044 = vpop.f32.mrb[0].mxu0
    %v4045 = vadd.f32 %v4004, %v4044
    %v4046 = vpop.f32.mrb[0].mxu0
    %v4047 = vpop.f32.mrb[0].mxu0
    %4048 = vdwg.mxu0
    %4049 = vmatprep.subr.bf16.mxu0 %v2801
    %4050 = vmatpush1.bf16.msra.mxu0 %v2800
    %4051 = vmatprep.subr.bf16.mxu0 %v2809
    %4052 = vmatpush1.bf16.msra.mxu0 %v2808
    %4053 = vmatprep.subr.bf16.mxu0 %v2817
    %4054 = vmatpush1.bf16.msra.mxu0 %v2816
    %4055 = vmatprep.subr.bf16.mxu0 %v2825
    %4056 = vmatpush1.bf16.msra.mxu0 %v2824
    %4057 = vmatprep.subr.bf16.mxu0 %v2833
    %4058 = vmatpush1.bf16.msra.mxu0 %v2832
    %4059 = vmatprep.subr.bf16.mxu0 %v2841
    %4060 = vmatpush1.bf16.msra.mxu0 %v2840
    %4061 = vmatprep.subr.bf16.mxu0 %v2849
    %4062 = vmatpush1.bf16.msra.mxu0 %v2848
    %4063 = vmatprep.subr.bf16.mxu0 %v2857
    %4064 = vmatpush1.bf16.msra.mxu0 %v2856
    %4065 = vmatprep.subr.bf16.mxu0 %v2865
    %4066 = vmatpush1.bf16.msra.mxu0 %v2864
    %4067 = vmatprep.subr.bf16.mxu0 %v2873
    %4068 = vmatpush1.bf16.msra.mxu0 %v2872
    %4069 = vmatprep.subr.bf16.mxu0 %v2881
    %4070 = vmatpush1.bf16.msra.mxu0 %v2880
    %4071 = vmatprep.subr.bf16.mxu0 %v2889
    %4072 = vmatpush1.bf16.msra.mxu0 %v2888
    %4073 = vmatprep.subr.bf16.mxu0 %v2897
    %4074 = vmatpush1.bf16.msra.mxu0 %v2896
    %4075 = vmatprep.subr.bf16.mxu0 %v2905
    %4076 = vmatpush1.bf16.msra.mxu0 %v2904
    %4077 = vmatprep.subr.bf16.mxu0 %v2913
    %4078 = vmatpush1.bf16.msra.mxu0 %v2912
    %4079 = vmatprep.subr.bf16.mxu0 %v2921
    %4080 = vmatpush1.bf16.msra.mxu0 %v2920
    %4081 = vmatprep.mubr.bf16.mxu0 %v865
    %4082 = vmatmul.mubr.bf16.gmra.mrb[0].mxu0 %v863
    %v4083 = vpop.f32.mrb[0].mxu0
    %v4084 = vadd.f32 %v4043, %v4083
    %v4085 = vpop.f32.mrb[0].mxu0
    %v4086 = vadd.f32 %v4045, %v4085
    %v4087 = vpop.f32.mrb[0].mxu0
    %v4088 = vpop.f32.mrb[0].mxu0
    %4089 = vdwg.mxu0
    %v4090 = vmax.f32 %v3592, 0.0
    %v4091 = vmax.f32 %v3594, 0.0
    %v4092 = vmax.f32 %v3756, 0.0
    %v4093 = vmax.f32 %v3758, 0.0
    %v4094 = vmax.f32 %v3920, 0.0
    %v4095 = vmax.f32 %v3922, 0.0
    %v4096 = vmax.f32 %v4084, 0.0
    %v4097 = vmax.f32 %v4086, 0.0
    %v4098 = vpack.c.bf16 %v4090, %v4090
    %v4099 = vpack.c.bf16 %v4091, %v4091
    %v4100 = vpack.c.bf16 %v4092, %v4092
    %v4101 = vpack.c.bf16 %v4093, %v4093
    %v4102 = vpack.c.bf16 %v4094, %v4094
    %v4103 = vpack.c.bf16 %v4095, %v4095
    %v4104 = vpack.c.bf16 %v4096, %v4096
    %v4105 = vpack.c.bf16 %v4097, %v4097
    %v4107 = vlaneseq
    %v4108 = vshrl.u32 %v4107, 7
    %v4109 = vsub.s32 0, %v4108
    %v4110 = vrot.slane %v772, %v4109
    %v4240 = vunpack.c.l.b16 %v627
    %v4241 = vunpack.c.l.b16 %v628
    %v4242 = vunpack.c.l.b16 %v629
    %v4243 = vunpack.c.l.b16 %v630
    %v4244 = vunpack.c.l.b16 %v631
    %v4245 = vunpack.c.l.b16 %v632
    %v4246 = vunpack.c.l.b16 %v633
    %v4247 = vunpack.c.l.b16 %v634
    %v4248 = vunpack.c.l.b16 %v635
    %v4249 = vunpack.c.l.b16 %v636
    %v4250 = vunpack.c.l.b16 %v637
    %v4251 = vunpack.c.l.b16 %v638
    %v4252 = vunpack.c.l.b16 %v639
    %v4253 = vunpack.c.l.b16 %v640
    %v4254 = vunpack.c.l.b16 %v641
    %v4255 = vunpack.c.l.b16 %v642
    %v4256 = vunpack.c.l.b16 %v643
    %v4257 = vunpack.c.l.b16 %v644
    %v4258 = vunpack.c.l.b16 %v645
    %v4259 = vunpack.c.l.b16 %v646
    %v4260 = vunpack.c.l.b16 %v647
    %v4261 = vunpack.c.l.b16 %v648
    %v4262 = vunpack.c.l.b16 %v649
    %v4263 = vunpack.c.l.b16 %v650
    %v4264 = vunpack.c.l.b16 %v651
    %v4265 = vunpack.c.l.b16 %v652
    %v4266 = vunpack.c.l.b16 %v653
    %v4267 = vunpack.c.l.b16 %v654
    %v4268 = vunpack.c.l.b16 %v655
    %v4269 = vunpack.c.l.b16 %v656
    %v4270 = vunpack.c.l.b16 %v657
    %v4271 = vunpack.c.l.b16 %v658
    %v4272 = vunpack.c.l.b16 %v659
    %v4273 = vunpack.c.l.b16 %v660
    %v4274 = vunpack.c.l.b16 %v661
    %v4275 = vunpack.c.l.b16 %v662
    %v4276 = vunpack.c.l.b16 %v663
    %v4277 = vunpack.c.l.b16 %v664
    %v4278 = vunpack.c.l.b16 %v665
    %v4279 = vunpack.c.l.b16 %v666
    %v4280 = vunpack.c.l.b16 %v667
    %v4281 = vunpack.c.l.b16 %v668
    %v4282 = vunpack.c.l.b16 %v669
    %v4283 = vunpack.c.l.b16 %v670
    %v4284 = vunpack.c.l.b16 %v671
    %v4285 = vunpack.c.l.b16 %v672
    %v4286 = vunpack.c.l.b16 %v673
    %v4287 = vunpack.c.l.b16 %v674
    %v4288 = vunpack.c.l.b16 %v675
    %v4289 = vunpack.c.l.b16 %v676
    %v4290 = vunpack.c.l.b16 %v677
    %v4291 = vunpack.c.l.b16 %v678
    %v4292 = vunpack.c.l.b16 %v679
    %v4293 = vunpack.c.l.b16 %v680
    %v4294 = vunpack.c.l.b16 %v681
    %v4295 = vunpack.c.l.b16 %v682
    %v4296 = vunpack.c.l.b16 %v683
    %v4297 = vunpack.c.l.b16 %v684
    %v4298 = vunpack.c.l.b16 %v685
    %v4299 = vunpack.c.l.b16 %v686
    %v4300 = vunpack.c.l.b16 %v687
    %v4301 = vunpack.c.l.b16 %v688
    %v4302 = vunpack.c.l.b16 %v689
    %v4303 = vunpack.c.l.b16 %v690
    %v4304 = vunpack.c.l.b16 %v691
    %v4305 = vunpack.c.l.b16 %v692
    %v4306 = vunpack.c.l.b16 %v693
    %v4307 = vunpack.c.l.b16 %v694
    %v4308 = vunpack.c.l.b16 %v695
    %v4309 = vunpack.c.l.b16 %v696
    %v4310 = vunpack.c.l.b16 %v697
    %v4311 = vunpack.c.l.b16 %v698
    %v4312 = vunpack.c.l.b16 %v699
    %v4313 = vunpack.c.l.b16 %v700
    %v4314 = vunpack.c.l.b16 %v701
    %v4315 = vunpack.c.l.b16 %v702
    %v4316 = vunpack.c.l.b16 %v703
    %v4317 = vunpack.c.l.b16 %v704
    %v4318 = vunpack.c.l.b16 %v705
    %v4319 = vunpack.c.l.b16 %v706
    %v4320 = vunpack.c.l.b16 %v707
    %v4321 = vunpack.c.l.b16 %v708
    %v4322 = vunpack.c.l.b16 %v709
    %v4323 = vunpack.c.l.b16 %v710
    %v4324 = vunpack.c.l.b16 %v711
    %v4325 = vunpack.c.l.b16 %v712
    %v4326 = vunpack.c.l.b16 %v713
    %v4327 = vunpack.c.l.b16 %v714
    %v4328 = vunpack.c.l.b16 %v715
    %v4329 = vunpack.c.l.b16 %v716
    %v4330 = vunpack.c.l.b16 %v717
    %v4331 = vunpack.c.l.b16 %v718
    %v4332 = vunpack.c.l.b16 %v719
    %v4333 = vunpack.c.l.b16 %v720
    %v4334 = vunpack.c.l.b16 %v721
    %v4335 = vunpack.c.l.b16 %v722
    %v4336 = vunpack.c.l.b16 %v723
    %v4337 = vunpack.c.l.b16 %v724
    %v4338 = vunpack.c.l.b16 %v725
    %v4339 = vunpack.c.l.b16 %v726
    %v4340 = vunpack.c.l.b16 %v727
    %v4341 = vunpack.c.l.b16 %v728
    %v4342 = vunpack.c.l.b16 %v729
    %v4343 = vunpack.c.l.b16 %v730
    %v4344 = vunpack.c.l.b16 %v731
    %v4345 = vunpack.c.l.b16 %v732
    %v4346 = vunpack.c.l.b16 %v733
    %v4347 = vunpack.c.l.b16 %v734
    %v4348 = vunpack.c.l.b16 %v735
    %v4349 = vunpack.c.l.b16 %v736
    %v4350 = vunpack.c.l.b16 %v737
    %v4351 = vunpack.c.l.b16 %v738
    %v4352 = vunpack.c.l.b16 %v739
    %v4353 = vunpack.c.l.b16 %v740
    %v4354 = vunpack.c.l.b16 %v741
    %v4355 = vunpack.c.l.b16 %v742
    %v4356 = vunpack.c.l.b16 %v743
    %v4357 = vunpack.c.l.b16 %v744
    %v4358 = vunpack.c.l.b16 %v745
    %v4359 = vunpack.c.l.b16 %v746
    %v4360 = vunpack.c.l.b16 %v747
    %v4361 = vunpack.c.l.b16 %v748
    %v4362 = vunpack.c.l.b16 %v749
    %v4363 = vunpack.c.l.b16 %v750
    %v4364 = vunpack.c.l.b16 %v751
    %v4365 = vunpack.c.l.b16 %v752
    %v4366 = vunpack.c.l.b16 %v753
    %v4367 = vunpack.c.l.b16 %v754
    %v4368 = vpack.c.b16 %v4241, %v4240
    %v4369 = vpack.c.b16 %v4243, %v4242
    %v4370 = vpack.c.b16 %v4245, %v4244
    %v4371 = vpack.c.b16 %v4247, %v4246
    %v4372 = vpack.c.b16 %v4249, %v4248
    %v4373 = vpack.c.b16 %v4251, %v4250
    %v4374 = vpack.c.b16 %v4253, %v4252
    %v4375 = vpack.c.b16 %v4255, %v4254
    %v4376 = vpack.c.b16 %v4257, %v4256
    %v4377 = vpack.c.b16 %v4259, %v4258
    %v4378 = vpack.c.b16 %v4261, %v4260
    %v4379 = vpack.c.b16 %v4263, %v4262
    %v4380 = vpack.c.b16 %v4265, %v4264
    %v4381 = vpack.c.b16 %v4267, %v4266
    %v4382 = vpack.c.b16 %v4269, %v4268
    %v4383 = vpack.c.b16 %v4271, %v4270
    %v4384 = vpack.c.b16 %v4273, %v4272
    %v4385 = vpack.c.b16 %v4275, %v4274
    %v4386 = vpack.c.b16 %v4277, %v4276
    %v4387 = vpack.c.b16 %v4279, %v4278
    %v4388 = vpack.c.b16 %v4281, %v4280
    %v4389 = vpack.c.b16 %v4283, %v4282
    %v4390 = vpack.c.b16 %v4285, %v4284
    %v4391 = vpack.c.b16 %v4287, %v4286
    %v4392 = vpack.c.b16 %v4289, %v4288
    %v4393 = vpack.c.b16 %v4291, %v4290
    %v4394 = vpack.c.b16 %v4293, %v4292
    %v4395 = vpack.c.b16 %v4295, %v4294
    %v4396 = vpack.c.b16 %v4297, %v4296
    %v4397 = vpack.c.b16 %v4299, %v4298
    %v4398 = vpack.c.b16 %v4301, %v4300
    %v4399 = vpack.c.b16 %v4303, %v4302
    %v4400 = vpack.c.b16 %v4305, %v4304
    %v4401 = vpack.c.b16 %v4307, %v4306
    %v4402 = vpack.c.b16 %v4309, %v4308
    %v4403 = vpack.c.b16 %v4311, %v4310
    %v4404 = vpack.c.b16 %v4313, %v4312
    %v4405 = vpack.c.b16 %v4315, %v4314
    %v4406 = vpack.c.b16 %v4317, %v4316
    %v4407 = vpack.c.b16 %v4319, %v4318
    %v4408 = vpack.c.b16 %v4321, %v4320
    %v4409 = vpack.c.b16 %v4323, %v4322
    %v4410 = vpack.c.b16 %v4325, %v4324
    %v4411 = vpack.c.b16 %v4327, %v4326
    %v4412 = vpack.c.b16 %v4329, %v4328
    %v4413 = vpack.c.b16 %v4331, %v4330
    %v4414 = vpack.c.b16 %v4333, %v4332
    %v4415 = vpack.c.b16 %v4335, %v4334
    %v4416 = vpack.c.b16 %v4337, %v4336
    %v4417 = vpack.c.b16 %v4339, %v4338
    %v4418 = vpack.c.b16 %v4341, %v4340
    %v4419 = vpack.c.b16 %v4343, %v4342
    %v4420 = vpack.c.b16 %v4345, %v4344
    %v4421 = vpack.c.b16 %v4347, %v4346
    %v4422 = vpack.c.b16 %v4349, %v4348
    %v4423 = vpack.c.b16 %v4351, %v4350
    %v4424 = vpack.c.b16 %v4353, %v4352
    %v4425 = vpack.c.b16 %v4355, %v4354
    %v4426 = vpack.c.b16 %v4357, %v4356
    %v4427 = vpack.c.b16 %v4359, %v4358
    %v4428 = vpack.c.b16 %v4361, %v4360
    %v4429 = vpack.c.b16 %v4363, %v4362
    %v4430 = vpack.c.b16 %v4365, %v4364
    %v4431 = vpack.c.b16 %v4367, %v4366
    %4496 = vmatprep.subr.bf16.mxu0 0
    %4497 = vmatpush1.bf16.msra.mxu0 %v4368
    %4498 = vmatprep.subr.bf16.mxu0 0
    %4499 = vmatpush1.bf16.msra.mxu0 %v4369
    %4500 = vmatprep.subr.bf16.mxu0 0
    %4501 = vmatpush1.bf16.msra.mxu0 %v4370
    %4502 = vmatprep.subr.bf16.mxu0 0
    %4503 = vmatpush1.bf16.msra.mxu0 %v4371
    %4504 = vmatprep.subr.bf16.mxu0 0
    %4505 = vmatpush1.bf16.msra.mxu0 %v4372
    %4506 = vmatprep.subr.bf16.mxu0 0
    %4507 = vmatpush1.bf16.msra.mxu0 %v4373
    %4508 = vmatprep.subr.bf16.mxu0 0
    %4509 = vmatpush1.bf16.msra.mxu0 %v4374
    %4510 = vmatprep.subr.bf16.mxu0 0
    %4511 = vmatpush1.bf16.msra.mxu0 %v4375
    %4512 = vmatprep.subr.bf16.mxu0 0
    %4513 = vmatpush1.bf16.msra.mxu0 %v4376
    %4514 = vmatprep.subr.bf16.mxu0 0
    %4515 = vmatpush1.bf16.msra.mxu0 %v4377
    %4516 = vmatprep.subr.bf16.mxu0 0
    %4517 = vmatpush1.bf16.msra.mxu0 %v4378
    %4518 = vmatprep.subr.bf16.mxu0 0
    %4519 = vmatpush1.bf16.msra.mxu0 %v4379
    %4520 = vmatprep.subr.bf16.mxu0 0
    %4521 = vmatpush1.bf16.msra.mxu0 %v4380
    %4522 = vmatprep.subr.bf16.mxu0 0
    %4523 = vmatpush1.bf16.msra.mxu0 %v4381
    %4524 = vmatprep.subr.bf16.mxu0 0
    %4525 = vmatpush1.bf16.msra.mxu0 %v4382
    %4526 = vmatprep.subr.bf16.mxu0 0
    %4527 = vmatpush1.bf16.msra.mxu0 %v4383
    %4528 = vmatprep.mubr.bf16.mxu0 %v4099
    %4529 = vmatmul.mubr.bf16.gmra.mrb[0].mxu0 %v4098
    %v4530 = vpop.f32.mrb[0].mxu0
    %v4531 = vadd.f32 %v4110, %v4530
    %v4532 = vpop.f32.mrb[0].mxu0
    %v4533 = vpop.f32.mrb[0].mxu0
    %v4534 = vpop.f32.mrb[0].mxu0
    %4535 = vdwg.mxu0
    %4536 = vmatprep.subr.bf16.mxu0 0
    %4537 = vmatpush1.bf16.msra.mxu0 %v4384
    %4538 = vmatprep.subr.bf16.mxu0 0
    %4539 = vmatpush1.bf16.msra.mxu0 %v4385
    %4540 = vmatprep.subr.bf16.mxu0 0
    %4541 = vmatpush1.bf16.msra.mxu0 %v4386
    %4542 = vmatprep.subr.bf16.mxu0 0
    %4543 = vmatpush1.bf16.msra.mxu0 %v4387
    %4544 = vmatprep.subr.bf16.mxu0 0
    %4545 = vmatpush1.bf16.msra.mxu0 %v4388
    %4546 = vmatprep.subr.bf16.mxu0 0
    %4547 = vmatpush1.bf16.msra.mxu0 %v4389
    %4548 = vmatprep.subr.bf16.mxu0 0
    %4549 = vmatpush1.bf16.msra.mxu0 %v4390
    %4550 = vmatprep.subr.bf16.mxu0 0
    %4551 = vmatpush1.bf16.msra.mxu0 %v4391
    %4552 = vmatprep.subr.bf16.mxu0 0
    %4553 = vmatpush1.bf16.msra.mxu0 %v4392
    %4554 = vmatprep.subr.bf16.mxu0 0
    %4555 = vmatpush1.bf16.msra.mxu0 %v4393
    %4556 = vmatprep.subr.bf16.mxu0 0
    %4557 = vmatpush1.bf16.msra.mxu0 %v4394
    %4558 = vmatprep.subr.bf16.mxu0 0
    %4559 = vmatpush1.bf16.msra.mxu0 %v4395
    %4560 = vmatprep.subr.bf16.mxu0 0
    %4561 = vmatpush1.bf16.msra.mxu0 %v4396
    %4562 = vmatprep.subr.bf16.mxu0 0
    %4563 = vmatpush1.bf16.msra.mxu0 %v4397
    %4564 = vmatprep.subr.bf16.mxu0 0
    %4565 = vmatpush1.bf16.msra.mxu0 %v4398
    %4566 = vmatprep.subr.bf16.mxu0 0
    %4567 = vmatpush1.bf16.msra.mxu0 %v4399
    %4568 = vmatprep.mubr.bf16.mxu0 %v4101
    %4569 = vmatmul.mubr.bf16.gmra.mrb[0].mxu0 %v4100
    %v4570 = vpop.f32.mrb[0].mxu0
    %v4571 = vadd.f32 %v4531, %v4570
    %v4572 = vpop.f32.mrb[0].mxu0
    %v4573 = vpop.f32.mrb[0].mxu0
    %v4574 = vpop.f32.mrb[0].mxu0
    %4575 = vdwg.mxu0
    %4576 = vmatprep.subr.bf16.mxu0 0
    %4577 = vmatpush1.bf16.msra.mxu0 %v4400
    %4578 = vmatprep.subr.bf16.mxu0 0
    %4579 = vmatpush1.bf16.msra.mxu0 %v4401
    %4580 = vmatprep.subr.bf16.mxu0 0
    %4581 = vmatpush1.bf16.msra.mxu0 %v4402
    %4582 = vmatprep.subr.bf16.mxu0 0
    %4583 = vmatpush1.bf16.msra.mxu0 %v4403
    %4584 = vmatprep.subr.bf16.mxu0 0
    %4585 = vmatpush1.bf16.msra.mxu0 %v4404
    %4586 = vmatprep.subr.bf16.mxu0 0
    %4587 = vmatpush1.bf16.msra.mxu0 %v4405
    %4588 = vmatprep.subr.bf16.mxu0 0
    %4589 = vmatpush1.bf16.msra.mxu0 %v4406
    %4590 = vmatprep.subr.bf16.mxu0 0
    %4591 = vmatpush1.bf16.msra.mxu0 %v4407
    %4592 = vmatprep.subr.bf16.mxu0 0
    %4593 = vmatpush1.bf16.msra.mxu0 %v4408
    %4594 = vmatprep.subr.bf16.mxu0 0
    %4595 = vmatpush1.bf16.msra.mxu0 %v4409
    %4596 = vmatprep.subr.bf16.mxu0 0
    %4597 = vmatpush1.bf16.msra.mxu0 %v4410
    %4598 = vmatprep.subr.bf16.mxu0 0
    %4599 = vmatpush1.bf16.msra.mxu0 %v4411
    %4600 = vmatprep.subr.bf16.mxu0 0
    %4601 = vmatpush1.bf16.msra.mxu0 %v4412
    %4602 = vmatprep.subr.bf16.mxu0 0
    %4603 = vmatpush1.bf16.msra.mxu0 %v4413
    %4604 = vmatprep.subr.bf16.mxu0 0
    %4605 = vmatpush1.bf16.msra.mxu0 %v4414
    %4606 = vmatprep.subr.bf16.mxu0 0
    %4607 = vmatpush1.bf16.msra.mxu0 %v4415
    %4608 = vmatprep.mubr.bf16.mxu0 %v4103
    %4609 = vmatmul.mubr.bf16.gmra.mrb[0].mxu0 %v4102
    %v4610 = vpop.f32.mrb[0].mxu0
    %v4611 = vadd.f32 %v4571, %v4610
    %v4612 = vpop.f32.mrb[0].mxu0
    %v4613 = vpop.f32.mrb[0].mxu0
    %v4614 = vpop.f32.mrb[0].mxu0
    %4615 = vdwg.mxu0
    %4616 = vmatprep.subr.bf16.mxu0 0
    %4617 = vmatpush1.bf16.msra.mxu0 %v4416
    %4618 = vmatprep.subr.bf16.mxu0 0
    %4619 = vmatpush1.bf16.msra.mxu0 %v4417
    %4620 = vmatprep.subr.bf16.mxu0 0
    %4621 = vmatpush1.bf16.msra.mxu0 %v4418
    %4622 = vmatprep.subr.bf16.mxu0 0
    %4623 = vmatpush1.bf16.msra.mxu0 %v4419
    %4624 = vmatprep.subr.bf16.mxu0 0
    %4625 = vmatpush1.bf16.msra.mxu0 %v4420
    %4626 = vmatprep.subr.bf16.mxu0 0
    %4627 = vmatpush1.bf16.msra.mxu0 %v4421
    %4628 = vmatprep.subr.bf16.mxu0 0
    %4629 = vmatpush1.bf16.msra.mxu0 %v4422
    %4630 = vmatprep.subr.bf16.mxu0 0
    %4631 = vmatpush1.bf16.msra.mxu0 %v4423
    %4632 = vmatprep.subr.bf16.mxu0 0
    %4633 = vmatpush1.bf16.msra.mxu0 %v4424
    %4634 = vmatprep.subr.bf16.mxu0 0
    %4635 = vmatpush1.bf16.msra.mxu0 %v4425
    %4636 = vmatprep.subr.bf16.mxu0 0
    %4637 = vmatpush1.bf16.msra.mxu0 %v4426
    %4638 = vmatprep.subr.bf16.mxu0 0
    %4639 = vmatpush1.bf16.msra.mxu0 %v4427
    %4640 = vmatprep.subr.bf16.mxu0 0
    %4641 = vmatpush1.bf16.msra.mxu0 %v4428
    %4642 = vmatprep.subr.bf16.mxu0 0
    %4643 = vmatpush1.bf16.msra.mxu0 %v4429
    %4644 = vmatprep.subr.bf16.mxu0 0
    %4645 = vmatpush1.bf16.msra.mxu0 %v4430
    %4646 = vmatprep.subr.bf16.mxu0 0
    %4647 = vmatpush1.bf16.msra.mxu0 %v4431
    %4648 = vmatprep.mubr.bf16.mxu0 %v4105
    %4649 = vmatmul.mubr.bf16.gmra.mrb[0].mxu0 %v4104
    %v4650 = vpop.f32.mrb[0].mxu0
    %v4651 = vadd.f32 %v4611, %v4650
    %v4652 = vpop.f32.mrb[0].mxu0
    %v4653 = vpop.f32.mrb[0].mxu0
    %v4654 = vpop.f32.mrb[0].mxu0
    %4655 = vdwg.mxu0
    %v4656 = vmax.f32 %v4651, 0.0
    %v4657 = vpack.c.bf16 %v4656, %v4656
    %v4659 = vlaneseq
    %v4660 = vshrl.u32 %v4659, 7
    %v4661 = vsub.s32 0, %v4660
    %v4662 = vrot.slane %v773, %v4661
    %v4680 = vunpack.c.l.b16 %v755
    %v4681 = vunpack.c.l.b16 %v756
    %v4682 = vunpack.c.l.b16 %v757
    %v4683 = vunpack.c.l.b16 %v758
    %v4684 = vunpack.c.l.b16 %v759
    %v4685 = vunpack.c.l.b16 %v760
    %v4686 = vunpack.c.l.b16 %v761
    %v4687 = vunpack.c.l.b16 %v762
    %v4688 = vunpack.c.l.b16 %v763
    %v4689 = vunpack.c.l.b16 %v764
    %v4690 = vunpack.c.l.b16 %v765
    %v4691 = vunpack.c.l.b16 %v766
    %v4692 = vunpack.c.l.b16 %v767
    %v4693 = vunpack.c.l.b16 %v768
    %v4694 = vunpack.c.l.b16 %v769
    %v4695 = vunpack.c.l.b16 %v770
    %v4696 = vpack.c.b16 %v4681, %v4680
    %v4697 = vpack.c.b16 %v4683, %v4682
    %v4698 = vpack.c.b16 %v4685, %v4684
    %v4699 = vpack.c.b16 %v4687, %v4686
    %v4700 = vpack.c.b16 %v4689, %v4688
    %v4701 = vpack.c.b16 %v4691, %v4690
    %v4702 = vpack.c.b16 %v4693, %v4692
    %v4703 = vpack.c.b16 %v4695, %v4694
    %4712 = vmatprep.subr.bf16.mxu0 0
    %4713 = vmatpush1.bf16.msra.mxu0 %v4696
    %4714 = vmatprep.subr.bf16.mxu0 0
    %4715 = vmatpush1.bf16.msra.mxu0 %v4697
    %4716 = vmatprep.subr.bf16.mxu0 0
    %4717 = vmatpush1.bf16.msra.mxu0 %v4698
    %4718 = vmatprep.subr.bf16.mxu0 0
    %4719 = vmatpush1.bf16.msra.mxu0 %v4699
    %4720 = vmatprep.subr.bf16.mxu0 0
    %4721 = vmatpush1.bf16.msra.mxu0 %v4700
    %4722 = vmatprep.subr.bf16.mxu0 0
    %4723 = vmatpush1.bf16.msra.mxu0 %v4701
    %4724 = vmatprep.subr.bf16.mxu0 0
    %4725 = vmatpush1.bf16.msra.mxu0 %v4702
    %4726 = vmatprep.subr.bf16.mxu0 0
    %4727 = vmatpush1.bf16.msra.mxu0 %v4703
    %4728 = vmatprep.subr.bf16.mxu0 0
    %4729 = vmatpush1.bf16.msra.mxu0 0
    %4730 = vmatprep.subr.bf16.mxu0 0
    %4731 = vmatpush1.bf16.msra.mxu0 0
    %4732 = vmatprep.subr.bf16.mxu0 0
    %4733 = vmatpush1.bf16.msra.mxu0 0
    %4734 = vmatprep.subr.bf16.mxu0 0
    %4735 = vmatpush1.bf16.msra.mxu0 0
    %4736 = vmatprep.subr.bf16.mxu0 0
    %4737 = vmatpush1.bf16.msra.mxu0 0
    %4738 = vmatprep.subr.bf16.mxu0 0
    %4739 = vmatpush1.bf16.msra.mxu0 0
    %4740 = vmatprep.subr.bf16.mxu0 0
    %4741 = vmatpush1.bf16.msra.mxu0 0
    %4742 = vmatprep.subr.bf16.mxu0 0
    %4743 = vmatpush1.bf16.msra.mxu0 0
    %4744 = vmatprep.mubr.bf16.mxu0 0
    %4745 = vmatmul.mubr.bf16.gmra.mrb[0].mxu0 %v4657
    %v4746 = vpop.f32.mrb[0].mxu0
    %v4747 = vadd.f32 %v4662, %v4746
    %v4748 = vpop.f32.mrb[0].mxu0
    %v4749 = vpop.f32.mrb[0].mxu0
    %v4750 = vpop.f32.mrb[0].mxu0
    %4751 = vdwg.mxu0
    %v4752 = vmax.f32 %v4747, 0.0
    %4753 = vst [vmem:[#allocation14] sm:$0x3] %v4752
    // Predicated region
    $region58: #{tpu_custom_call.1} parent=1 // pred_check
      _
    $region59: #{tpu_custom_call.1} parent=1 // pred_check_branch
      %4755 = sbr.rel (0) target = $region61
    $region60: #{tpu_custom_call.1} parent=1 // pred_region
      %s4757 = ssub.s32 32, 32
      %4758 = vsyncadd [#allocation4], %s4757
      %s4760 = sshll.u32 [#allocation14], 4
      %s4761 = int_to_ptr.vmem [resolvable:$true] %s4760
      %4763 = dma.vmem_to_hbm [thread:$0]  %s4761, 32, %s7, [#allocation4]
    $region61: #{tpu_custom_call.1} parent=1 // pred_fallthru
      _
    // Predicated region
    $region62: #{tpu_custom_call.1} parent=1 // pred_check
      _
    $region63: #{tpu_custom_call.1} parent=1 // pred_check_branch
      %4765 = sbr.rel (0) target = $region65
    $region64: #{tpu_custom_call.1} parent=1 // pred_region
      %4766 = dma.done [#allocation4], 32
    $region65: #{tpu_custom_call.1} parent=1 // pred_fallthru
      _
    %4767 = vsyncpa [#allocation3], 1
    %4768 = vsyncpa [#allocation6], 1
    %4769 = vsyncpa [#allocation9], 1
    %4770 = vsyncpa [#allocation12], 1
    %4771 = vsyncpa [#allocation4], 1

</llo_original>
